<compile_context>
chip_gen: v7x
topology: tpu7x:2x2x1
jax: 0.10.0
libtpu: 0.0.40
codegen_flags: <defaults>
</compile_context>

<pallas_src>
import functools

import numpy as np

import jax
import jax.numpy as jnp
from jax.experimental import pallas as pl
from jax.experimental.pallas import tpu as pltpu


# ----------------------------------------------------------------------------
# The single fused Pallas kernel: 6 bf16 GEMMs + f32 epilogues.
# ----------------------------------------------------------------------------
def _vae_kernel(x_ref, noise_ref,
                w_e1, w_e2, w_lat, w_d0, w_d1, w_d2,
                bias_ref, out_ref):
    f32, bf16 = jnp.float32, jnp.bfloat16

    def gemm(act, w_ref, bias_row, relu):
        n = w_ref.shape[1]
        # One bf16 cast of the activation per layer; f32 accumulation + epilogue.
        y = jnp.dot(act.astype(bf16), w_ref[...], preferred_element_type=f32)
        y = y + bias_ref[bias_row:bias_row + 1, :n]
        if relu:
            y = jnp.maximum(y, 0.0)
        return y

    # ---- encoder: two stride-2 3x3 convs + ReLU (pre-folded dense GEMMs) ----
    x0 = x_ref[...]                                  # (TB, Cin*H*W) f32
    x1 = gemm(x0, w_e1, 0, relu=True)
    x2 = gemm(x1, w_e2, 1, relu=True)

    # ---- to_laten ∘ flatten ∘ to_mean_and_log_var: ONE GEMM -----------------
    mlv = gemm(x2, w_lat, 2, relu=False)             # (TB, 2L)
    lat = mlv.shape[1] // 2
    mean = mlv[:, :lat]
    log_var = mlv[:, lat:]

    # reparameterization epilogue (exp goes to the EUP, all f32)
    z = mean + jnp.exp(0.5 * log_var) * noise_ref[...]   # (TB, L)

    # ---- noise_to_dec_inp ∘ unflatten ∘ to_dec_inp: ONE GEMM ----------------
    d0 = gemm(z, w_d0, 3, relu=False)                # (TB, Cd0*lw*lw)

    # ---- decoder: (nearest-up x2 + 3x3 conv) x2, ReLU except last -----------
    x4 = gemm(d0, w_d1, 4, relu=True)
    x5 = gemm(x4, w_d2, 5, relu=False)               # (TB, Cout*H*W) lane-dense

    out_ref[...] = x5.astype(out_ref.dtype)


def vae_forward_fused(fused, img_nchw, noise, *, batch_block=8):
    """fused: (w_e1, w_e2, w_lat, w_d0, w_d1, w_d2, bias_slab), see prepare_fused_params."""
    w_e1, w_e2, w_lat, w_d0, w_d1, w_d2, bias_slab = fused
    B, C, H, W = img_nchw.shape
    feat_in = C * H * W
    feat_out = int(w_d2.shape[1])
    out_ch = feat_out // (H * W)
    L = noise.shape[1]
    assert int(w_e1.shape[0]) == feat_in

    # NCHW flatten -> (B, C*H*W): pure reshape, no transpose (the dense weight
    # matrices are built in NCHW order on both sides).
    x = img_nchw.reshape(B, feat_in).astype(jnp.float32)
    nz = noise.astype(jnp.float32)

    nb = (B + batch_block - 1) // batch_block
    Bp = nb * batch_block
    if Bp != B:
        x = jnp.pad(x, ((0, Bp - B), (0, 0)))
        nz = jnp.pad(nz, ((0, Bp - B), (0, 0)))

    weights = (w_e1, w_e2, w_lat, w_d0, w_d1, w_d2)
    gemm_flops = 2 * Bp * sum(int(w.shape[0]) * int(w.shape[1]) for w in weights)
    bytes_in = sum(int(a.size) * a.dtype.itemsize
                   for a in (x, nz, *weights, bias_slab))
    cost = pl.CostEstimate(
        flops=int(gemm_flops),
        transcendentals=int(Bp * L),
        bytes_accessed=int(bytes_in + Bp * feat_out * 4),
    )

    def batch_spec(n_cols):
        return pl.BlockSpec((batch_block, int(n_cols)), lambda i: (i, 0))

    def resident_spec(shape):
        shape = tuple(int(d) for d in shape)
        return pl.BlockSpec(shape, lambda i: (0,) * len(shape))

    out = pl.pallas_call(
        _vae_kernel,
        out_shape=jax.ShapeDtypeStruct((Bp, feat_out), jnp.float32),
        grid_spec=pltpu.PrefetchScalarGridSpec(
            num_scalar_prefetch=0,
            grid=(nb,),
            in_specs=[batch_spec(feat_in), batch_spec(L)]
                     + [resident_spec(w.shape) for w in weights]
                     + [resident_spec(bias_slab.shape)],
            out_specs=batch_spec(feat_out),
        ),
        compiler_params=pltpu.CompilerParams(
            dimension_semantics=("parallel",)),
        cost_estimate=cost,
    )(x, nz, *weights, bias_slab)

    # (B, Cout*H*W) NCHW-flatten -> NCHW output, matching the PyTorch module.
    return out[:B].reshape(B, out_ch, H, W)


# ----------------------------------------------------------------------------
# Init-time folding of conv / upsample / flatten structure into dense matrices
# ----------------------------------------------------------------------------
def _dense_conv3x3(w, b, h_in, *, stride, upsample):
    """Fold a 3x3/pad-1 conv (stride-2, or nearest-upsample-x2 + stride-1) into a
    dense (C_in*H_in*W_in, C_out*H_out*W_out) matrix, NCHW flatten order."""
    w = np.asarray(w, np.float32)                    # (C_out, C_in, 3, 3)
    b = np.asarray(b, np.float32)
    c_out, c_in, kh, kw = w.shape
    pad = 1
    w_in = h_in
    h_out = 2 * h_in if upsample else (h_in + 2 * pad - kh) // stride + 1
    w_out = h_out
    dense = np.zeros((c_in * h_in * w_in, c_out * h_out * w_out), np.float32)
    ci_rows = np.arange(c_in) * (h_in * w_in)
    for co in range(c_out):
        for oh in range(h_out):
            for ow in range(w_out):
                col = co * h_out * w_out + oh * w_out + ow
                for ki in range(kh):
                    for kj in range(kw):
                        if upsample:
                            he, we = oh + ki - pad, ow + kj - pad
                            if not (0 <= he < 2 * h_in and 0 <= we < 2 * w_in):
                                continue
                            hi, wi = he // 2, we // 2
                        else:
                            hi = stride * oh + ki - pad
                            wi = stride * ow + kj - pad
                            if not (0 <= hi < h_in and 0 <= wi < w_in):
                                continue
                        dense[ci_rows + hi * w_in + wi, col] += w[co, :, ki, kj]
    bias = np.repeat(b, h_out * w_out)               # NCHW flatten of per-channel bias
    return dense, bias, h_out


def _dense_latent(wt_l, bt_l, w_ml, b_ml, c_e, lw, lat):
    """to_laten (1x1 conv C_e->L) ∘ 'b c h w -> b (c h w)' ∘ Linear(L*lw*lw->2L),
    pre-composed into one (C_e*lw*lw, 2L) matrix + bias."""
    wt_l = np.asarray(wt_l, np.float32).reshape(lat, c_e)
    bt_l = np.asarray(bt_l, np.float32)
    w_ml = np.asarray(w_ml, np.float32).reshape(2 * lat, lat, lw, lw)
    b_ml = np.asarray(b_ml, np.float32)
    dense = np.einsum("lc,jlhw->chwj", wt_l, w_ml).reshape(c_e * lw * lw, 2 * lat)
    bias = b_ml + np.einsum("jlhw,l->j", w_ml, bt_l)
    return dense, bias


def _dense_dec_inp(w_nd, b_nd, wt_d, bt_d, lw, lat, c_d):
    """noise_to_dec_inp (L->L*lw*lw) ∘ 'b (c h w) -> b c h w' ∘ to_dec_inp
    (1x1 conv L->C_d), pre-composed into one (L, C_d*lw*lw) matrix + bias."""
    w_nd = np.asarray(w_nd, np.float32).reshape(lat, lw, lw, lat)   # (l, h, w, i)
    b_nd = np.asarray(b_nd, np.float32).reshape(lat, lw, lw)
    wt_d = np.asarray(wt_d, np.float32).reshape(c_d, lat)
    bt_d = np.asarray(bt_d, np.float32)
    dense = np.einsum("cl,lhwi->ichw", wt_d, w_nd).reshape(lat, c_d * lw * lw)
    bias = (np.einsum("cl,lhw->chw", wt_d, b_nd) + bt_d[:, None, None]).reshape(-1)
    return dense, bias


def prepare_fused_params(raw, img_size, enc_channels, dec_channels, laten_dim):
    """Builds (6 bf16 dense-GEMM weights, 1 packed f32 bias slab)."""
    lw = img_size // (2 ** (len(enc_channels) - 1))
    weights, biases = [], []

    h = img_size
    for (w, b) in raw["enc"]:
        d, bv, h = _dense_conv3x3(w, b, h, stride=2, upsample=False)
        weights.append(d); biases.append(bv)
    assert h == lw

    d, bv = _dense_latent(raw["to_laten"][0], raw["to_laten"][1],
                          raw["to_mean_and_log_var"][0],
                          raw["to_mean_and_log_var"][1],
                          enc_channels[-1], lw, laten_dim)
    weights.append(d); biases.append(bv)

    d, bv = _dense_dec_inp(raw["noise_to_dec_inp"][0], raw["noise_to_dec_inp"][1],
                           raw["to_dec_inp"][0], raw["to_dec_inp"][1],
                           lw, laten_dim, dec_channels[0])
    weights.append(d); biases.append(bv)

    h = lw
    for (w, b) in raw["dec"]:
        d, bv, h = _dense_conv3x3(w, b, h, stride=1, upsample=True)
        weights.append(d); biases.append(bv)
    assert h == img_size

    # Pack all biases into one f32 slab: row i = bias of GEMM i, zero-padded
    # to a multiple of 128 lanes; one DMA instead of six padded tiles.
    max_n = max(int(bv.shape[0]) for bv in biases)
    max_n = ((max_n + 127) // 128) * 128
    n_rows = ((len(biases) + 7) // 8) * 8
    bias_slab = np.zeros((n_rows, max_n), np.float32)
    for i, bv in enumerate(biases):
        bias_slab[i, :bv.shape[0]] = bv

    w_ops = tuple(jnp.asarray(w, jnp.bfloat16) for w in weights)
    return w_ops + (jnp.asarray(bias_slab, jnp.float32),)


# ----------------------------------------------------------------------------
# Raw (torch-layout) parameter construction
# ----------------------------------------------------------------------------
def make_raw_params(key, enc_channels, dec_channels, laten_dim, img_size, scale=0.05):
    lw = img_size // (2 ** (len(enc_channels) - 1))
    keys = iter(jax.random.split(key, 32))

    def conv_init(cout, cin, k):
        kw, kb = jax.random.split(next(keys))
        return (scale * jax.random.normal(kw, (cout, cin, k, k), jnp.float32),
                scale * jax.random.normal(kb, (cout,), jnp.float32))

    def linear_init(dout, din):
        kw, kb = jax.random.split(next(keys))
        return (scale * jax.random.normal(kw, (dout, din), jnp.float32),
                scale * jax.random.normal(kb, (dout,), jnp.float32))

    return {
        "enc": [conv_init(enc_channels[i + 1], enc_channels[i], 3)
                for i in range(len(enc_channels) - 1)],
        "dec": [conv_init(dec_channels[i + 1], dec_channels[i], 3)
                for i in range(len(dec_channels) - 1)],
        "to_laten": conv_init(laten_dim, enc_channels[-1], 1),
        "to_mean_and_log_var": linear_init(2 * laten_dim, laten_dim * lw * lw),
        "noise_to_dec_inp": linear_init(laten_dim * lw * lw, laten_dim),
        "to_dec_inp": conv_init(dec_channels[0], laten_dim, 1),
    }


# ----------------------------------------------------------------------------
# Pure-JAX reference (mirrors the PyTorch VAE.forward) for validation
# ----------------------------------------------------------------------------
def reference_forward(raw, img, noise, laten_dim, laten_w):
    def conv(x, w, b, stride, pad):
        y = jax.lax.conv_general_dilated(
            x, w, (stride, stride), ((pad, pad), (pad, pad)),
            dimension_numbers=("NCHW", "OIHW", "NCHW"))
        return y + b[None, :, None, None]

    x = img.astype(jnp.float32)
    for (w, b) in raw["enc"]:
        x = jnp.maximum(conv(x, w, b, 2, 1), 0.0)
    w, b = raw["to_laten"]
    x = conv(x, w, b, 1, 0)
    B = x.shape[0]
    img_laten = x.reshape(B, -1)                      # 'b c h w -> b (c h w)'
    w_ml, b_ml = raw["to_mean_and_log_var"]
    mlv = img_laten @ w_ml.T + b_ml
    mean, log_var = mlv[:, :laten_dim], mlv[:, laten_dim:]
    z = mean + jnp.exp(0.5 * log_var) * noise
    w_nd, b_nd = raw["noise_to_dec_inp"]
    ri = (z @ w_nd.T + b_nd).reshape(B, laten_dim, laten_w, laten_w)
    w_d, b_d = raw["to_dec_inp"]
    x = conv(ri, w_d, b_d, 1, 0)
    n_dec = len(raw["dec"])
    for i, (w, b) in enumerate(raw["dec"]):
        x = jnp.repeat(jnp.repeat(x, 2, axis=2), 2, axis=3)
        x = conv(x, w, b, 1, 1)
        if i < n_dec - 1:
            x = jnp.maximum(x, 0.0)
    return x


# ----------------------------------------------------------------------------
# Main
# ----------------------------------------------------------------------------
if __name__ == "__main__":
    key = jax.random.PRNGKey(0)
    k_param, k_img, k_noise = jax.random.split(key, 3)

    batch = 16                      # 2 grid steps of 8 rows ("parallel" axis)
    img_size = 16
    img_channels = 3
    laten_dim = 8
    enc_channels = [img_channels, 8, 16]   # 2 downsamples -> laten_w = 4
    dec_channels = [16, 8, img_channels]   # 2 upsamples   -> back to 16
    laten_w = img_size // (2 ** (len(enc_channels) - 1))

    raw = make_raw_params(k_param, enc_channels, dec_channels, laten_dim, img_size)
    fused = prepare_fused_params(raw, img_size, enc_channels, dec_channels, laten_dim)

    img = jax.random.normal(k_img, (batch, img_channels, img_size, img_size), jnp.float32)
    noise = jax.random.normal(k_noise, (batch, laten_dim), jnp.float32)

    fwd = jax.jit(functools.partial(vae_forward_fused, batch_block=8))
    out = jax.block_until_ready(fwd(fused, img, noise))

    assert out.shape == (batch, img_channels, img_size, img_size), out.shape
    assert bool(jnp.all(jnp.isfinite(out)))

    # Validate against a pure-JAX reference of the same VAE (bf16 MXU tolerance).
    ref = reference_forward(raw, img, noise, laten_dim, laten_w)
    max_err = float(jnp.max(jnp.abs(out - ref)))
    assert max_err < 2e-2, f"max abs error vs reference: {max_err}"

    print("KERNEL_OK")
</pallas_src>

<mosaic_0001>
module attributes {stable_mosaic.version = 11 : i64} {
  func.func @_vae_kernel(%arg0: i32, %arg1: memref<8x768xf32, #tpu.memory_space<vmem>>, %arg2: memref<8x8xf32, #tpu.memory_space<vmem>>, %arg3: memref<768x512xbf16, #tpu.memory_space<vmem>>, %arg4: memref<512x256xbf16, #tpu.memory_space<vmem>>, %arg5: memref<256x16xbf16, #tpu.memory_space<vmem>>, %arg6: memref<8x256xbf16, #tpu.memory_space<vmem>>, %arg7: memref<256x512xbf16, #tpu.memory_space<vmem>>, %arg8: memref<512x768xbf16, #tpu.memory_space<vmem>>, %arg9: memref<8x768xf32, #tpu.memory_space<vmem>>, %arg10: memref<8x768xf32, #tpu.memory_space<vmem>>) attributes {dimension_semantics = [#tpu.dimension_semantics<parallel>], iteration_bounds = array<i64: 2>, scalar_prefetch = 0 : i64, scratch_operands = 0 : i64, tpu.core_type = #tpu.core_type<tc>, window_params = [{transform_indices = @transform_0, window_bounds = array<i64: 8, 768>}, {transform_indices = @transform_1, window_bounds = array<i64: 8, 8>}, {pipeline_mode = #tpu.pipeline_mode<synchronous>, transform_indices = @transform_2, window_bounds = array<i64: 768, 512>}, {pipeline_mode = #tpu.pipeline_mode<synchronous>, transform_indices = @transform_3, window_bounds = array<i64: 512, 256>}, {pipeline_mode = #tpu.pipeline_mode<synchronous>, transform_indices = @transform_4, window_bounds = array<i64: 256, 16>}, {pipeline_mode = #tpu.pipeline_mode<synchronous>, transform_indices = @transform_5, window_bounds = array<i64: 8, 256>}, {pipeline_mode = #tpu.pipeline_mode<synchronous>, transform_indices = @transform_6, window_bounds = array<i64: 256, 512>}, {pipeline_mode = #tpu.pipeline_mode<synchronous>, transform_indices = @transform_7, window_bounds = array<i64: 512, 768>}, {pipeline_mode = #tpu.pipeline_mode<synchronous>, transform_indices = @transform_8, window_bounds = array<i64: 8, 768>}, {transform_indices = @transform_9, window_bounds = array<i64: 8, 768>}]} {
    %c0 = arith.constant 0 : index
    %c0_0 = arith.constant 0 : index
    %0 = vector.load %arg1[%c0, %c0_0] : memref<8x768xf32, #tpu.memory_space<vmem>>, vector<8x768xf32>
    %1 = arith.truncf %0 : vector<8x768xf32> to vector<8x768xbf16>
    %c0_1 = arith.constant 0 : index
    %c0_2 = arith.constant 0 : index
    %2 = vector.load %arg3[%c0_1, %c0_2] : memref<768x512xbf16, #tpu.memory_space<vmem>>, vector<768x512xbf16>
    %cst = arith.constant dense<0.000000e+00> : vector<8x512xf32>
    %3 = tpu.matmul %1, %2, %cst {dimension_numbers = #tpu.dot_dimension_numbers<[1], [0], [0], [1], [0, 0, 1, 1], [], []>} : vector<8x768xbf16>, vector<768x512xbf16>, vector<8x512xf32> -> vector<8x512xf32>
    %c0_3 = arith.constant 0 : index
    %c0_4 = arith.constant 0 : index
    %4 = vector.load %arg9[%c0_3, %c0_4] : memref<8x768xf32, #tpu.memory_space<vmem>>, vector<1x512xf32>
    %5 = vector.broadcast %4 : vector<1x512xf32> to vector<8x512xf32>
    %6 = arith.addf %3, %5 : vector<8x512xf32>
    %cst_5 = arith.constant 0.000000e+00 : f32
    %7 = vector.broadcast %cst_5 : f32 to vector<8x512xf32>
    %8 = arith.maximumf %6, %7 : vector<8x512xf32>
    %9 = arith.truncf %8 : vector<8x512xf32> to vector<8x512xbf16>
    %c0_6 = arith.constant 0 : index
    %c0_7 = arith.constant 0 : index
    %10 = vector.load %arg4[%c0_6, %c0_7] : memref<512x256xbf16, #tpu.memory_space<vmem>>, vector<512x256xbf16>
    %cst_8 = arith.constant dense<0.000000e+00> : vector<8x256xf32>
    %11 = tpu.matmul %9, %10, %cst_8 {dimension_numbers = #tpu.dot_dimension_numbers<[1], [0], [0], [1], [0, 0, 1, 1], [], []>} : vector<8x512xbf16>, vector<512x256xbf16>, vector<8x256xf32> -> vector<8x256xf32>
    %c1 = arith.constant 1 : index
    %c0_9 = arith.constant 0 : index
    %12 = vector.load %arg9[%c1, %c0_9] : memref<8x768xf32, #tpu.memory_space<vmem>>, vector<1x256xf32>
    %13 = vector.broadcast %12 : vector<1x256xf32> to vector<8x256xf32>
    %14 = arith.addf %11, %13 : vector<8x256xf32>
    %cst_10 = arith.constant 0.000000e+00 : f32
    %15 = vector.broadcast %cst_10 : f32 to vector<8x256xf32>
    %16 = arith.maximumf %14, %15 : vector<8x256xf32>
    %17 = arith.truncf %16 : vector<8x256xf32> to vector<8x256xbf16>
    %c0_11 = arith.constant 0 : index
    %c0_12 = arith.constant 0 : index
    %18 = vector.load %arg5[%c0_11, %c0_12] : memref<256x16xbf16, #tpu.memory_space<vmem>>, vector<256x16xbf16>
    %cst_13 = arith.constant dense<0.000000e+00> : vector<8x16xf32>
    %19 = tpu.matmul %17, %18, %cst_13 {dimension_numbers = #tpu.dot_dimension_numbers<[1], [0], [0], [1], [0, 0, 1, 1], [], []>} : vector<8x256xbf16>, vector<256x16xbf16>, vector<8x16xf32> -> vector<8x16xf32>
    %c2 = arith.constant 2 : index
    %c0_14 = arith.constant 0 : index
    %20 = vector.load %arg9[%c2, %c0_14] : memref<8x768xf32, #tpu.memory_space<vmem>>, vector<1x16xf32>
    %21 = vector.broadcast %20 : vector<1x16xf32> to vector<8x16xf32>
    %22 = arith.addf %19, %21 : vector<8x16xf32>
    %23 = vector.extract_strided_slice %22 {offsets = [0, 0], sizes = [8, 8], strides = [1, 1]} : vector<8x16xf32> to vector<8x8xf32>
    %24 = vector.extract_strided_slice %22 {offsets = [0, 8], sizes = [8, 8], strides = [1, 1]} : vector<8x16xf32> to vector<8x8xf32>
    %cst_15 = arith.constant 5.000000e-01 : f32
    %25 = vector.broadcast %cst_15 : f32 to vector<8x8xf32>
    %26 = arith.mulf %25, %24 : vector<8x8xf32>
    %27 = math.exp %26 : vector<8x8xf32>
    %c0_16 = arith.constant 0 : index
    %c0_17 = arith.constant 0 : index
    %28 = vector.load %arg2[%c0_16, %c0_17] : memref<8x8xf32, #tpu.memory_space<vmem>>, vector<8x8xf32>
    %29 = arith.mulf %27, %28 : vector<8x8xf32>
    %30 = arith.addf %23, %29 : vector<8x8xf32>
    %31 = arith.truncf %30 : vector<8x8xf32> to vector<8x8xbf16>
    %c0_18 = arith.constant 0 : index
    %c0_19 = arith.constant 0 : index
    %32 = vector.load %arg6[%c0_18, %c0_19] : memref<8x256xbf16, #tpu.memory_space<vmem>>, vector<8x256xbf16>
    %cst_20 = arith.constant dense<0.000000e+00> : vector<8x256xf32>
    %33 = tpu.matmul %31, %32, %cst_20 {dimension_numbers = #tpu.dot_dimension_numbers<[1], [0], [0], [1], [0, 0, 1, 1], [], []>} : vector<8x8xbf16>, vector<8x256xbf16>, vector<8x256xf32> -> vector<8x256xf32>
    %c3 = arith.constant 3 : index
    %c0_21 = arith.constant 0 : index
    %34 = vector.load %arg9[%c3, %c0_21] : memref<8x768xf32, #tpu.memory_space<vmem>>, vector<1x256xf32>
    %35 = vector.broadcast %34 : vector<1x256xf32> to vector<8x256xf32>
    %36 = arith.addf %33, %35 : vector<8x256xf32>
    %37 = arith.truncf %36 : vector<8x256xf32> to vector<8x256xbf16>
    %c0_22 = arith.constant 0 : index
    %c0_23 = arith.constant 0 : index
    %38 = vector.load %arg7[%c0_22, %c0_23] : memref<256x512xbf16, #tpu.memory_space<vmem>>, vector<256x512xbf16>
    %cst_24 = arith.constant dense<0.000000e+00> : vector<8x512xf32>
    %39 = tpu.matmul %37, %38, %cst_24 {dimension_numbers = #tpu.dot_dimension_numbers<[1], [0], [0], [1], [0, 0, 1, 1], [], []>} : vector<8x256xbf16>, vector<256x512xbf16>, vector<8x512xf32> -> vector<8x512xf32>
    %c4 = arith.constant 4 : index
    %c0_25 = arith.constant 0 : index
    %40 = vector.load %arg9[%c4, %c0_25] : memref<8x768xf32, #tpu.memory_space<vmem>>, vector<1x512xf32>
    %41 = vector.broadcast %40 : vector<1x512xf32> to vector<8x512xf32>
    %42 = arith.addf %39, %41 : vector<8x512xf32>
    %cst_26 = arith.constant 0.000000e+00 : f32
    %43 = vector.broadcast %cst_26 : f32 to vector<8x512xf32>
    %44 = arith.maximumf %42, %43 : vector<8x512xf32>
    %45 = arith.truncf %44 : vector<8x512xf32> to vector<8x512xbf16>
    %c0_27 = arith.constant 0 : index
    %c0_28 = arith.constant 0 : index
    %46 = vector.load %arg8[%c0_27, %c0_28] : memref<512x768xbf16, #tpu.memory_space<vmem>>, vector<512x768xbf16>
    %cst_29 = arith.constant dense<0.000000e+00> : vector<8x768xf32>
    %47 = tpu.matmul %45, %46, %cst_29 {dimension_numbers = #tpu.dot_dimension_numbers<[1], [0], [0], [1], [0, 0, 1, 1], [], []>} : vector<8x512xbf16>, vector<512x768xbf16>, vector<8x768xf32> -> vector<8x768xf32>
    %c5 = arith.constant 5 : index
    %c0_30 = arith.constant 0 : index
    %48 = vector.load %arg9[%c5, %c0_30] : memref<8x768xf32, #tpu.memory_space<vmem>>, vector<1x768xf32>
    %49 = vector.broadcast %48 : vector<1x768xf32> to vector<8x768xf32>
    %50 = arith.addf %47, %49 : vector<8x768xf32>
    %c0_31 = arith.constant 0 : index
    %c0_32 = arith.constant 0 : index
    %51 = vector.load %arg10[%c0_31, %c0_32] : memref<8x768xf32, #tpu.memory_space<vmem>>, vector<8x768xf32>
    tpu.vector_store %arg10[%c0_31, %c0_32], %50 {strides = array<i32>} : memref<8x768xf32, #tpu.memory_space<vmem>>, vector<8x768xf32>,
    return
  }
  func.func @transform_0(%arg0: i32) -> (i32, i32) {
    %c0_i32 = arith.constant 0 : i32
    %c0_i32_0 = arith.constant 0 : i32
    return %arg0, %c0_i32 : i32, i32
  }
  func.func @transform_1(%arg0: i32) -> (i32, i32) {
    %c0_i32 = arith.constant 0 : i32
    %c0_i32_0 = arith.constant 0 : i32
    return %arg0, %c0_i32 : i32, i32
  }
  func.func @transform_2(%arg0: i32) -> (i32, i32) {
    %c0_i32 = arith.constant 0 : i32
    %c0_i32_0 = arith.constant 0 : i32
    %c0_i32_1 = arith.constant 0 : i32
    return %c0_i32, %c0_i32_0 : i32, i32
  }
  func.func @transform_3(%arg0: i32) -> (i32, i32) {
    %c0_i32 = arith.constant 0 : i32
    %c0_i32_0 = arith.constant 0 : i32
    %c0_i32_1 = arith.constant 0 : i32
    return %c0_i32, %c0_i32_0 : i32, i32
  }
  func.func @transform_4(%arg0: i32) -> (i32, i32) {
    %c0_i32 = arith.constant 0 : i32
    %c0_i32_0 = arith.constant 0 : i32
    %c0_i32_1 = arith.constant 0 : i32
    return %c0_i32, %c0_i32_0 : i32, i32
  }
  func.func @transform_5(%arg0: i32) -> (i32, i32) {
    %c0_i32 = arith.constant 0 : i32
    %c0_i32_0 = arith.constant 0 : i32
    %c0_i32_1 = arith.constant 0 : i32
    return %c0_i32, %c0_i32_0 : i32, i32
  }
  func.func @transform_6(%arg0: i32) -> (i32, i32) {
    %c0_i32 = arith.constant 0 : i32
    %c0_i32_0 = arith.constant 0 : i32
    %c0_i32_1 = arith.constant 0 : i32
    return %c0_i32, %c0_i32_0 : i32, i32
  }
  func.func @transform_7(%arg0: i32) -> (i32, i32) {
    %c0_i32 = arith.constant 0 : i32
    %c0_i32_0 = arith.constant 0 : i32
    %c0_i32_1 = arith.constant 0 : i32
    return %c0_i32, %c0_i32_0 : i32, i32
  }
  func.func @transform_8(%arg0: i32) -> (i32, i32) {
    %c0_i32 = arith.constant 0 : i32
    %c0_i32_0 = arith.constant 0 : i32
    %c0_i32_1 = arith.constant 0 : i32
    return %c0_i32, %c0_i32_0 : i32, i32
  }
  func.func @transform_9(%arg0: i32) -> (i32, i32) {
    %c0_i32 = arith.constant 0 : i32
    %c0_i32_0 = arith.constant 0 : i32
    return %arg0, %c0_i32 : i32, i32
  }
}

</mosaic_0001>

<llo_original>
// kernel: vae_forward_fused.1
$region0: #{vae_forward_fused.1}
  #allocation0 [shape = 'u32[]', space=smem, size = 0x4, offset = 0x4, fixed_abs, tag = 'smem constant byte address 0x4 - core index']
  #allocation1 [shape = 'u32[144,128]{1,0:T(1,128)}', space=vmem, size = 0x12000, scoped, tag = 'internal scratch']
  %s0 = inlined_call_operand.vmem [shape: f32[16,768], index: 0, kind: input, shape index: {}]
  %s1 = inlined_call_operand.vmem [shape: f32[16,8], index: 1, kind: input, shape index: {}]
  %s2 = inlined_call_operand.hbm [shape: bf16[768,512], index: 2, kind: input, shape index: {}]
  %s3 = inlined_call_operand.vmem [shape: bf16[512,256], index: 3, kind: input, shape index: {}]
  %s4 = inlined_call_operand.vmem [shape: bf16[256,16], index: 4, kind: input, shape index: {}]
  %s5 = inlined_call_operand.vmem [shape: bf16[8,256], index: 5, kind: input, shape index: {}]
  %s6 = inlined_call_operand.vmem [shape: bf16[256,512], index: 6, kind: input, shape index: {}]
  %s7 = inlined_call_operand.hbm [shape: bf16[512,768], index: 7, kind: input, shape index: {}]
  %s8 = inlined_call_operand.hbm [shape: f32[8,768], index: 8, kind: input, shape index: {}]
  %s9 = inlined_call_operand.vmem [shape: f32[16,768], index: 9, kind: output, shape index: {}]
  %s10 = sld [smem:[#allocation0]]
  $region81: #{vae_forward_fused.1} parent=0
    _
  %s12 = ssub.s32 1, %s10
  %s13 = scalar_select 0, %s12, %s10
  $region1: #{vae_forward_fused.1} parent=0
    #allocation2 [shape = 'u8[786432]{0}', space=vmem, size = 0xc0000, scoped, tag = 'input window, operand 2, single buffered']
    #allocation3 [shape = 's32[2]{0}', space=sflag, size = 0x8, scoped, tag = 'scoped memory for vae_forward_fused.1']
    #allocation4 [shape = 'u8[786432]{0}', space=vmem, size = 0xc0000, scoped, tag = 'input window, operand 7, single buffered']
    #allocation5 [shape = 's32[1]{0}', space=sflag, size = 0x4, scoped, tag = 'scoped memory for vae_forward_fused.1']
    #allocation6 [shape = 'u8[24576]{0}', space=vmem, size = 0x6000, scoped, tag = 'input window, operand 8, single buffered']
    %14 = vsyncpa [#allocation3], 0
    %15 = vsyncpa [#allocation5], 0
    loop: start=0, step=1, limit=4
    $region2: #{vae_forward_fused.1} parent=1 // loop_pre_header
      _
    $region3: #{vae_forward_fused.1} parent=1 // loop_header
      %s17 = sphi 0, %s21
      %p18 = scmp.ge.s32.totalorder %s17, 4
      %s27 = sphi 0, %s29
      %s30 = sphi 0, %s27
      %s31 = sphi 0, %s30
      %s47 = sphi 0, %s31
      %s53 = sphi 0, %s55
      %s56 = sphi 0, %s53
      %s57 = sphi 0, %s56
      %s73 = sphi 0, %s57
      %s77 = sphi 0, %s77
      %s79 = sphi 0, %s77
      %s80 = sphi 0, %s79
      %s94 = sphi 0, %s80
      %s98 = sphi 0, %s98
      %s100 = sphi 0, %s98
      %s101 = sphi 0, %s100
      %s115 = sphi 0, %s101
      %s119 = sphi 0, %s119
      %s121 = sphi 0, %s119
      %s122 = sphi 0, %s121
      %s136 = sphi 0, %s122
      %s140 = sphi 0, %s140
      %s142 = sphi 0, %s140
      %s143 = sphi 0, %s142
      %s157 = sphi 0, %s143
      %s161 = sphi 0, %s161
      %s163 = sphi 0, %s161
      %s164 = sphi 0, %s163
      %s178 = sphi 0, %s164
      %s182 = sphi 0, %s182
      %s184 = sphi 0, %s182
      %s185 = sphi 0, %s184
      %s199 = sphi 0, %s185
      %s203 = sphi 0, %s203
      %s205 = sphi 0, %s203
      %s206 = sphi 0, %s205
      %s220 = sphi 0, %s206
      %s226 = sphi 0, %s228
      %s229 = sphi 0, %s226
      %s230 = sphi 0, %s229
      %s246 = sphi 0, %s230
    $region4: #{vae_forward_fused.1} parent=1 // loop_header_branch
      %20 = sbr.rel (%p18) target = $region8
    $region5: #{vae_forward_fused.1} parent=1 // loop_body
      %s22 = ssub.s32 %s17, 1
      %s23 = ssub.s32 %s17, 2
      %s24 = sadd.s32 %s17, 1
      %s25 = ssub.s32 %s17, %s24
      %p26 = scmp.eq.s32.totalorder %s25, 0
      %s28 = sadd.s32 %s27, 1
      %s29 = scalar_select %p26, %s27, %s28
      %p32 = pneg %p26
      %p33 = scmp.eq.s32.totalorder %s17, 1
      %p34 = por %p32, %p33
      %p35 = scmp.ne.s32.totalorder %s27, %s30
      %p36 = scmp.eq.s32.totalorder %s17, 0
      %p37 = por %p35, %p36
      %p38 = scmp.ne.s32.totalorder %s27, %s30
      %p39 = scmp.eq.s32.totalorder %s22, 1
      %p40 = por %p38, %p39
      %p41 = scmp.ne.s32.totalorder %s30, %s31
      %p42 = scmp.eq.s32.totalorder %s22, 0
      %p43 = por %p41, %p42
      %p44 = scmp.ne.s32.totalorder %s30, %s31
      %p45 = scmp.eq.s32.totalorder %s23, 1
      %p46 = por %p44, %p45
      %p48 = scmp.ne.s32.totalorder %s31, %s47
      %p49 = scmp.eq.s32.totalorder %s23, 0
      %p50 = por %p48, %p49
      %s51 = ssub.s32 %s17, %s24
      %p52 = scmp.eq.s32.totalorder %s51, 0
      %s54 = sadd.s32 %s53, 1
      %s55 = scalar_select %p52, %s53, %s54
      %p58 = pneg %p52
      %p59 = scmp.eq.s32.totalorder %s17, 1
      %p60 = por %p58, %p59
      %p61 = scmp.ne.s32.totalorder %s53, %s56
      %p62 = scmp.eq.s32.totalorder %s17, 0
      %p63 = por %p61, %p62
      %p64 = scmp.ne.s32.totalorder %s53, %s56
      %p65 = scmp.eq.s32.totalorder %s22, 1
      %p66 = por %p64, %p65
      %p67 = scmp.ne.s32.totalorder %s56, %s57
      %p68 = scmp.eq.s32.totalorder %s22, 0
      %p69 = por %p67, %p68
      %p70 = scmp.ne.s32.totalorder %s56, %s57
      %p71 = scmp.eq.s32.totalorder %s23, 1
      %p72 = por %p70, %p71
      %p74 = scmp.ne.s32.totalorder %s57, %s73
      %p75 = scmp.eq.s32.totalorder %s23, 0
      %p76 = por %p74, %p75
      %s78 = sadd.s32 %s77, 1
      %p81 = scmp.eq.s32.totalorder %s17, 1
      %p82 = scmp.ne.s32.totalorder %s77, %s79
      %p83 = scmp.eq.s32.totalorder %s17, 0
      %p84 = por %p82, %p83
      %p85 = scmp.ne.s32.totalorder %s77, %s79
      %p86 = scmp.eq.s32.totalorder %s22, 1
      %p87 = por %p85, %p86
      %p88 = scmp.ne.s32.totalorder %s79, %s80
      %p89 = scmp.eq.s32.totalorder %s22, 0
      %p90 = por %p88, %p89
      %p91 = scmp.ne.s32.totalorder %s79, %s80
      %p92 = scmp.eq.s32.totalorder %s23, 1
      %p93 = por %p91, %p92
      %p95 = scmp.ne.s32.totalorder %s80, %s94
      %p96 = scmp.eq.s32.totalorder %s23, 0
      %p97 = por %p95, %p96
      %s99 = sadd.s32 %s98, 1
      %p102 = scmp.eq.s32.totalorder %s17, 1
      %p103 = scmp.ne.s32.totalorder %s98, %s100
      %p104 = scmp.eq.s32.totalorder %s17, 0
      %p105 = por %p103, %p104
      %p106 = scmp.ne.s32.totalorder %s98, %s100
      %p107 = scmp.eq.s32.totalorder %s22, 1
      %p108 = por %p106, %p107
      %p109 = scmp.ne.s32.totalorder %s100, %s101
      %p110 = scmp.eq.s32.totalorder %s22, 0
      %p111 = por %p109, %p110
      %p112 = scmp.ne.s32.totalorder %s100, %s101
      %p113 = scmp.eq.s32.totalorder %s23, 1
      %p114 = por %p112, %p113
      %p116 = scmp.ne.s32.totalorder %s101, %s115
      %p117 = scmp.eq.s32.totalorder %s23, 0
      %p118 = por %p116, %p117
      %s120 = sadd.s32 %s119, 1
      %p123 = scmp.eq.s32.totalorder %s17, 1
      %p124 = scmp.ne.s32.totalorder %s119, %s121
      %p125 = scmp.eq.s32.totalorder %s17, 0
      %p126 = por %p124, %p125
      %p127 = scmp.ne.s32.totalorder %s119, %s121
      %p128 = scmp.eq.s32.totalorder %s22, 1
      %p129 = por %p127, %p128
      %p130 = scmp.ne.s32.totalorder %s121, %s122
      %p131 = scmp.eq.s32.totalorder %s22, 0
      %p132 = por %p130, %p131
      %p133 = scmp.ne.s32.totalorder %s121, %s122
      %p134 = scmp.eq.s32.totalorder %s23, 1
      %p135 = por %p133, %p134
      %p137 = scmp.ne.s32.totalorder %s122, %s136
      %p138 = scmp.eq.s32.totalorder %s23, 0
      %p139 = por %p137, %p138
      %s141 = sadd.s32 %s140, 1
      %p144 = scmp.eq.s32.totalorder %s17, 1
      %p145 = scmp.ne.s32.totalorder %s140, %s142
      %p146 = scmp.eq.s32.totalorder %s17, 0
      %p147 = por %p145, %p146
      %p148 = scmp.ne.s32.totalorder %s140, %s142
      %p149 = scmp.eq.s32.totalorder %s22, 1
      %p150 = por %p148, %p149
      %p151 = scmp.ne.s32.totalorder %s142, %s143
      %p152 = scmp.eq.s32.totalorder %s22, 0
      %p153 = por %p151, %p152
      %p154 = scmp.ne.s32.totalorder %s142, %s143
      %p155 = scmp.eq.s32.totalorder %s23, 1
      %p156 = por %p154, %p155
      %p158 = scmp.ne.s32.totalorder %s143, %s157
      %p159 = scmp.eq.s32.totalorder %s23, 0
      %p160 = por %p158, %p159
      %s162 = sadd.s32 %s161, 1
      %p165 = scmp.eq.s32.totalorder %s17, 1
      %p166 = scmp.ne.s32.totalorder %s161, %s163
      %p167 = scmp.eq.s32.totalorder %s17, 0
      %p168 = por %p166, %p167
      %p169 = scmp.ne.s32.totalorder %s161, %s163
      %p170 = scmp.eq.s32.totalorder %s22, 1
      %p171 = por %p169, %p170
      %p172 = scmp.ne.s32.totalorder %s163, %s164
      %p173 = scmp.eq.s32.totalorder %s22, 0
      %p174 = por %p172, %p173
      %p175 = scmp.ne.s32.totalorder %s163, %s164
      %p176 = scmp.eq.s32.totalorder %s23, 1
      %p177 = por %p175, %p176
      %p179 = scmp.ne.s32.totalorder %s164, %s178
      %p180 = scmp.eq.s32.totalorder %s23, 0
      %p181 = por %p179, %p180
      %s183 = sadd.s32 %s182, 1
      %p186 = scmp.eq.s32.totalorder %s17, 1
      %p187 = scmp.ne.s32.totalorder %s182, %s184
      %p188 = scmp.eq.s32.totalorder %s17, 0
      %p189 = por %p187, %p188
      %p190 = scmp.ne.s32.totalorder %s182, %s184
      %p191 = scmp.eq.s32.totalorder %s22, 1
      %p192 = por %p190, %p191
      %p193 = scmp.ne.s32.totalorder %s184, %s185
      %p194 = scmp.eq.s32.totalorder %s22, 0
      %p195 = por %p193, %p194
      %p196 = scmp.ne.s32.totalorder %s184, %s185
      %p197 = scmp.eq.s32.totalorder %s23, 1
      %p198 = por %p196, %p197
      %p200 = scmp.ne.s32.totalorder %s185, %s199
      %p201 = scmp.eq.s32.totalorder %s23, 0
      %p202 = por %p200, %p201
      %s204 = sadd.s32 %s203, 1
      %p207 = scmp.eq.s32.totalorder %s17, 1
      %p208 = scmp.ne.s32.totalorder %s203, %s205
      %p209 = scmp.eq.s32.totalorder %s17, 0
      %p210 = por %p208, %p209
      %p211 = scmp.ne.s32.totalorder %s203, %s205
      %p212 = scmp.eq.s32.totalorder %s22, 1
      %p213 = por %p211, %p212
      %p214 = scmp.ne.s32.totalorder %s205, %s206
      %p215 = scmp.eq.s32.totalorder %s22, 0
      %p216 = por %p214, %p215
      %p217 = scmp.ne.s32.totalorder %s205, %s206
      %p218 = scmp.eq.s32.totalorder %s23, 1
      %p219 = por %p217, %p218
      %p221 = scmp.ne.s32.totalorder %s206, %s220
      %p222 = scmp.eq.s32.totalorder %s23, 0
      %p223 = por %p221, %p222
      %s224 = ssub.s32 %s17, %s24
      %p225 = scmp.eq.s32.totalorder %s224, 0
      %s227 = sadd.s32 %s226, 1
      %s228 = scalar_select %p225, %s226, %s227
      %p231 = pneg %p225
      %p232 = scmp.eq.s32.totalorder %s17, 1
      %p233 = por %p231, %p232
      %p234 = scmp.ne.s32.totalorder %s226, %s229
      %p235 = scmp.eq.s32.totalorder %s17, 0
      %p236 = por %p234, %p235
      %p237 = scmp.ne.s32.totalorder %s226, %s229
      %p238 = scmp.eq.s32.totalorder %s22, 1
      %p239 = por %p237, %p238
      %p240 = scmp.ne.s32.totalorder %s229, %s230
      %p241 = scmp.eq.s32.totalorder %s22, 0
      %p242 = por %p240, %p241
      %p243 = scmp.ne.s32.totalorder %s229, %s230
      %p244 = scmp.eq.s32.totalorder %s23, 1
      %p245 = por %p243, %p244
      %p247 = scmp.ne.s32.totalorder %s230, %s246
      %p248 = scmp.eq.s32.totalorder %s23, 0
      %p249 = por %p247, %p248
      %p250 = scmp.le.s32.totalorder 1, %s17
      %p251 = scmp.lt.s32.totalorder %s17, 3
      %p252 = pnand %p250, %p251
      %p253 = pneg %p252
      // Predicated region
      $region9: #{vae_forward_fused.1} parent=5 // pred_check
        _
      $region10: #{vae_forward_fused.1} parent=5 // pred_check_branch
        %255 = sbr.rel (%p252) target = $region12
      $region11: #{vae_forward_fused.1} parent=5 // pred_region
        %s256 = ssub.s32 %s17, 1
        // Predicated region
        $region13: #{vae_forward_fused.1} parent=11 // pred_check
          %p257 = pneg %p90
        $region14: #{vae_forward_fused.1} parent=11 // pred_check_branch
          %259 = sbr.rel (%p257) target = $region16
        $region15: #{vae_forward_fused.1} parent=11 // pred_region
          %s261 = ssub.s32 24576, 24576
          %262 = vsyncadd [#allocation3], %s261
          %s263 = sshll.u32 [#allocation2], 4
          %s264 = int_to_ptr.vmem [resolvable:$true] %s263
          %269 = dma.hbm_to_vmem [thread:$0]  %s2, 24576, %s264, [#allocation3], 256, 256, 16
        $region16: #{vae_forward_fused.1} parent=11 // pred_fallthru
          _
        // Predicated region
        $region17: #{vae_forward_fused.1} parent=11 // pred_check
          %p270 = pneg %p111
        $region18: #{vae_forward_fused.1} parent=11 // pred_check_branch
          %272 = sbr.rel (%p270) target = $region20
        $region19: #{vae_forward_fused.1} parent=11 // pred_region
          _
        $region20: #{vae_forward_fused.1} parent=11 // pred_fallthru
          _
        // Predicated region
        $region21: #{vae_forward_fused.1} parent=11 // pred_check
          %p273 = pneg %p132
        $region22: #{vae_forward_fused.1} parent=11 // pred_check_branch
          %275 = sbr.rel (%p273) target = $region24
        $region23: #{vae_forward_fused.1} parent=11 // pred_region
          _
        $region24: #{vae_forward_fused.1} parent=11 // pred_fallthru
          _
        // Predicated region
        $region25: #{vae_forward_fused.1} parent=11 // pred_check
          %p276 = pneg %p153
        $region26: #{vae_forward_fused.1} parent=11 // pred_check_branch
          %278 = sbr.rel (%p276) target = $region28
        $region27: #{vae_forward_fused.1} parent=11 // pred_region
          _
        $region28: #{vae_forward_fused.1} parent=11 // pred_fallthru
          _
        // Predicated region
        $region29: #{vae_forward_fused.1} parent=11 // pred_check
          %p279 = pneg %p174
        $region30: #{vae_forward_fused.1} parent=11 // pred_check_branch
          %281 = sbr.rel (%p279) target = $region32
        $region31: #{vae_forward_fused.1} parent=11 // pred_region
          _
        $region32: #{vae_forward_fused.1} parent=11 // pred_fallthru
          _
        // Predicated region
        $region33: #{vae_forward_fused.1} parent=11 // pred_check
          %p282 = pneg %p195
        $region34: #{vae_forward_fused.1} parent=11 // pred_check_branch
          %284 = sbr.rel (%p282) target = $region36
        $region35: #{vae_forward_fused.1} parent=11 // pred_region
          %s286 = ssub.s32 24576, 24576
          %287 = vsyncadd [#allocation5], %s286
          %s288 = sshll.u32 [#allocation4], 4
          %s289 = int_to_ptr.vmem [resolvable:$true] %s288
          %294 = dma.hbm_to_vmem [thread:$0]  %s7, 24576, %s289, [#allocation5], 384, 384, 24
        $region36: #{vae_forward_fused.1} parent=11 // pred_fallthru
          _
        // Predicated region
        $region37: #{vae_forward_fused.1} parent=11 // pred_check
          %p295 = pneg %p216
        $region38: #{vae_forward_fused.1} parent=11 // pred_check_branch
          %297 = sbr.rel (%p295) target = $region40
        $region39: #{vae_forward_fused.1} parent=11 // pred_region
          %s299 = ssub.s32 768, 768
          %300 = vsyncadd [#allocation5], %s299
          %s302 = sshll.u32 [#allocation6], 4
          %s303 = int_to_ptr.vmem [resolvable:$true] %s302
          %305 = dma.hbm_to_vmem [thread:$0]  %s8, 768, %s303, [#allocation5]
        $region40: #{vae_forward_fused.1} parent=11 // pred_fallthru
          _
      $region12: #{vae_forward_fused.1} parent=5 // pred_fallthru
        _
      %p306 = scmp.lt.s32.totalorder %s17, 2
      // Predicated region
      $region41: #{vae_forward_fused.1} parent=5 // pred_check
        %p307 = pneg %p306
      $region42: #{vae_forward_fused.1} parent=5 // pred_check_branch
        %309 = sbr.rel (%p307) target = $region44
      $region43: #{vae_forward_fused.1} parent=5 // pred_region
        // Predicated region
        $region45: #{vae_forward_fused.1} parent=43 // pred_check
          %p310 = pneg %p37
        $region46: #{vae_forward_fused.1} parent=43 // pred_check_branch
          %312 = sbr.rel (%p310) target = $region48
        $region47: #{vae_forward_fused.1} parent=43 // pred_region
          %p313 = scmp.lt.s32.totalorder %s17, 1
          %s314 = scalar_select %p313, %s17, 1
          %s315 = smul.addr %s314, 6
          %s316 = smul.addr %s315, 8
          %s317 = scalar_lea.vmem %s0, %s316
        $region48: #{vae_forward_fused.1} parent=43 // pred_fallthru
          _
        // Predicated region
        $region49: #{vae_forward_fused.1} parent=43 // pred_check
          %p318 = pneg %p63
        $region50: #{vae_forward_fused.1} parent=43 // pred_check_branch
          %320 = sbr.rel (%p318) target = $region52
        $region51: #{vae_forward_fused.1} parent=43 // pred_region
          %p321 = scmp.lt.s32.totalorder %s17, 1
          %s322 = scalar_select %p321, %s17, 1
          %s323 = smul.addr %s322, 8
          %s324 = scalar_lea.vmem %s1, %s323
        $region52: #{vae_forward_fused.1} parent=43 // pred_fallthru
          _
      $region44: #{vae_forward_fused.1} parent=5 // pred_fallthru
        _
      %p325 = scmp.le.s32.totalorder 1, %s17
      %p326 = scmp.lt.s32.totalorder %s17, 3
      %p327 = pnand %p325, %p326
      %p328 = pneg %p327
      // Predicated region
      $region53: #{vae_forward_fused.1} parent=5 // pred_check
        _
      $region54: #{vae_forward_fused.1} parent=5 // pred_check_branch
        %330 = sbr.rel (%p327) target = $region56
      $region55: #{vae_forward_fused.1} parent=5 // pred_region
        %s331 = ssub.s32 %s17, 1
        // Predicated region
        $region57: #{vae_forward_fused.1} parent=55 // pred_check
          %p332 = pneg %p90
        $region58: #{vae_forward_fused.1} parent=55 // pred_check_branch
          %334 = sbr.rel (%p332) target = $region60
        $region59: #{vae_forward_fused.1} parent=55 // pred_region
          %335 = dma.done [#allocation3], 24576
        $region60: #{vae_forward_fused.1} parent=55 // pred_fallthru
          _
        // Predicated region
        $region61: #{vae_forward_fused.1} parent=55 // pred_check
          %p336 = pneg %p195
        $region62: #{vae_forward_fused.1} parent=55 // pred_check_branch
          %338 = sbr.rel (%p336) target = $region64
        $region63: #{vae_forward_fused.1} parent=55 // pred_region
          %339 = dma.done [#allocation5], 24576
        $region64: #{vae_forward_fused.1} parent=55 // pred_fallthru
          _
        // Predicated region
        $region65: #{vae_forward_fused.1} parent=55 // pred_check
          %p340 = pneg %p216
        $region66: #{vae_forward_fused.1} parent=55 // pred_check_branch
          %342 = sbr.rel (%p340) target = $region68
        $region67: #{vae_forward_fused.1} parent=55 // pred_region
          %343 = dma.done [#allocation5], 768
        $region68: #{vae_forward_fused.1} parent=55 // pred_fallthru
          _
        %p344 = scmp.lt.s32.totalorder %s22, 1
        %s345 = scalar_select %p344, %s22, 1
        %s346 = smul.addr %s345, 6
        %s347 = smul.addr %s346, 8
        %s348 = scalar_lea.vmem %s0, %s347
        %p349 = pneg %p43
        %p350 = pneg %p40
        %p351 = scmp.lt.s32.totalorder %s22, 1
        %s352 = scalar_select %p351, %s22, 1
        %s353 = smul.addr %s352, 8
        %s354 = scalar_lea.vmem %s1, %s353
        %p355 = pneg %p69
        %p356 = pneg %p66
        %p357 = pneg %p90
        %p358 = pneg %p87
        %p359 = pneg %p111
        %p360 = pneg %p108
        %p361 = pneg %p132
        %p362 = pneg %p129
        %p363 = pneg %p153
        %p364 = pneg %p150
        %p365 = pneg %p174
        %p366 = pneg %p171
        %p367 = pneg %p195
        %p368 = pneg %p192
        %p369 = pneg %p216
        %p370 = pneg %p213
        %p371 = pneg %p242
        %p372 = pneg %p239
        %p373 = scmp.lt.s32.totalorder %s22, 1
        %s374 = scalar_select %p373, %s22, 1
        %s375 = smul.addr %s374, 6
        %s376 = smul.addr %s375, 8
        %s377 = scalar_lea.vmem %s9, %s376
        %p378 = scmp.lt.s32.totalorder %s22, 1
        %s379 = scalar_select %p378, %s22, 1
        %s380 = smul.addr %s379, 6
        %s381 = smul.addr %s380, 8
        %s382 = scalar_lea.vmem %s0, %s381
        %p383 = scmp.lt.s32.totalorder %s22, 1
        %s384 = scalar_select %p383, %s22, 1
        %s385 = smul.addr %s384, 8
        %s386 = scalar_lea.vmem %s1, %s385
        %p387 = scmp.lt.s32.totalorder %s22, 1
        %s388 = scalar_select %p387, %s22, 1
        %s389 = smul.addr %s388, 6
        %s390 = smul.addr %s389, 8
        %s391 = scalar_lea.vmem %s9, %s390
        %v393 = vld [vmem:[%s382] sm:$0xff]
        %v394 = vld [vmem:[%s382 + $0x8] sm:$0xff]
        %v395 = vld [vmem:[%s382 + $0x10] sm:$0xff]
        %v396 = vld [vmem:[%s382 + $0x18] sm:$0xff]
        %v397 = vld [vmem:[%s382 + $0x20] sm:$0xff]
        %v398 = vld [vmem:[%s382 + $0x28] sm:$0xff]
        %v399 = vpack.c.bf16 %v393, %v393
        %v400 = vpack.c.bf16 %v394, %v394
        %v401 = vpack.c.bf16 %v395, %v395
        %v402 = vpack.c.bf16 %v396, %v396
        %v403 = vpack.c.bf16 %v397, %v397
        %v404 = vpack.c.bf16 %v398, %v398
        %v405 = vld [vmem:[#allocation2] sm:$0xff]
        %v406 = vld [vmem:[#allocation2 + $0x8] sm:$0xff]
        %v407 = vld [vmem:[#allocation2 + $0x10] sm:$0xff]
        %v408 = vld [vmem:[#allocation2 + $0x18] sm:$0xff]
        %v409 = vld [vmem:[#allocation2 + $0x20] sm:$0xff]
        %v410 = vld [vmem:[#allocation2 + $0x28] sm:$0xff]
        %v411 = vld [vmem:[#allocation2 + $0x30] sm:$0xff]
        %v412 = vld [vmem:[#allocation2 + $0x38] sm:$0xff]
        %v413 = vld [vmem:[#allocation2 + $0x40] sm:$0xff]
        %v414 = vld [vmem:[#allocation2 + $0x48] sm:$0xff]
        %v415 = vld [vmem:[#allocation2 + $0x50] sm:$0xff]
        %v416 = vld [vmem:[#allocation2 + $0x58] sm:$0xff]
        %v417 = vld [vmem:[#allocation2 + $0x60] sm:$0xff]
        %v418 = vld [vmem:[#allocation2 + $0x68] sm:$0xff]
        %v419 = vld [vmem:[#allocation2 + $0x70] sm:$0xff]
        %v420 = vld [vmem:[#allocation2 + $0x78] sm:$0xff]
        %v421 = vld [vmem:[#allocation2 + $0x80] sm:$0xff]
        %v422 = vld [vmem:[#allocation2 + $0x88] sm:$0xff]
        %v423 = vld [vmem:[#allocation2 + $0x90] sm:$0xff]
        %v424 = vld [vmem:[#allocation2 + $0x98] sm:$0xff]
        %v425 = vld [vmem:[#allocation2 + $0xa0] sm:$0xff]
        %v426 = vld [vmem:[#allocation2 + $0xa8] sm:$0xff]
        %v427 = vld [vmem:[#allocation2 + $0xb0] sm:$0xff]
        %v428 = vld [vmem:[#allocation2 + $0xb8] sm:$0xff]
        %v429 = vld [vmem:[#allocation2 + $0xc0] sm:$0xff]
        %v430 = vld [vmem:[#allocation2 + $0xc8] sm:$0xff]
        %v431 = vld [vmem:[#allocation2 + $0xd0] sm:$0xff]
        %v432 = vld [vmem:[#allocation2 + $0xd8] sm:$0xff]
        %v433 = vld [vmem:[#allocation2 + $0xe0] sm:$0xff]
        %v434 = vld [vmem:[#allocation2 + $0xe8] sm:$0xff]
        %v435 = vld [vmem:[#allocation2 + $0xf0] sm:$0xff]
        %v436 = vld [vmem:[#allocation2 + $0xf8] sm:$0xff]
        %v437 = vld [vmem:[#allocation2 + $0x100] sm:$0xff]
        %v438 = vld [vmem:[#allocation2 + $0x108] sm:$0xff]
        %v439 = vld [vmem:[#allocation2 + $0x110] sm:$0xff]
        %v440 = vld [vmem:[#allocation2 + $0x118] sm:$0xff]
        %v441 = vld [vmem:[#allocation2 + $0x120] sm:$0xff]
        %v442 = vld [vmem:[#allocation2 + $0x128] sm:$0xff]
        %v443 = vld [vmem:[#allocation2 + $0x130] sm:$0xff]
        %v444 = vld [vmem:[#allocation2 + $0x138] sm:$0xff]
        %v445 = vld [vmem:[#allocation2 + $0x140] sm:$0xff]
        %v446 = vld [vmem:[#allocation2 + $0x148] sm:$0xff]
        %v447 = vld [vmem:[#allocation2 + $0x150] sm:$0xff]
        %v448 = vld [vmem:[#allocation2 + $0x158] sm:$0xff]
        %v449 = vld [vmem:[#allocation2 + $0x160] sm:$0xff]
        %v450 = vld [vmem:[#allocation2 + $0x168] sm:$0xff]
        %v451 = vld [vmem:[#allocation2 + $0x170] sm:$0xff]
        %v452 = vld [vmem:[#allocation2 + $0x178] sm:$0xff]
        %v453 = vld [vmem:[#allocation2 + $0x180] sm:$0xff]
        %v454 = vld [vmem:[#allocation2 + $0x188] sm:$0xff]
        %v455 = vld [vmem:[#allocation2 + $0x190] sm:$0xff]
        %v456 = vld [vmem:[#allocation2 + $0x198] sm:$0xff]
        %v457 = vld [vmem:[#allocation2 + $0x1a0] sm:$0xff]
        %v458 = vld [vmem:[#allocation2 + $0x1a8] sm:$0xff]
        %v459 = vld [vmem:[#allocation2 + $0x1b0] sm:$0xff]
        %v460 = vld [vmem:[#allocation2 + $0x1b8] sm:$0xff]
        %v461 = vld [vmem:[#allocation2 + $0x1c0] sm:$0xff]
        %v462 = vld [vmem:[#allocation2 + $0x1c8] sm:$0xff]
        %v463 = vld [vmem:[#allocation2 + $0x1d0] sm:$0xff]
        %v464 = vld [vmem:[#allocation2 + $0x1d8] sm:$0xff]
        %v465 = vld [vmem:[#allocation2 + $0x1e0] sm:$0xff]
        %v466 = vld [vmem:[#allocation2 + $0x1e8] sm:$0xff]
        %v467 = vld [vmem:[#allocation2 + $0x1f0] sm:$0xff]
        %v468 = vld [vmem:[#allocation2 + $0x1f8] sm:$0xff]
        %v469 = vld [vmem:[#allocation2 + $0x200] sm:$0xff]
        %v470 = vld [vmem:[#allocation2 + $0x208] sm:$0xff]
        %v471 = vld [vmem:[#allocation2 + $0x210] sm:$0xff]
        %v472 = vld [vmem:[#allocation2 + $0x218] sm:$0xff]
        %v473 = vld [vmem:[#allocation2 + $0x220] sm:$0xff]
        %v474 = vld [vmem:[#allocation2 + $0x228] sm:$0xff]
        %v475 = vld [vmem:[#allocation2 + $0x230] sm:$0xff]
        %v476 = vld [vmem:[#allocation2 + $0x238] sm:$0xff]
        %v477 = vld [vmem:[#allocation2 + $0x240] sm:$0xff]
        %v478 = vld [vmem:[#allocation2 + $0x248] sm:$0xff]
        %v479 = vld [vmem:[#allocation2 + $0x250] sm:$0xff]
        %v480 = vld [vmem:[#allocation2 + $0x258] sm:$0xff]
        %v481 = vld [vmem:[#allocation2 + $0x260] sm:$0xff]
        %v482 = vld [vmem:[#allocation2 + $0x268] sm:$0xff]
        %v483 = vld [vmem:[#allocation2 + $0x270] sm:$0xff]
        %v484 = vld [vmem:[#allocation2 + $0x278] sm:$0xff]
        %v485 = vld [vmem:[#allocation2 + $0x280] sm:$0xff]
        %v486 = vld [vmem:[#allocation2 + $0x288] sm:$0xff]
        %v487 = vld [vmem:[#allocation2 + $0x290] sm:$0xff]
        %v488 = vld [vmem:[#allocation2 + $0x298] sm:$0xff]
        %v489 = vld [vmem:[#allocation2 + $0x2a0] sm:$0xff]
        %v490 = vld [vmem:[#allocation2 + $0x2a8] sm:$0xff]
        %v491 = vld [vmem:[#allocation2 + $0x2b0] sm:$0xff]
        %v492 = vld [vmem:[#allocation2 + $0x2b8] sm:$0xff]
        %v493 = vld [vmem:[#allocation2 + $0x2c0] sm:$0xff]
        %v494 = vld [vmem:[#allocation2 + $0x2c8] sm:$0xff]
        %v495 = vld [vmem:[#allocation2 + $0x2d0] sm:$0xff]
        %v496 = vld [vmem:[#allocation2 + $0x2d8] sm:$0xff]
        %v497 = vld [vmem:[#allocation2 + $0x2e0] sm:$0xff]
        %v498 = vld [vmem:[#allocation2 + $0x2e8] sm:$0xff]
        %v499 = vld [vmem:[#allocation2 + $0x2f0] sm:$0xff]
        %v500 = vld [vmem:[#allocation2 + $0x2f8] sm:$0xff]
        %v501 = vld [vmem:[#allocation2 + $0x300] sm:$0xff]
        %v502 = vld [vmem:[#allocation2 + $0x308] sm:$0xff]
        %v503 = vld [vmem:[#allocation2 + $0x310] sm:$0xff]
        %v504 = vld [vmem:[#allocation2 + $0x318] sm:$0xff]
        %v505 = vld [vmem:[#allocation2 + $0x320] sm:$0xff]
        %v506 = vld [vmem:[#allocation2 + $0x328] sm:$0xff]
        %v507 = vld [vmem:[#allocation2 + $0x330] sm:$0xff]
        %v508 = vld [vmem:[#allocation2 + $0x338] sm:$0xff]
        %v509 = vld [vmem:[#allocation2 + $0x340] sm:$0xff]
        %v510 = vld [vmem:[#allocation2 + $0x348] sm:$0xff]
        %v511 = vld [vmem:[#allocation2 + $0x350] sm:$0xff]
        %v512 = vld [vmem:[#allocation2 + $0x358] sm:$0xff]
        %v513 = vld [vmem:[#allocation2 + $0x360] sm:$0xff]
        %v514 = vld [vmem:[#allocation2 + $0x368] sm:$0xff]
        %v515 = vld [vmem:[#allocation2 + $0x370] sm:$0xff]
        %v516 = vld [vmem:[#allocation2 + $0x378] sm:$0xff]
        %v517 = vld [vmem:[#allocation2 + $0x380] sm:$0xff]
        %v518 = vld [vmem:[#allocation2 + $0x388] sm:$0xff]
        %v519 = vld [vmem:[#allocation2 + $0x390] sm:$0xff]
        %v520 = vld [vmem:[#allocation2 + $0x398] sm:$0xff]
        %v521 = vld [vmem:[#allocation2 + $0x3a0] sm:$0xff]
        %v522 = vld [vmem:[#allocation2 + $0x3a8] sm:$0xff]
        %v523 = vld [vmem:[#allocation2 + $0x3b0] sm:$0xff]
        %v524 = vld [vmem:[#allocation2 + $0x3b8] sm:$0xff]
        %v525 = vld [vmem:[#allocation2 + $0x3c0] sm:$0xff]
        %v526 = vld [vmem:[#allocation2 + $0x3c8] sm:$0xff]
        %v527 = vld [vmem:[#allocation2 + $0x3d0] sm:$0xff]
        %v528 = vld [vmem:[#allocation2 + $0x3d8] sm:$0xff]
        %v529 = vld [vmem:[#allocation2 + $0x3e0] sm:$0xff]
        %v530 = vld [vmem:[#allocation2 + $0x3e8] sm:$0xff]
        %v531 = vld [vmem:[#allocation2 + $0x3f0] sm:$0xff]
        %v532 = vld [vmem:[#allocation2 + $0x3f8] sm:$0xff]
        %v533 = vld [vmem:[#allocation2 + $0x400] sm:$0xff]
        %v534 = vld [vmem:[#allocation2 + $0x408] sm:$0xff]
        %v535 = vld [vmem:[#allocation2 + $0x410] sm:$0xff]
        %v536 = vld [vmem:[#allocation2 + $0x418] sm:$0xff]
        %v537 = vld [vmem:[#allocation2 + $0x420] sm:$0xff]
        %v538 = vld [vmem:[#allocation2 + $0x428] sm:$0xff]
        %v539 = vld [vmem:[#allocation2 + $0x430] sm:$0xff]
        %v540 = vld [vmem:[#allocation2 + $0x438] sm:$0xff]
        %v541 = vld [vmem:[#allocation2 + $0x440] sm:$0xff]
        %v542 = vld [vmem:[#allocation2 + $0x448] sm:$0xff]
        %v543 = vld [vmem:[#allocation2 + $0x450] sm:$0xff]
        %v544 = vld [vmem:[#allocation2 + $0x458] sm:$0xff]
        %v545 = vld [vmem:[#allocation2 + $0x460] sm:$0xff]
        %v546 = vld [vmem:[#allocation2 + $0x468] sm:$0xff]
        %v547 = vld [vmem:[#allocation2 + $0x470] sm:$0xff]
        %v548 = vld [vmem:[#allocation2 + $0x478] sm:$0xff]
        %v549 = vld [vmem:[#allocation2 + $0x480] sm:$0xff]
        %v550 = vld [vmem:[#allocation2 + $0x488] sm:$0xff]
        %v551 = vld [vmem:[#allocation2 + $0x490] sm:$0xff]
        %v552 = vld [vmem:[#allocation2 + $0x498] sm:$0xff]
        %v553 = vld [vmem:[#allocation2 + $0x4a0] sm:$0xff]
        %v554 = vld [vmem:[#allocation2 + $0x4a8] sm:$0xff]
        %v555 = vld [vmem:[#allocation2 + $0x4b0] sm:$0xff]
        %v556 = vld [vmem:[#allocation2 + $0x4b8] sm:$0xff]
        %v557 = vld [vmem:[#allocation2 + $0x4c0] sm:$0xff]
        %v558 = vld [vmem:[#allocation2 + $0x4c8] sm:$0xff]
        %v559 = vld [vmem:[#allocation2 + $0x4d0] sm:$0xff]
        %v560 = vld [vmem:[#allocation2 + $0x4d8] sm:$0xff]
        %v561 = vld [vmem:[#allocation2 + $0x4e0] sm:$0xff]
        %v562 = vld [vmem:[#allocation2 + $0x4e8] sm:$0xff]
        %v563 = vld [vmem:[#allocation2 + $0x4f0] sm:$0xff]
        %v564 = vld [vmem:[#allocation2 + $0x4f8] sm:$0xff]
        %v565 = vld [vmem:[#allocation2 + $0x500] sm:$0xff]
        %v566 = vld [vmem:[#allocation2 + $0x508] sm:$0xff]
        %v567 = vld [vmem:[#allocation2 + $0x510] sm:$0xff]
        %v568 = vld [vmem:[#allocation2 + $0x518] sm:$0xff]
        %v569 = vld [vmem:[#allocation2 + $0x520] sm:$0xff]
        %v570 = vld [vmem:[#allocation2 + $0x528] sm:$0xff]
        %v571 = vld [vmem:[#allocation2 + $0x530] sm:$0xff]
        %v572 = vld [vmem:[#allocation2 + $0x538] sm:$0xff]
        %v573 = vld [vmem:[#allocation2 + $0x540] sm:$0xff]
        %v574 = vld [vmem:[#allocation2 + $0x548] sm:$0xff]
        %v575 = vld [vmem:[#allocation2 + $0x550] sm:$0xff]
        %v576 = vld [vmem:[#allocation2 + $0x558] sm:$0xff]
        %v577 = vld [vmem:[#allocation2 + $0x560] sm:$0xff]
        %v578 = vld [vmem:[#allocation2 + $0x568] sm:$0xff]
        %v579 = vld [vmem:[#allocation2 + $0x570] sm:$0xff]
        %v580 = vld [vmem:[#allocation2 + $0x578] sm:$0xff]
        %v581 = vld [vmem:[#allocation2 + $0x580] sm:$0xff]
        %v582 = vld [vmem:[#allocation2 + $0x588] sm:$0xff]
        %v583 = vld [vmem:[#allocation2 + $0x590] sm:$0xff]
        %v584 = vld [vmem:[#allocation2 + $0x598] sm:$0xff]
        %v585 = vld [vmem:[#allocation2 + $0x5a0] sm:$0xff]
        %v586 = vld [vmem:[#allocation2 + $0x5a8] sm:$0xff]
        %v587 = vld [vmem:[#allocation2 + $0x5b0] sm:$0xff]
        %v588 = vld [vmem:[#allocation2 + $0x5b8] sm:$0xff]
        %v589 = vld [vmem:[#allocation2 + $0x5c0] sm:$0xff]
        %v590 = vld [vmem:[#allocation2 + $0x5c8] sm:$0xff]
        %v591 = vld [vmem:[#allocation2 + $0x5d0] sm:$0xff]
        %v592 = vld [vmem:[#allocation2 + $0x5d8] sm:$0xff]
        %v593 = vld [vmem:[#allocation2 + $0x5e0] sm:$0xff]
        %v594 = vld [vmem:[#allocation2 + $0x5e8] sm:$0xff]
        %v595 = vld [vmem:[#allocation2 + $0x5f0] sm:$0xff]
        %v596 = vld [vmem:[#allocation2 + $0x5f8] sm:$0xff]
        %v597 = vld [vmem:[#allocation6] ss:$8 sm:$0xf]
        %v599 = vlaneseq
        %v600 = vshrl.u32 %v599, 7
        %v601 = vsub.s32 0, %v600
        %v602 = vrot.slane %v597, %v601
        %v603 = vlaneseq
        %v604 = vshrl.u32 %v603, 7
        %v605 = vsub.s32 1, %v604
        %v606 = vrot.slane %v597, %v605
        %v607 = vlaneseq
        %v608 = vshrl.u32 %v607, 7
        %v609 = vsub.s32 2, %v608
        %v610 = vrot.slane %v597, %v609
        %v611 = vlaneseq
        %v612 = vshrl.u32 %v611, 7
        %v613 = vsub.s32 3, %v612
        %v614 = vrot.slane %v597, %v613
        %v811 = vunpack.c.l.b16 %v405
        %v812 = vunpack.c.h.b16 %v405
        %v813 = vunpack.c.l.b16 %v406
        %v814 = vunpack.c.h.b16 %v406
        %v815 = vunpack.c.l.b16 %v407
        %v816 = vunpack.c.h.b16 %v407
        %v817 = vunpack.c.l.b16 %v408
        %v818 = vunpack.c.h.b16 %v408
        %v819 = vunpack.c.l.b16 %v409
        %v820 = vunpack.c.h.b16 %v409
        %v821 = vunpack.c.l.b16 %v410
        %v822 = vunpack.c.h.b16 %v410
        %v823 = vunpack.c.l.b16 %v411
        %v824 = vunpack.c.h.b16 %v411
        %v825 = vunpack.c.l.b16 %v412
        %v826 = vunpack.c.h.b16 %v412
        %v827 = vunpack.c.l.b16 %v413
        %v828 = vunpack.c.h.b16 %v413
        %v829 = vunpack.c.l.b16 %v414
        %v830 = vunpack.c.h.b16 %v414
        %v831 = vunpack.c.l.b16 %v415
        %v832 = vunpack.c.h.b16 %v415
        %v833 = vunpack.c.l.b16 %v416
        %v834 = vunpack.c.h.b16 %v416
        %v835 = vunpack.c.l.b16 %v417
        %v836 = vunpack.c.h.b16 %v417
        %v837 = vunpack.c.l.b16 %v418
        %v838 = vunpack.c.h.b16 %v418
        %v839 = vunpack.c.l.b16 %v419
        %v840 = vunpack.c.h.b16 %v419
        %v841 = vunpack.c.l.b16 %v420
        %v842 = vunpack.c.h.b16 %v420
        %v843 = vunpack.c.l.b16 %v421
        %v844 = vunpack.c.h.b16 %v421
        %v845 = vunpack.c.l.b16 %v422
        %v846 = vunpack.c.h.b16 %v422
        %v847 = vunpack.c.l.b16 %v423
        %v848 = vunpack.c.h.b16 %v423
        %v849 = vunpack.c.l.b16 %v424
        %v850 = vunpack.c.h.b16 %v424
        %v851 = vunpack.c.l.b16 %v425
        %v852 = vunpack.c.h.b16 %v425
        %v853 = vunpack.c.l.b16 %v426
        %v854 = vunpack.c.h.b16 %v426
        %v855 = vunpack.c.l.b16 %v427
        %v856 = vunpack.c.h.b16 %v427
        %v857 = vunpack.c.l.b16 %v428
        %v858 = vunpack.c.h.b16 %v428
        %v859 = vunpack.c.l.b16 %v429
        %v860 = vunpack.c.h.b16 %v429
        %v861 = vunpack.c.l.b16 %v430
        %v862 = vunpack.c.h.b16 %v430
        %v863 = vunpack.c.l.b16 %v431
        %v864 = vunpack.c.h.b16 %v431
        %v865 = vunpack.c.l.b16 %v432
        %v866 = vunpack.c.h.b16 %v432
        %v867 = vunpack.c.l.b16 %v433
        %v868 = vunpack.c.h.b16 %v433
        %v869 = vunpack.c.l.b16 %v434
        %v870 = vunpack.c.h.b16 %v434
        %v871 = vunpack.c.l.b16 %v435
        %v872 = vunpack.c.h.b16 %v435
        %v873 = vunpack.c.l.b16 %v436
        %v874 = vunpack.c.h.b16 %v436
        %v875 = vunpack.c.l.b16 %v437
        %v876 = vunpack.c.h.b16 %v437
        %v877 = vunpack.c.l.b16 %v438
        %v878 = vunpack.c.h.b16 %v438
        %v879 = vunpack.c.l.b16 %v439
        %v880 = vunpack.c.h.b16 %v439
        %v881 = vunpack.c.l.b16 %v440
        %v882 = vunpack.c.h.b16 %v440
        %v883 = vunpack.c.l.b16 %v441
        %v884 = vunpack.c.h.b16 %v441
        %v885 = vunpack.c.l.b16 %v442
        %v886 = vunpack.c.h.b16 %v442
        %v887 = vunpack.c.l.b16 %v443
        %v888 = vunpack.c.h.b16 %v443
        %v889 = vunpack.c.l.b16 %v444
        %v890 = vunpack.c.h.b16 %v444
        %v891 = vunpack.c.l.b16 %v445
        %v892 = vunpack.c.h.b16 %v445
        %v893 = vunpack.c.l.b16 %v446
        %v894 = vunpack.c.h.b16 %v446
        %v895 = vunpack.c.l.b16 %v447
        %v896 = vunpack.c.h.b16 %v447
        %v897 = vunpack.c.l.b16 %v448
        %v898 = vunpack.c.h.b16 %v448
        %v899 = vunpack.c.l.b16 %v449
        %v900 = vunpack.c.h.b16 %v449
        %v901 = vunpack.c.l.b16 %v450
        %v902 = vunpack.c.h.b16 %v450
        %v903 = vunpack.c.l.b16 %v451
        %v904 = vunpack.c.h.b16 %v451
        %v905 = vunpack.c.l.b16 %v452
        %v906 = vunpack.c.h.b16 %v452
        %v907 = vunpack.c.l.b16 %v453
        %v908 = vunpack.c.h.b16 %v453
        %v909 = vunpack.c.l.b16 %v454
        %v910 = vunpack.c.h.b16 %v454
        %v911 = vunpack.c.l.b16 %v455
        %v912 = vunpack.c.h.b16 %v455
        %v913 = vunpack.c.l.b16 %v456
        %v914 = vunpack.c.h.b16 %v456
        %v915 = vunpack.c.l.b16 %v457
        %v916 = vunpack.c.h.b16 %v457
        %v917 = vunpack.c.l.b16 %v458
        %v918 = vunpack.c.h.b16 %v458
        %v919 = vunpack.c.l.b16 %v459
        %v920 = vunpack.c.h.b16 %v459
        %v921 = vunpack.c.l.b16 %v460
        %v922 = vunpack.c.h.b16 %v460
        %v923 = vunpack.c.l.b16 %v461
        %v924 = vunpack.c.h.b16 %v461
        %v925 = vunpack.c.l.b16 %v462
        %v926 = vunpack.c.h.b16 %v462
        %v927 = vunpack.c.l.b16 %v463
        %v928 = vunpack.c.h.b16 %v463
        %v929 = vunpack.c.l.b16 %v464
        %v930 = vunpack.c.h.b16 %v464
        %v931 = vunpack.c.l.b16 %v465
        %v932 = vunpack.c.h.b16 %v465
        %v933 = vunpack.c.l.b16 %v466
        %v934 = vunpack.c.h.b16 %v466
        %v935 = vunpack.c.l.b16 %v467
        %v936 = vunpack.c.h.b16 %v467
        %v937 = vunpack.c.l.b16 %v468
        %v938 = vunpack.c.h.b16 %v468
        %v939 = vunpack.c.l.b16 %v469
        %v940 = vunpack.c.h.b16 %v469
        %v941 = vunpack.c.l.b16 %v470
        %v942 = vunpack.c.h.b16 %v470
        %v943 = vunpack.c.l.b16 %v471
        %v944 = vunpack.c.h.b16 %v471
        %v945 = vunpack.c.l.b16 %v472
        %v946 = vunpack.c.h.b16 %v472
        %v947 = vunpack.c.l.b16 %v473
        %v948 = vunpack.c.h.b16 %v473
        %v949 = vunpack.c.l.b16 %v474
        %v950 = vunpack.c.h.b16 %v474
        %v951 = vunpack.c.l.b16 %v475
        %v952 = vunpack.c.h.b16 %v475
        %v953 = vunpack.c.l.b16 %v476
        %v954 = vunpack.c.h.b16 %v476
        %v955 = vunpack.c.l.b16 %v477
        %v956 = vunpack.c.h.b16 %v477
        %v957 = vunpack.c.l.b16 %v478
        %v958 = vunpack.c.h.b16 %v478
        %v959 = vunpack.c.l.b16 %v479
        %v960 = vunpack.c.h.b16 %v479
        %v961 = vunpack.c.l.b16 %v480
        %v962 = vunpack.c.h.b16 %v480
        %v963 = vunpack.c.l.b16 %v481
        %v964 = vunpack.c.h.b16 %v481
        %v965 = vunpack.c.l.b16 %v482
        %v966 = vunpack.c.h.b16 %v482
        %v967 = vunpack.c.l.b16 %v483
        %v968 = vunpack.c.h.b16 %v483
        %v969 = vunpack.c.l.b16 %v484
        %v970 = vunpack.c.h.b16 %v484
        %v971 = vunpack.c.l.b16 %v485
        %v972 = vunpack.c.h.b16 %v485
        %v973 = vunpack.c.l.b16 %v486
        %v974 = vunpack.c.h.b16 %v486
        %v975 = vunpack.c.l.b16 %v487
        %v976 = vunpack.c.h.b16 %v487
        %v977 = vunpack.c.l.b16 %v488
        %v978 = vunpack.c.h.b16 %v488
        %v979 = vunpack.c.l.b16 %v489
        %v980 = vunpack.c.h.b16 %v489
        %v981 = vunpack.c.l.b16 %v490
        %v982 = vunpack.c.h.b16 %v490
        %v983 = vunpack.c.l.b16 %v491
        %v984 = vunpack.c.h.b16 %v491
        %v985 = vunpack.c.l.b16 %v492
        %v986 = vunpack.c.h.b16 %v492
        %v987 = vunpack.c.l.b16 %v493
        %v988 = vunpack.c.h.b16 %v493
        %v989 = vunpack.c.l.b16 %v494
        %v990 = vunpack.c.h.b16 %v494
        %v991 = vunpack.c.l.b16 %v495
        %v992 = vunpack.c.h.b16 %v495
        %v993 = vunpack.c.l.b16 %v496
        %v994 = vunpack.c.h.b16 %v496
        %v995 = vunpack.c.l.b16 %v497
        %v996 = vunpack.c.h.b16 %v497
        %v997 = vunpack.c.l.b16 %v498
        %v998 = vunpack.c.h.b16 %v498
        %v999 = vunpack.c.l.b16 %v499
        %v1000 = vunpack.c.h.b16 %v499
        %v1001 = vunpack.c.l.b16 %v500
        %v1002 = vunpack.c.h.b16 %v500
        %v1003 = vunpack.c.l.b16 %v501
        %v1004 = vunpack.c.h.b16 %v501
        %v1005 = vunpack.c.l.b16 %v502
        %v1006 = vunpack.c.h.b16 %v502
        %v1007 = vunpack.c.l.b16 %v503
        %v1008 = vunpack.c.h.b16 %v503
        %v1009 = vunpack.c.l.b16 %v504
        %v1010 = vunpack.c.h.b16 %v504
        %v1011 = vunpack.c.l.b16 %v505
        %v1012 = vunpack.c.h.b16 %v505
        %v1013 = vunpack.c.l.b16 %v506
        %v1014 = vunpack.c.h.b16 %v506
        %v1015 = vunpack.c.l.b16 %v507
        %v1016 = vunpack.c.h.b16 %v507
        %v1017 = vunpack.c.l.b16 %v508
        %v1018 = vunpack.c.h.b16 %v508
        %v1019 = vunpack.c.l.b16 %v509
        %v1020 = vunpack.c.h.b16 %v509
        %v1021 = vunpack.c.l.b16 %v510
        %v1022 = vunpack.c.h.b16 %v510
        %v1023 = vunpack.c.l.b16 %v511
        %v1024 = vunpack.c.h.b16 %v511
        %v1025 = vunpack.c.l.b16 %v512
        %v1026 = vunpack.c.h.b16 %v512
        %v1027 = vunpack.c.l.b16 %v513
        %v1028 = vunpack.c.h.b16 %v513
        %v1029 = vunpack.c.l.b16 %v514
        %v1030 = vunpack.c.h.b16 %v514
        %v1031 = vunpack.c.l.b16 %v515
        %v1032 = vunpack.c.h.b16 %v515
        %v1033 = vunpack.c.l.b16 %v516
        %v1034 = vunpack.c.h.b16 %v516
        %v1035 = vunpack.c.l.b16 %v517
        %v1036 = vunpack.c.h.b16 %v517
        %v1037 = vunpack.c.l.b16 %v518
        %v1038 = vunpack.c.h.b16 %v518
        %v1039 = vunpack.c.l.b16 %v519
        %v1040 = vunpack.c.h.b16 %v519
        %v1041 = vunpack.c.l.b16 %v520
        %v1042 = vunpack.c.h.b16 %v520
        %v1043 = vunpack.c.l.b16 %v521
        %v1044 = vunpack.c.h.b16 %v521
        %v1045 = vunpack.c.l.b16 %v522
        %v1046 = vunpack.c.h.b16 %v522
        %v1047 = vunpack.c.l.b16 %v523
        %v1048 = vunpack.c.h.b16 %v523
        %v1049 = vunpack.c.l.b16 %v524
        %v1050 = vunpack.c.h.b16 %v524
        %v1051 = vunpack.c.l.b16 %v525
        %v1052 = vunpack.c.h.b16 %v525
        %v1053 = vunpack.c.l.b16 %v526
        %v1054 = vunpack.c.h.b16 %v526
        %v1055 = vunpack.c.l.b16 %v527
        %v1056 = vunpack.c.h.b16 %v527
        %v1057 = vunpack.c.l.b16 %v528
        %v1058 = vunpack.c.h.b16 %v528
        %v1059 = vunpack.c.l.b16 %v529
        %v1060 = vunpack.c.h.b16 %v529
        %v1061 = vunpack.c.l.b16 %v530
        %v1062 = vunpack.c.h.b16 %v530
        %v1063 = vunpack.c.l.b16 %v531
        %v1064 = vunpack.c.h.b16 %v531
        %v1065 = vunpack.c.l.b16 %v532
        %v1066 = vunpack.c.h.b16 %v532
        %v1067 = vunpack.c.l.b16 %v533
        %v1068 = vunpack.c.h.b16 %v533
        %v1069 = vunpack.c.l.b16 %v534
        %v1070 = vunpack.c.h.b16 %v534
        %v1071 = vunpack.c.l.b16 %v535
        %v1072 = vunpack.c.h.b16 %v535
        %v1073 = vunpack.c.l.b16 %v536
        %v1074 = vunpack.c.h.b16 %v536
        %v1075 = vunpack.c.l.b16 %v537
        %v1076 = vunpack.c.h.b16 %v537
        %v1077 = vunpack.c.l.b16 %v538
        %v1078 = vunpack.c.h.b16 %v538
        %v1079 = vunpack.c.l.b16 %v539
        %v1080 = vunpack.c.h.b16 %v539
        %v1081 = vunpack.c.l.b16 %v540
        %v1082 = vunpack.c.h.b16 %v540
        %v1083 = vunpack.c.l.b16 %v541
        %v1084 = vunpack.c.h.b16 %v541
        %v1085 = vunpack.c.l.b16 %v542
        %v1086 = vunpack.c.h.b16 %v542
        %v1087 = vunpack.c.l.b16 %v543
        %v1088 = vunpack.c.h.b16 %v543
        %v1089 = vunpack.c.l.b16 %v544
        %v1090 = vunpack.c.h.b16 %v544
        %v1091 = vunpack.c.l.b16 %v545
        %v1092 = vunpack.c.h.b16 %v545
        %v1093 = vunpack.c.l.b16 %v546
        %v1094 = vunpack.c.h.b16 %v546
        %v1095 = vunpack.c.l.b16 %v547
        %v1096 = vunpack.c.h.b16 %v547
        %v1097 = vunpack.c.l.b16 %v548
        %v1098 = vunpack.c.h.b16 %v548
        %v1099 = vunpack.c.l.b16 %v549
        %v1100 = vunpack.c.h.b16 %v549
        %v1101 = vunpack.c.l.b16 %v550
        %v1102 = vunpack.c.h.b16 %v550
        %v1103 = vunpack.c.l.b16 %v551
        %v1104 = vunpack.c.h.b16 %v551
        %v1105 = vunpack.c.l.b16 %v552
        %v1106 = vunpack.c.h.b16 %v552
        %v1107 = vunpack.c.l.b16 %v553
        %v1108 = vunpack.c.h.b16 %v553
        %v1109 = vunpack.c.l.b16 %v554
        %v1110 = vunpack.c.h.b16 %v554
        %v1111 = vunpack.c.l.b16 %v555
        %v1112 = vunpack.c.h.b16 %v555
        %v1113 = vunpack.c.l.b16 %v556
        %v1114 = vunpack.c.h.b16 %v556
        %v1115 = vunpack.c.l.b16 %v557
        %v1116 = vunpack.c.h.b16 %v557
        %v1117 = vunpack.c.l.b16 %v558
        %v1118 = vunpack.c.h.b16 %v558
        %v1119 = vunpack.c.l.b16 %v559
        %v1120 = vunpack.c.h.b16 %v559
        %v1121 = vunpack.c.l.b16 %v560
        %v1122 = vunpack.c.h.b16 %v560
        %v1123 = vunpack.c.l.b16 %v561
        %v1124 = vunpack.c.h.b16 %v561
        %v1125 = vunpack.c.l.b16 %v562
        %v1126 = vunpack.c.h.b16 %v562
        %v1127 = vunpack.c.l.b16 %v563
        %v1128 = vunpack.c.h.b16 %v563
        %v1129 = vunpack.c.l.b16 %v564
        %v1130 = vunpack.c.h.b16 %v564
        %v1131 = vunpack.c.l.b16 %v565
        %v1132 = vunpack.c.h.b16 %v565
        %v1133 = vunpack.c.l.b16 %v566
        %v1134 = vunpack.c.h.b16 %v566
        %v1135 = vunpack.c.l.b16 %v567
        %v1136 = vunpack.c.h.b16 %v567
        %v1137 = vunpack.c.l.b16 %v568
        %v1138 = vunpack.c.h.b16 %v568
        %v1139 = vunpack.c.l.b16 %v569
        %v1140 = vunpack.c.h.b16 %v569
        %v1141 = vunpack.c.l.b16 %v570
        %v1142 = vunpack.c.h.b16 %v570
        %v1143 = vunpack.c.l.b16 %v571
        %v1144 = vunpack.c.h.b16 %v571
        %v1145 = vunpack.c.l.b16 %v572
        %v1146 = vunpack.c.h.b16 %v572
        %v1147 = vunpack.c.l.b16 %v573
        %v1148 = vunpack.c.h.b16 %v573
        %v1149 = vunpack.c.l.b16 %v574
        %v1150 = vunpack.c.h.b16 %v574
        %v1151 = vunpack.c.l.b16 %v575
        %v1152 = vunpack.c.h.b16 %v575
        %v1153 = vunpack.c.l.b16 %v576
        %v1154 = vunpack.c.h.b16 %v576
        %v1155 = vunpack.c.l.b16 %v577
        %v1156 = vunpack.c.h.b16 %v577
        %v1157 = vunpack.c.l.b16 %v578
        %v1158 = vunpack.c.h.b16 %v578
        %v1159 = vunpack.c.l.b16 %v579
        %v1160 = vunpack.c.h.b16 %v579
        %v1161 = vunpack.c.l.b16 %v580
        %v1162 = vunpack.c.h.b16 %v580
        %v1163 = vunpack.c.l.b16 %v581
        %v1164 = vunpack.c.h.b16 %v581
        %v1165 = vunpack.c.l.b16 %v582
        %v1166 = vunpack.c.h.b16 %v582
        %v1167 = vunpack.c.l.b16 %v583
        %v1168 = vunpack.c.h.b16 %v583
        %v1169 = vunpack.c.l.b16 %v584
        %v1170 = vunpack.c.h.b16 %v584
        %v1171 = vunpack.c.l.b16 %v585
        %v1172 = vunpack.c.h.b16 %v585
        %v1173 = vunpack.c.l.b16 %v586
        %v1174 = vunpack.c.h.b16 %v586
        %v1175 = vunpack.c.l.b16 %v587
        %v1176 = vunpack.c.h.b16 %v587
        %v1177 = vunpack.c.l.b16 %v588
        %v1178 = vunpack.c.h.b16 %v588
        %v1179 = vunpack.c.l.b16 %v589
        %v1180 = vunpack.c.h.b16 %v589
        %v1181 = vunpack.c.l.b16 %v590
        %v1182 = vunpack.c.h.b16 %v590
        %v1183 = vunpack.c.l.b16 %v591
        %v1184 = vunpack.c.h.b16 %v591
        %v1185 = vunpack.c.l.b16 %v592
        %v1186 = vunpack.c.h.b16 %v592
        %v1187 = vunpack.c.l.b16 %v593
        %v1188 = vunpack.c.h.b16 %v593
        %v1189 = vunpack.c.l.b16 %v594
        %v1190 = vunpack.c.h.b16 %v594
        %v1191 = vunpack.c.l.b16 %v595
        %v1192 = vunpack.c.h.b16 %v595
        %v1193 = vunpack.c.l.b16 %v596
        %v1194 = vunpack.c.h.b16 %v596
        %v1195 = vpack.c.b16 %v815, %v811
        %v1196 = vpack.c.b16 %v816, %v812
        %v1197 = vpack.c.b16 %v817, %v813
        %v1198 = vpack.c.b16 %v818, %v814
        %v1199 = vpack.c.b16 %v823, %v819
        %v1200 = vpack.c.b16 %v824, %v820
        %v1201 = vpack.c.b16 %v825, %v821
        %v1202 = vpack.c.b16 %v826, %v822
        %v1203 = vpack.c.b16 %v831, %v827
        %v1204 = vpack.c.b16 %v832, %v828
        %v1205 = vpack.c.b16 %v833, %v829
        %v1206 = vpack.c.b16 %v834, %v830
        %v1207 = vpack.c.b16 %v839, %v835
        %v1208 = vpack.c.b16 %v840, %v836
        %v1209 = vpack.c.b16 %v841, %v837
        %v1210 = vpack.c.b16 %v842, %v838
        %v1211 = vpack.c.b16 %v847, %v843
        %v1212 = vpack.c.b16 %v848, %v844
        %v1213 = vpack.c.b16 %v849, %v845
        %v1214 = vpack.c.b16 %v850, %v846
        %v1215 = vpack.c.b16 %v855, %v851
        %v1216 = vpack.c.b16 %v856, %v852
        %v1217 = vpack.c.b16 %v857, %v853
        %v1218 = vpack.c.b16 %v858, %v854
        %v1219 = vpack.c.b16 %v863, %v859
        %v1220 = vpack.c.b16 %v864, %v860
        %v1221 = vpack.c.b16 %v865, %v861
        %v1222 = vpack.c.b16 %v866, %v862
        %v1223 = vpack.c.b16 %v871, %v867
        %v1224 = vpack.c.b16 %v872, %v868
        %v1225 = vpack.c.b16 %v873, %v869
        %v1226 = vpack.c.b16 %v874, %v870
        %v1227 = vpack.c.b16 %v879, %v875
        %v1228 = vpack.c.b16 %v880, %v876
        %v1229 = vpack.c.b16 %v881, %v877
        %v1230 = vpack.c.b16 %v882, %v878
        %v1231 = vpack.c.b16 %v887, %v883
        %v1232 = vpack.c.b16 %v888, %v884
        %v1233 = vpack.c.b16 %v889, %v885
        %v1234 = vpack.c.b16 %v890, %v886
        %v1235 = vpack.c.b16 %v895, %v891
        %v1236 = vpack.c.b16 %v896, %v892
        %v1237 = vpack.c.b16 %v897, %v893
        %v1238 = vpack.c.b16 %v898, %v894
        %v1239 = vpack.c.b16 %v903, %v899
        %v1240 = vpack.c.b16 %v904, %v900
        %v1241 = vpack.c.b16 %v905, %v901
        %v1242 = vpack.c.b16 %v906, %v902
        %v1243 = vpack.c.b16 %v911, %v907
        %v1244 = vpack.c.b16 %v912, %v908
        %v1245 = vpack.c.b16 %v913, %v909
        %v1246 = vpack.c.b16 %v914, %v910
        %v1247 = vpack.c.b16 %v919, %v915
        %v1248 = vpack.c.b16 %v920, %v916
        %v1249 = vpack.c.b16 %v921, %v917
        %v1250 = vpack.c.b16 %v922, %v918
        %v1251 = vpack.c.b16 %v927, %v923
        %v1252 = vpack.c.b16 %v928, %v924
        %v1253 = vpack.c.b16 %v929, %v925
        %v1254 = vpack.c.b16 %v930, %v926
        %v1255 = vpack.c.b16 %v935, %v931
        %v1256 = vpack.c.b16 %v936, %v932
        %v1257 = vpack.c.b16 %v937, %v933
        %v1258 = vpack.c.b16 %v938, %v934
        %v1259 = vpack.c.b16 %v943, %v939
        %v1260 = vpack.c.b16 %v944, %v940
        %v1261 = vpack.c.b16 %v945, %v941
        %v1262 = vpack.c.b16 %v946, %v942
        %v1263 = vpack.c.b16 %v951, %v947
        %v1264 = vpack.c.b16 %v952, %v948
        %v1265 = vpack.c.b16 %v953, %v949
        %v1266 = vpack.c.b16 %v954, %v950
        %v1267 = vpack.c.b16 %v959, %v955
        %v1268 = vpack.c.b16 %v960, %v956
        %v1269 = vpack.c.b16 %v961, %v957
        %v1270 = vpack.c.b16 %v962, %v958
        %v1271 = vpack.c.b16 %v967, %v963
        %v1272 = vpack.c.b16 %v968, %v964
        %v1273 = vpack.c.b16 %v969, %v965
        %v1274 = vpack.c.b16 %v970, %v966
        %v1275 = vpack.c.b16 %v975, %v971
        %v1276 = vpack.c.b16 %v976, %v972
        %v1277 = vpack.c.b16 %v977, %v973
        %v1278 = vpack.c.b16 %v978, %v974
        %v1279 = vpack.c.b16 %v983, %v979
        %v1280 = vpack.c.b16 %v984, %v980
        %v1281 = vpack.c.b16 %v985, %v981
        %v1282 = vpack.c.b16 %v986, %v982
        %v1283 = vpack.c.b16 %v991, %v987
        %v1284 = vpack.c.b16 %v992, %v988
        %v1285 = vpack.c.b16 %v993, %v989
        %v1286 = vpack.c.b16 %v994, %v990
        %v1287 = vpack.c.b16 %v999, %v995
        %v1288 = vpack.c.b16 %v1000, %v996
        %v1289 = vpack.c.b16 %v1001, %v997
        %v1290 = vpack.c.b16 %v1002, %v998
        %v1291 = vpack.c.b16 %v1007, %v1003
        %v1292 = vpack.c.b16 %v1008, %v1004
        %v1293 = vpack.c.b16 %v1009, %v1005
        %v1294 = vpack.c.b16 %v1010, %v1006
        %v1295 = vpack.c.b16 %v1015, %v1011
        %v1296 = vpack.c.b16 %v1016, %v1012
        %v1297 = vpack.c.b16 %v1017, %v1013
        %v1298 = vpack.c.b16 %v1018, %v1014
        %v1299 = vpack.c.b16 %v1023, %v1019
        %v1300 = vpack.c.b16 %v1024, %v1020
        %v1301 = vpack.c.b16 %v1025, %v1021
        %v1302 = vpack.c.b16 %v1026, %v1022
        %v1303 = vpack.c.b16 %v1031, %v1027
        %v1304 = vpack.c.b16 %v1032, %v1028
        %v1305 = vpack.c.b16 %v1033, %v1029
        %v1306 = vpack.c.b16 %v1034, %v1030
        %v1307 = vpack.c.b16 %v1039, %v1035
        %v1308 = vpack.c.b16 %v1040, %v1036
        %v1309 = vpack.c.b16 %v1041, %v1037
        %v1310 = vpack.c.b16 %v1042, %v1038
        %v1311 = vpack.c.b16 %v1047, %v1043
        %v1312 = vpack.c.b16 %v1048, %v1044
        %v1313 = vpack.c.b16 %v1049, %v1045
        %v1314 = vpack.c.b16 %v1050, %v1046
        %v1315 = vpack.c.b16 %v1055, %v1051
        %v1316 = vpack.c.b16 %v1056, %v1052
        %v1317 = vpack.c.b16 %v1057, %v1053
        %v1318 = vpack.c.b16 %v1058, %v1054
        %v1319 = vpack.c.b16 %v1063, %v1059
        %v1320 = vpack.c.b16 %v1064, %v1060
        %v1321 = vpack.c.b16 %v1065, %v1061
        %v1322 = vpack.c.b16 %v1066, %v1062
        %v1323 = vpack.c.b16 %v1071, %v1067
        %v1324 = vpack.c.b16 %v1072, %v1068
        %v1325 = vpack.c.b16 %v1073, %v1069
        %v1326 = vpack.c.b16 %v1074, %v1070
        %v1327 = vpack.c.b16 %v1079, %v1075
        %v1328 = vpack.c.b16 %v1080, %v1076
        %v1329 = vpack.c.b16 %v1081, %v1077
        %v1330 = vpack.c.b16 %v1082, %v1078
        %v1331 = vpack.c.b16 %v1087, %v1083
        %v1332 = vpack.c.b16 %v1088, %v1084
        %v1333 = vpack.c.b16 %v1089, %v1085
        %v1334 = vpack.c.b16 %v1090, %v1086
        %v1335 = vpack.c.b16 %v1095, %v1091
        %v1336 = vpack.c.b16 %v1096, %v1092
        %v1337 = vpack.c.b16 %v1097, %v1093
        %v1338 = vpack.c.b16 %v1098, %v1094
        %v1339 = vpack.c.b16 %v1103, %v1099
        %v1340 = vpack.c.b16 %v1104, %v1100
        %v1341 = vpack.c.b16 %v1105, %v1101
        %v1342 = vpack.c.b16 %v1106, %v1102
        %v1343 = vpack.c.b16 %v1111, %v1107
        %v1344 = vpack.c.b16 %v1112, %v1108
        %v1345 = vpack.c.b16 %v1113, %v1109
        %v1346 = vpack.c.b16 %v1114, %v1110
        %v1347 = vpack.c.b16 %v1119, %v1115
        %v1348 = vpack.c.b16 %v1120, %v1116
        %v1349 = vpack.c.b16 %v1121, %v1117
        %v1350 = vpack.c.b16 %v1122, %v1118
        %v1351 = vpack.c.b16 %v1127, %v1123
        %v1352 = vpack.c.b16 %v1128, %v1124
        %v1353 = vpack.c.b16 %v1129, %v1125
        %v1354 = vpack.c.b16 %v1130, %v1126
        %v1355 = vpack.c.b16 %v1135, %v1131
        %v1356 = vpack.c.b16 %v1136, %v1132
        %v1357 = vpack.c.b16 %v1137, %v1133
        %v1358 = vpack.c.b16 %v1138, %v1134
        %v1359 = vpack.c.b16 %v1143, %v1139
        %v1360 = vpack.c.b16 %v1144, %v1140
        %v1361 = vpack.c.b16 %v1145, %v1141
        %v1362 = vpack.c.b16 %v1146, %v1142
        %v1363 = vpack.c.b16 %v1151, %v1147
        %v1364 = vpack.c.b16 %v1152, %v1148
        %v1365 = vpack.c.b16 %v1153, %v1149
        %v1366 = vpack.c.b16 %v1154, %v1150
        %v1367 = vpack.c.b16 %v1159, %v1155
        %v1368 = vpack.c.b16 %v1160, %v1156
        %v1369 = vpack.c.b16 %v1161, %v1157
        %v1370 = vpack.c.b16 %v1162, %v1158
        %v1371 = vpack.c.b16 %v1167, %v1163
        %v1372 = vpack.c.b16 %v1168, %v1164
        %v1373 = vpack.c.b16 %v1169, %v1165
        %v1374 = vpack.c.b16 %v1170, %v1166
        %v1375 = vpack.c.b16 %v1175, %v1171
        %v1376 = vpack.c.b16 %v1176, %v1172
        %v1377 = vpack.c.b16 %v1177, %v1173
        %v1378 = vpack.c.b16 %v1178, %v1174
        %v1379 = vpack.c.b16 %v1183, %v1179
        %v1380 = vpack.c.b16 %v1184, %v1180
        %v1381 = vpack.c.b16 %v1185, %v1181
        %v1382 = vpack.c.b16 %v1186, %v1182
        %v1383 = vpack.c.b16 %v1191, %v1187
        %v1384 = vpack.c.b16 %v1192, %v1188
        %v1385 = vpack.c.b16 %v1193, %v1189
        %v1386 = vpack.c.b16 %v1194, %v1190
        %1579 = vmatprep.subr.bf16.mxu0 %v1196
        %1580 = vmatpush1.bf16.msra.mxu0 %v1195
        %1581 = vmatprep.subr.bf16.mxu0 %v1200
        %1582 = vmatpush1.bf16.msra.mxu0 %v1199
        %1583 = vmatprep.subr.bf16.mxu0 %v1204
        %1584 = vmatpush1.bf16.msra.mxu0 %v1203
        %1585 = vmatprep.subr.bf16.mxu0 %v1208
        %1586 = vmatpush1.bf16.msra.mxu0 %v1207
        %1587 = vmatprep.subr.bf16.mxu0 %v1212
        %1588 = vmatpush1.bf16.msra.mxu0 %v1211
        %1589 = vmatprep.subr.bf16.mxu0 %v1216
        %1590 = vmatpush1.bf16.msra.mxu0 %v1215
        %1591 = vmatprep.subr.bf16.mxu0 %v1220
        %1592 = vmatpush1.bf16.msra.mxu0 %v1219
        %1593 = vmatprep.subr.bf16.mxu0 %v1224
        %1594 = vmatpush1.bf16.msra.mxu0 %v1223
        %1595 = vmatprep.subr.bf16.mxu0 %v1228
        %1596 = vmatpush1.bf16.msra.mxu0 %v1227
        %1597 = vmatprep.subr.bf16.mxu0 %v1232
        %1598 = vmatpush1.bf16.msra.mxu0 %v1231
        %1599 = vmatprep.subr.bf16.mxu0 %v1236
        %1600 = vmatpush1.bf16.msra.mxu0 %v1235
        %1601 = vmatprep.subr.bf16.mxu0 %v1240
        %1602 = vmatpush1.bf16.msra.mxu0 %v1239
        %1603 = vmatprep.subr.bf16.mxu0 %v1244
        %1604 = vmatpush1.bf16.msra.mxu0 %v1243
        %1605 = vmatprep.subr.bf16.mxu0 %v1248
        %1606 = vmatpush1.bf16.msra.mxu0 %v1247
        %1607 = vmatprep.subr.bf16.mxu0 %v1252
        %1608 = vmatpush1.bf16.msra.mxu0 %v1251
        %1609 = vmatprep.subr.bf16.mxu0 %v1256
        %1610 = vmatpush1.bf16.msra.mxu0 %v1255
        %1611 = vmatprep.mubr.bf16.mxu0 %v400
        %1612 = vmatmul.mubr.bf16.gmra.mrb[0].mxu0 %v399
        %v1613 = vpop.f32.mrb[0].mxu0
        %v1614 = vadd.f32 %v602, %v1613
        %v1615 = vpop.f32.mrb[0].mxu0
        %v1616 = vadd.f32 %v606, %v1615
        %v1617 = vpop.f32.mrb[0].mxu0
        %v1618 = vpop.f32.mrb[0].mxu0
        %1619 = vdwg.mxu0
        %1620 = vmatprep.subr.bf16.mxu0 %v1260
        %1621 = vmatpush1.bf16.msra.mxu0 %v1259
        %1622 = vmatprep.subr.bf16.mxu0 %v1264
        %1623 = vmatpush1.bf16.msra.mxu0 %v1263
        %1624 = vmatprep.subr.bf16.mxu0 %v1268
        %1625 = vmatpush1.bf16.msra.mxu0 %v1267
        %1626 = vmatprep.subr.bf16.mxu0 %v1272
        %1627 = vmatpush1.bf16.msra.mxu0 %v1271
        %1628 = vmatprep.subr.bf16.mxu0 %v1276
        %1629 = vmatpush1.bf16.msra.mxu0 %v1275
        %1630 = vmatprep.subr.bf16.mxu0 %v1280
        %1631 = vmatpush1.bf16.msra.mxu0 %v1279
        %1632 = vmatprep.subr.bf16.mxu0 %v1284
        %1633 = vmatpush1.bf16.msra.mxu0 %v1283
        %1634 = vmatprep.subr.bf16.mxu0 %v1288
        %1635 = vmatpush1.bf16.msra.mxu0 %v1287
        %1636 = vmatprep.subr.bf16.mxu0 %v1292
        %1637 = vmatpush1.bf16.msra.mxu0 %v1291
        %1638 = vmatprep.subr.bf16.mxu0 %v1296
        %1639 = vmatpush1.bf16.msra.mxu0 %v1295
        %1640 = vmatprep.subr.bf16.mxu0 %v1300
        %1641 = vmatpush1.bf16.msra.mxu0 %v1299
        %1642 = vmatprep.subr.bf16.mxu0 %v1304
        %1643 = vmatpush1.bf16.msra.mxu0 %v1303
        %1644 = vmatprep.subr.bf16.mxu0 %v1308
        %1645 = vmatpush1.bf16.msra.mxu0 %v1307
        %1646 = vmatprep.subr.bf16.mxu0 %v1312
        %1647 = vmatpush1.bf16.msra.mxu0 %v1311
        %1648 = vmatprep.subr.bf16.mxu0 %v1316
        %1649 = vmatpush1.bf16.msra.mxu0 %v1315
        %1650 = vmatprep.subr.bf16.mxu0 %v1320
        %1651 = vmatpush1.bf16.msra.mxu0 %v1319
        %1652 = vmatprep.mubr.bf16.mxu0 %v402
        %1653 = vmatmul.mubr.bf16.gmra.mrb[0].mxu0 %v401
        %v1654 = vpop.f32.mrb[0].mxu0
        %v1655 = vadd.f32 %v1614, %v1654
        %v1656 = vpop.f32.mrb[0].mxu0
        %v1657 = vadd.f32 %v1616, %v1656
        %v1658 = vpop.f32.mrb[0].mxu0
        %v1659 = vpop.f32.mrb[0].mxu0
        %1660 = vdwg.mxu0
        %1661 = vmatprep.subr.bf16.mxu0 %v1324
        %1662 = vmatpush1.bf16.msra.mxu0 %v1323
        %1663 = vmatprep.subr.bf16.mxu0 %v1328
        %1664 = vmatpush1.bf16.msra.mxu0 %v1327
        %1665 = vmatprep.subr.bf16.mxu0 %v1332
        %1666 = vmatpush1.bf16.msra.mxu0 %v1331
        %1667 = vmatprep.subr.bf16.mxu0 %v1336
        %1668 = vmatpush1.bf16.msra.mxu0 %v1335
        %1669 = vmatprep.subr.bf16.mxu0 %v1340
        %1670 = vmatpush1.bf16.msra.mxu0 %v1339
        %1671 = vmatprep.subr.bf16.mxu0 %v1344
        %1672 = vmatpush1.bf16.msra.mxu0 %v1343
        %1673 = vmatprep.subr.bf16.mxu0 %v1348
        %1674 = vmatpush1.bf16.msra.mxu0 %v1347
        %1675 = vmatprep.subr.bf16.mxu0 %v1352
        %1676 = vmatpush1.bf16.msra.mxu0 %v1351
        %1677 = vmatprep.subr.bf16.mxu0 %v1356
        %1678 = vmatpush1.bf16.msra.mxu0 %v1355
        %1679 = vmatprep.subr.bf16.mxu0 %v1360
        %1680 = vmatpush1.bf16.msra.mxu0 %v1359
        %1681 = vmatprep.subr.bf16.mxu0 %v1364
        %1682 = vmatpush1.bf16.msra.mxu0 %v1363
        %1683 = vmatprep.subr.bf16.mxu0 %v1368
        %1684 = vmatpush1.bf16.msra.mxu0 %v1367
        %1685 = vmatprep.subr.bf16.mxu0 %v1372
        %1686 = vmatpush1.bf16.msra.mxu0 %v1371
        %1687 = vmatprep.subr.bf16.mxu0 %v1376
        %1688 = vmatpush1.bf16.msra.mxu0 %v1375
        %1689 = vmatprep.subr.bf16.mxu0 %v1380
        %1690 = vmatpush1.bf16.msra.mxu0 %v1379
        %1691 = vmatprep.subr.bf16.mxu0 %v1384
        %1692 = vmatpush1.bf16.msra.mxu0 %v1383
        %1693 = vmatprep.mubr.bf16.mxu0 %v404
        %1694 = vmatmul.mubr.bf16.gmra.mrb[0].mxu0 %v403
        %v1695 = vpop.f32.mrb[0].mxu0
        %v1696 = vadd.f32 %v1655, %v1695
        %v1697 = vpop.f32.mrb[0].mxu0
        %v1698 = vadd.f32 %v1657, %v1697
        %v1699 = vpop.f32.mrb[0].mxu0
        %v1700 = vpop.f32.mrb[0].mxu0
        %1701 = vdwg.mxu0
        %1702 = vmatprep.subr.bf16.mxu0 %v1198
        %1703 = vmatpush1.bf16.msra.mxu0 %v1197
        %1704 = vmatprep.subr.bf16.mxu0 %v1202
        %1705 = vmatpush1.bf16.msra.mxu0 %v1201
        %1706 = vmatprep.subr.bf16.mxu0 %v1206
        %1707 = vmatpush1.bf16.msra.mxu0 %v1205
        %1708 = vmatprep.subr.bf16.mxu0 %v1210
        %1709 = vmatpush1.bf16.msra.mxu0 %v1209
        %1710 = vmatprep.subr.bf16.mxu0 %v1214
        %1711 = vmatpush1.bf16.msra.mxu0 %v1213
        %1712 = vmatprep.subr.bf16.mxu0 %v1218
        %1713 = vmatpush1.bf16.msra.mxu0 %v1217
        %1714 = vmatprep.subr.bf16.mxu0 %v1222
        %1715 = vmatpush1.bf16.msra.mxu0 %v1221
        %1716 = vmatprep.subr.bf16.mxu0 %v1226
        %1717 = vmatpush1.bf16.msra.mxu0 %v1225
        %1718 = vmatprep.subr.bf16.mxu0 %v1230
        %1719 = vmatpush1.bf16.msra.mxu0 %v1229
        %1720 = vmatprep.subr.bf16.mxu0 %v1234
        %1721 = vmatpush1.bf16.msra.mxu0 %v1233
        %1722 = vmatprep.subr.bf16.mxu0 %v1238
        %1723 = vmatpush1.bf16.msra.mxu0 %v1237
        %1724 = vmatprep.subr.bf16.mxu0 %v1242
        %1725 = vmatpush1.bf16.msra.mxu0 %v1241
        %1726 = vmatprep.subr.bf16.mxu0 %v1246
        %1727 = vmatpush1.bf16.msra.mxu0 %v1245
        %1728 = vmatprep.subr.bf16.mxu0 %v1250
        %1729 = vmatpush1.bf16.msra.mxu0 %v1249
        %1730 = vmatprep.subr.bf16.mxu0 %v1254
        %1731 = vmatpush1.bf16.msra.mxu0 %v1253
        %1732 = vmatprep.subr.bf16.mxu0 %v1258
        %1733 = vmatpush1.bf16.msra.mxu0 %v1257
        %1734 = vmatprep.mubr.bf16.mxu0 %v400
        %1735 = vmatmul.mubr.bf16.gmra.mrb[0].mxu0 %v399
        %v1736 = vpop.f32.mrb[0].mxu0
        %v1737 = vadd.f32 %v610, %v1736
        %v1738 = vpop.f32.mrb[0].mxu0
        %v1739 = vadd.f32 %v614, %v1738
        %v1740 = vpop.f32.mrb[0].mxu0
        %v1741 = vpop.f32.mrb[0].mxu0
        %1742 = vdwg.mxu0
        %1743 = vmatprep.subr.bf16.mxu0 %v1262
        %1744 = vmatpush1.bf16.msra.mxu0 %v1261
        %1745 = vmatprep.subr.bf16.mxu0 %v1266
        %1746 = vmatpush1.bf16.msra.mxu0 %v1265
        %1747 = vmatprep.subr.bf16.mxu0 %v1270
        %1748 = vmatpush1.bf16.msra.mxu0 %v1269
        %1749 = vmatprep.subr.bf16.mxu0 %v1274
        %1750 = vmatpush1.bf16.msra.mxu0 %v1273
        %1751 = vmatprep.subr.bf16.mxu0 %v1278
        %1752 = vmatpush1.bf16.msra.mxu0 %v1277
        %1753 = vmatprep.subr.bf16.mxu0 %v1282
        %1754 = vmatpush1.bf16.msra.mxu0 %v1281
        %1755 = vmatprep.subr.bf16.mxu0 %v1286
        %1756 = vmatpush1.bf16.msra.mxu0 %v1285
        %1757 = vmatprep.subr.bf16.mxu0 %v1290
        %1758 = vmatpush1.bf16.msra.mxu0 %v1289
        %1759 = vmatprep.subr.bf16.mxu0 %v1294
        %1760 = vmatpush1.bf16.msra.mxu0 %v1293
        %1761 = vmatprep.subr.bf16.mxu0 %v1298
        %1762 = vmatpush1.bf16.msra.mxu0 %v1297
        %1763 = vmatprep.subr.bf16.mxu0 %v1302
        %1764 = vmatpush1.bf16.msra.mxu0 %v1301
        %1765 = vmatprep.subr.bf16.mxu0 %v1306
        %1766 = vmatpush1.bf16.msra.mxu0 %v1305
        %1767 = vmatprep.subr.bf16.mxu0 %v1310
        %1768 = vmatpush1.bf16.msra.mxu0 %v1309
        %1769 = vmatprep.subr.bf16.mxu0 %v1314
        %1770 = vmatpush1.bf16.msra.mxu0 %v1313
        %1771 = vmatprep.subr.bf16.mxu0 %v1318
        %1772 = vmatpush1.bf16.msra.mxu0 %v1317
        %1773 = vmatprep.subr.bf16.mxu0 %v1322
        %1774 = vmatpush1.bf16.msra.mxu0 %v1321
        %1775 = vmatprep.mubr.bf16.mxu0 %v402
        %1776 = vmatmul.mubr.bf16.gmra.mrb[0].mxu0 %v401
        %v1777 = vpop.f32.mrb[0].mxu0
        %v1778 = vadd.f32 %v1737, %v1777
        %v1779 = vpop.f32.mrb[0].mxu0
        %v1780 = vadd.f32 %v1739, %v1779
        %v1781 = vpop.f32.mrb[0].mxu0
        %v1782 = vpop.f32.mrb[0].mxu0
        %1783 = vdwg.mxu0
        %1784 = vmatprep.subr.bf16.mxu0 %v1326
        %1785 = vmatpush1.bf16.msra.mxu0 %v1325
        %1786 = vmatprep.subr.bf16.mxu0 %v1330
        %1787 = vmatpush1.bf16.msra.mxu0 %v1329
        %1788 = vmatprep.subr.bf16.mxu0 %v1334
        %1789 = vmatpush1.bf16.msra.mxu0 %v1333
        %1790 = vmatprep.subr.bf16.mxu0 %v1338
        %1791 = vmatpush1.bf16.msra.mxu0 %v1337
        %1792 = vmatprep.subr.bf16.mxu0 %v1342
        %1793 = vmatpush1.bf16.msra.mxu0 %v1341
        %1794 = vmatprep.subr.bf16.mxu0 %v1346
        %1795 = vmatpush1.bf16.msra.mxu0 %v1345
        %1796 = vmatprep.subr.bf16.mxu0 %v1350
        %1797 = vmatpush1.bf16.msra.mxu0 %v1349
        %1798 = vmatprep.subr.bf16.mxu0 %v1354
        %1799 = vmatpush1.bf16.msra.mxu0 %v1353
        %1800 = vmatprep.subr.bf16.mxu0 %v1358
        %1801 = vmatpush1.bf16.msra.mxu0 %v1357
        %1802 = vmatprep.subr.bf16.mxu0 %v1362
        %1803 = vmatpush1.bf16.msra.mxu0 %v1361
        %1804 = vmatprep.subr.bf16.mxu0 %v1366
        %1805 = vmatpush1.bf16.msra.mxu0 %v1365
        %1806 = vmatprep.subr.bf16.mxu0 %v1370
        %1807 = vmatpush1.bf16.msra.mxu0 %v1369
        %1808 = vmatprep.subr.bf16.mxu0 %v1374
        %1809 = vmatpush1.bf16.msra.mxu0 %v1373
        %1810 = vmatprep.subr.bf16.mxu0 %v1378
        %1811 = vmatpush1.bf16.msra.mxu0 %v1377
        %1812 = vmatprep.subr.bf16.mxu0 %v1382
        %1813 = vmatpush1.bf16.msra.mxu0 %v1381
        %1814 = vmatprep.subr.bf16.mxu0 %v1386
        %1815 = vmatpush1.bf16.msra.mxu0 %v1385
        %1816 = vmatprep.mubr.bf16.mxu0 %v404
        %1817 = vmatmul.mubr.bf16.gmra.mrb[0].mxu0 %v403
        %v1818 = vpop.f32.mrb[0].mxu0
        %v1819 = vadd.f32 %v1778, %v1818
        %v1820 = vpop.f32.mrb[0].mxu0
        %v1821 = vadd.f32 %v1780, %v1820
        %v1822 = vpop.f32.mrb[0].mxu0
        %v1823 = vpop.f32.mrb[0].mxu0
        %1824 = vdwg.mxu0
        %v1825 = vmax.f32 %v1696, 0.0
        %v1826 = vmax.f32 %v1698, 0.0
        %v1827 = vmax.f32 %v1819, 0.0
        %v1828 = vmax.f32 %v1821, 0.0
        %v1829 = vpack.c.bf16 %v1825, %v1825
        %v1830 = vpack.c.bf16 %v1826, %v1826
        %v1831 = vpack.c.bf16 %v1827, %v1827
        %v1832 = vpack.c.bf16 %v1828, %v1828
        %v1833 = vld [vmem:[%s3] sm:$0xff]
        %v1834 = vld [vmem:[%s3 + $0x8] sm:$0xff]
        %v1835 = vld [vmem:[%s3 + $0x10] sm:$0xff]
        %v1836 = vld [vmem:[%s3 + $0x18] sm:$0xff]
        %v1837 = vld [vmem:[%s3 + $0x20] sm:$0xff]
        %v1838 = vld [vmem:[%s3 + $0x28] sm:$0xff]
        %v1839 = vld [vmem:[%s3 + $0x30] sm:$0xff]
        %v1840 = vld [vmem:[%s3 + $0x38] sm:$0xff]
        %v1841 = vld [vmem:[%s3 + $0x40] sm:$0xff]
        %v1842 = vld [vmem:[%s3 + $0x48] sm:$0xff]
        %v1843 = vld [vmem:[%s3 + $0x50] sm:$0xff]
        %v1844 = vld [vmem:[%s3 + $0x58] sm:$0xff]
        %v1845 = vld [vmem:[%s3 + $0x60] sm:$0xff]
        %v1846 = vld [vmem:[%s3 + $0x68] sm:$0xff]
        %v1847 = vld [vmem:[%s3 + $0x70] sm:$0xff]
        %v1848 = vld [vmem:[%s3 + $0x78] sm:$0xff]
        %v1849 = vld [vmem:[%s3 + $0x80] sm:$0xff]
        %v1850 = vld [vmem:[%s3 + $0x88] sm:$0xff]
        %v1851 = vld [vmem:[%s3 + $0x90] sm:$0xff]
        %v1852 = vld [vmem:[%s3 + $0x98] sm:$0xff]
        %v1853 = vld [vmem:[%s3 + $0xa0] sm:$0xff]
        %v1854 = vld [vmem:[%s3 + $0xa8] sm:$0xff]
        %v1855 = vld [vmem:[%s3 + $0xb0] sm:$0xff]
        %v1856 = vld [vmem:[%s3 + $0xb8] sm:$0xff]
        %v1857 = vld [vmem:[%s3 + $0xc0] sm:$0xff]
        %v1858 = vld [vmem:[%s3 + $0xc8] sm:$0xff]
        %v1859 = vld [vmem:[%s3 + $0xd0] sm:$0xff]
        %v1860 = vld [vmem:[%s3 + $0xd8] sm:$0xff]
        %v1861 = vld [vmem:[%s3 + $0xe0] sm:$0xff]
        %v1862 = vld [vmem:[%s3 + $0xe8] sm:$0xff]
        %v1863 = vld [vmem:[%s3 + $0xf0] sm:$0xff]
        %v1864 = vld [vmem:[%s3 + $0xf8] sm:$0xff]
        %v1865 = vld [vmem:[%s3 + $0x100] sm:$0xff]
        %v1866 = vld [vmem:[%s3 + $0x108] sm:$0xff]
        %v1867 = vld [vmem:[%s3 + $0x110] sm:$0xff]
        %v1868 = vld [vmem:[%s3 + $0x118] sm:$0xff]
        %v1869 = vld [vmem:[%s3 + $0x120] sm:$0xff]
        %v1870 = vld [vmem:[%s3 + $0x128] sm:$0xff]
        %v1871 = vld [vmem:[%s3 + $0x130] sm:$0xff]
        %v1872 = vld [vmem:[%s3 + $0x138] sm:$0xff]
        %v1873 = vld [vmem:[%s3 + $0x140] sm:$0xff]
        %v1874 = vld [vmem:[%s3 + $0x148] sm:$0xff]
        %v1875 = vld [vmem:[%s3 + $0x150] sm:$0xff]
        %v1876 = vld [vmem:[%s3 + $0x158] sm:$0xff]
        %v1877 = vld [vmem:[%s3 + $0x160] sm:$0xff]
        %v1878 = vld [vmem:[%s3 + $0x168] sm:$0xff]
        %v1879 = vld [vmem:[%s3 + $0x170] sm:$0xff]
        %v1880 = vld [vmem:[%s3 + $0x178] sm:$0xff]
        %v1881 = vld [vmem:[%s3 + $0x180] sm:$0xff]
        %v1882 = vld [vmem:[%s3 + $0x188] sm:$0xff]
        %v1883 = vld [vmem:[%s3 + $0x190] sm:$0xff]
        %v1884 = vld [vmem:[%s3 + $0x198] sm:$0xff]
        %v1885 = vld [vmem:[%s3 + $0x1a0] sm:$0xff]
        %v1886 = vld [vmem:[%s3 + $0x1a8] sm:$0xff]
        %v1887 = vld [vmem:[%s3 + $0x1b0] sm:$0xff]
        %v1888 = vld [vmem:[%s3 + $0x1b8] sm:$0xff]
        %v1889 = vld [vmem:[%s3 + $0x1c0] sm:$0xff]
        %v1890 = vld [vmem:[%s3 + $0x1c8] sm:$0xff]
        %v1891 = vld [vmem:[%s3 + $0x1d0] sm:$0xff]
        %v1892 = vld [vmem:[%s3 + $0x1d8] sm:$0xff]
        %v1893 = vld [vmem:[%s3 + $0x1e0] sm:$0xff]
        %v1894 = vld [vmem:[%s3 + $0x1e8] sm:$0xff]
        %v1895 = vld [vmem:[%s3 + $0x1f0] sm:$0xff]
        %v1896 = vld [vmem:[%s3 + $0x1f8] sm:$0xff]
        %s1897 = scalar_lea.vmem [#allocation6], 1
        %v1898 = vld [vmem:[%s1897] ss:$8 sm:$0x3]
        %v1900 = vlaneseq
        %v1901 = vshrl.u32 %v1900, 7
        %v1902 = vsub.s32 0, %v1901
        %v1903 = vrot.slane %v1898, %v1902
        %v1904 = vlaneseq
        %v1905 = vshrl.u32 %v1904, 7
        %v1906 = vsub.s32 1, %v1905
        %v1907 = vrot.slane %v1898, %v1906
        %v1974 = vunpack.c.l.b16 %v1833
        %v1975 = vunpack.c.h.b16 %v1833
        %v1976 = vunpack.c.l.b16 %v1834
        %v1977 = vunpack.c.h.b16 %v1834
        %v1978 = vunpack.c.l.b16 %v1835
        %v1979 = vunpack.c.h.b16 %v1835
        %v1980 = vunpack.c.l.b16 %v1836
        %v1981 = vunpack.c.h.b16 %v1836
        %v1982 = vunpack.c.l.b16 %v1837
        %v1983 = vunpack.c.h.b16 %v1837
        %v1984 = vunpack.c.l.b16 %v1838
        %v1985 = vunpack.c.h.b16 %v1838
        %v1986 = vunpack.c.l.b16 %v1839
        %v1987 = vunpack.c.h.b16 %v1839
        %v1988 = vunpack.c.l.b16 %v1840
        %v1989 = vunpack.c.h.b16 %v1840
        %v1990 = vunpack.c.l.b16 %v1841
        %v1991 = vunpack.c.h.b16 %v1841
        %v1992 = vunpack.c.l.b16 %v1842
        %v1993 = vunpack.c.h.b16 %v1842
        %v1994 = vunpack.c.l.b16 %v1843
        %v1995 = vunpack.c.h.b16 %v1843
        %v1996 = vunpack.c.l.b16 %v1844
        %v1997 = vunpack.c.h.b16 %v1844
        %v1998 = vunpack.c.l.b16 %v1845
        %v1999 = vunpack.c.h.b16 %v1845
        %v2000 = vunpack.c.l.b16 %v1846
        %v2001 = vunpack.c.h.b16 %v1846
        %v2002 = vunpack.c.l.b16 %v1847
        %v2003 = vunpack.c.h.b16 %v1847
        %v2004 = vunpack.c.l.b16 %v1848
        %v2005 = vunpack.c.h.b16 %v1848
        %v2006 = vunpack.c.l.b16 %v1849
        %v2007 = vunpack.c.h.b16 %v1849
        %v2008 = vunpack.c.l.b16 %v1850
        %v2009 = vunpack.c.h.b16 %v1850
        %v2010 = vunpack.c.l.b16 %v1851
        %v2011 = vunpack.c.h.b16 %v1851
        %v2012 = vunpack.c.l.b16 %v1852
        %v2013 = vunpack.c.h.b16 %v1852
        %v2014 = vunpack.c.l.b16 %v1853
        %v2015 = vunpack.c.h.b16 %v1853
        %v2016 = vunpack.c.l.b16 %v1854
        %v2017 = vunpack.c.h.b16 %v1854
        %v2018 = vunpack.c.l.b16 %v1855
        %v2019 = vunpack.c.h.b16 %v1855
        %v2020 = vunpack.c.l.b16 %v1856
        %v2021 = vunpack.c.h.b16 %v1856
        %v2022 = vunpack.c.l.b16 %v1857
        %v2023 = vunpack.c.h.b16 %v1857
        %v2024 = vunpack.c.l.b16 %v1858
        %v2025 = vunpack.c.h.b16 %v1858
        %v2026 = vunpack.c.l.b16 %v1859
        %v2027 = vunpack.c.h.b16 %v1859
        %v2028 = vunpack.c.l.b16 %v1860
        %v2029 = vunpack.c.h.b16 %v1860
        %v2030 = vunpack.c.l.b16 %v1861
        %v2031 = vunpack.c.h.b16 %v1861
        %v2032 = vunpack.c.l.b16 %v1862
        %v2033 = vunpack.c.h.b16 %v1862
        %v2034 = vunpack.c.l.b16 %v1863
        %v2035 = vunpack.c.h.b16 %v1863
        %v2036 = vunpack.c.l.b16 %v1864
        %v2037 = vunpack.c.h.b16 %v1864
        %v2038 = vunpack.c.l.b16 %v1865
        %v2039 = vunpack.c.h.b16 %v1865
        %v2040 = vunpack.c.l.b16 %v1866
        %v2041 = vunpack.c.h.b16 %v1866
        %v2042 = vunpack.c.l.b16 %v1867
        %v2043 = vunpack.c.h.b16 %v1867
        %v2044 = vunpack.c.l.b16 %v1868
        %v2045 = vunpack.c.h.b16 %v1868
        %v2046 = vunpack.c.l.b16 %v1869
        %v2047 = vunpack.c.h.b16 %v1869
        %v2048 = vunpack.c.l.b16 %v1870
        %v2049 = vunpack.c.h.b16 %v1870
        %v2050 = vunpack.c.l.b16 %v1871
        %v2051 = vunpack.c.h.b16 %v1871
        %v2052 = vunpack.c.l.b16 %v1872
        %v2053 = vunpack.c.h.b16 %v1872
        %v2054 = vunpack.c.l.b16 %v1873
        %v2055 = vunpack.c.h.b16 %v1873
        %v2056 = vunpack.c.l.b16 %v1874
        %v2057 = vunpack.c.h.b16 %v1874
        %v2058 = vunpack.c.l.b16 %v1875
        %v2059 = vunpack.c.h.b16 %v1875
        %v2060 = vunpack.c.l.b16 %v1876
        %v2061 = vunpack.c.h.b16 %v1876
        %v2062 = vunpack.c.l.b16 %v1877
        %v2063 = vunpack.c.h.b16 %v1877
        %v2064 = vunpack.c.l.b16 %v1878
        %v2065 = vunpack.c.h.b16 %v1878
        %v2066 = vunpack.c.l.b16 %v1879
        %v2067 = vunpack.c.h.b16 %v1879
        %v2068 = vunpack.c.l.b16 %v1880
        %v2069 = vunpack.c.h.b16 %v1880
        %v2070 = vunpack.c.l.b16 %v1881
        %v2071 = vunpack.c.h.b16 %v1881
        %v2072 = vunpack.c.l.b16 %v1882
        %v2073 = vunpack.c.h.b16 %v1882
        %v2074 = vunpack.c.l.b16 %v1883
        %v2075 = vunpack.c.h.b16 %v1883
        %v2076 = vunpack.c.l.b16 %v1884
        %v2077 = vunpack.c.h.b16 %v1884
        %v2078 = vunpack.c.l.b16 %v1885
        %v2079 = vunpack.c.h.b16 %v1885
        %v2080 = vunpack.c.l.b16 %v1886
        %v2081 = vunpack.c.h.b16 %v1886
        %v2082 = vunpack.c.l.b16 %v1887
        %v2083 = vunpack.c.h.b16 %v1887
        %v2084 = vunpack.c.l.b16 %v1888
        %v2085 = vunpack.c.h.b16 %v1888
        %v2086 = vunpack.c.l.b16 %v1889
        %v2087 = vunpack.c.h.b16 %v1889
        %v2088 = vunpack.c.l.b16 %v1890
        %v2089 = vunpack.c.h.b16 %v1890
        %v2090 = vunpack.c.l.b16 %v1891
        %v2091 = vunpack.c.h.b16 %v1891
        %v2092 = vunpack.c.l.b16 %v1892
        %v2093 = vunpack.c.h.b16 %v1892
        %v2094 = vunpack.c.l.b16 %v1893
        %v2095 = vunpack.c.h.b16 %v1893
        %v2096 = vunpack.c.l.b16 %v1894
        %v2097 = vunpack.c.h.b16 %v1894
        %v2098 = vunpack.c.l.b16 %v1895
        %v2099 = vunpack.c.h.b16 %v1895
        %v2100 = vunpack.c.l.b16 %v1896
        %v2101 = vunpack.c.h.b16 %v1896
        %v2102 = vpack.c.b16 %v1976, %v1974
        %v2103 = vpack.c.b16 %v1977, %v1975
        %v2104 = vpack.c.b16 %v1980, %v1978
        %v2105 = vpack.c.b16 %v1981, %v1979
        %v2106 = vpack.c.b16 %v1984, %v1982
        %v2107 = vpack.c.b16 %v1985, %v1983
        %v2108 = vpack.c.b16 %v1988, %v1986
        %v2109 = vpack.c.b16 %v1989, %v1987
        %v2110 = vpack.c.b16 %v1992, %v1990
        %v2111 = vpack.c.b16 %v1993, %v1991
        %v2112 = vpack.c.b16 %v1996, %v1994
        %v2113 = vpack.c.b16 %v1997, %v1995
        %v2114 = vpack.c.b16 %v2000, %v1998
        %v2115 = vpack.c.b16 %v2001, %v1999
        %v2116 = vpack.c.b16 %v2004, %v2002
        %v2117 = vpack.c.b16 %v2005, %v2003
        %v2118 = vpack.c.b16 %v2008, %v2006
        %v2119 = vpack.c.b16 %v2009, %v2007
        %v2120 = vpack.c.b16 %v2012, %v2010
        %v2121 = vpack.c.b16 %v2013, %v2011
        %v2122 = vpack.c.b16 %v2016, %v2014
        %v2123 = vpack.c.b16 %v2017, %v2015
        %v2124 = vpack.c.b16 %v2020, %v2018
        %v2125 = vpack.c.b16 %v2021, %v2019
        %v2126 = vpack.c.b16 %v2024, %v2022
        %v2127 = vpack.c.b16 %v2025, %v2023
        %v2128 = vpack.c.b16 %v2028, %v2026
        %v2129 = vpack.c.b16 %v2029, %v2027
        %v2130 = vpack.c.b16 %v2032, %v2030
        %v2131 = vpack.c.b16 %v2033, %v2031
        %v2132 = vpack.c.b16 %v2036, %v2034
        %v2133 = vpack.c.b16 %v2037, %v2035
        %v2134 = vpack.c.b16 %v2040, %v2038
        %v2135 = vpack.c.b16 %v2041, %v2039
        %v2136 = vpack.c.b16 %v2044, %v2042
        %v2137 = vpack.c.b16 %v2045, %v2043
        %v2138 = vpack.c.b16 %v2048, %v2046
        %v2139 = vpack.c.b16 %v2049, %v2047
        %v2140 = vpack.c.b16 %v2052, %v2050
        %v2141 = vpack.c.b16 %v2053, %v2051
        %v2142 = vpack.c.b16 %v2056, %v2054
        %v2143 = vpack.c.b16 %v2057, %v2055
        %v2144 = vpack.c.b16 %v2060, %v2058
        %v2145 = vpack.c.b16 %v2061, %v2059
        %v2146 = vpack.c.b16 %v2064, %v2062
        %v2147 = vpack.c.b16 %v2065, %v2063
        %v2148 = vpack.c.b16 %v2068, %v2066
        %v2149 = vpack.c.b16 %v2069, %v2067
        %v2150 = vpack.c.b16 %v2072, %v2070
        %v2151 = vpack.c.b16 %v2073, %v2071
        %v2152 = vpack.c.b16 %v2076, %v2074
        %v2153 = vpack.c.b16 %v2077, %v2075
        %v2154 = vpack.c.b16 %v2080, %v2078
        %v2155 = vpack.c.b16 %v2081, %v2079
        %v2156 = vpack.c.b16 %v2084, %v2082
        %v2157 = vpack.c.b16 %v2085, %v2083
        %v2158 = vpack.c.b16 %v2088, %v2086
        %v2159 = vpack.c.b16 %v2089, %v2087
        %v2160 = vpack.c.b16 %v2092, %v2090
        %v2161 = vpack.c.b16 %v2093, %v2091
        %v2162 = vpack.c.b16 %v2096, %v2094
        %v2163 = vpack.c.b16 %v2097, %v2095
        %v2164 = vpack.c.b16 %v2100, %v2098
        %v2165 = vpack.c.b16 %v2101, %v2099
        %2230 = vmatprep.subr.bf16.mxu0 %v2103
        %2231 = vmatpush1.bf16.msra.mxu0 %v2102
        %2232 = vmatprep.subr.bf16.mxu0 %v2105
        %2233 = vmatpush1.bf16.msra.mxu0 %v2104
        %2234 = vmatprep.subr.bf16.mxu0 %v2107
        %2235 = vmatpush1.bf16.msra.mxu0 %v2106
        %2236 = vmatprep.subr.bf16.mxu0 %v2109
        %2237 = vmatpush1.bf16.msra.mxu0 %v2108
        %2238 = vmatprep.subr.bf16.mxu0 %v2111
        %2239 = vmatpush1.bf16.msra.mxu0 %v2110
        %2240 = vmatprep.subr.bf16.mxu0 %v2113
        %2241 = vmatpush1.bf16.msra.mxu0 %v2112
        %2242 = vmatprep.subr.bf16.mxu0 %v2115
        %2243 = vmatpush1.bf16.msra.mxu0 %v2114
        %2244 = vmatprep.subr.bf16.mxu0 %v2117
        %2245 = vmatpush1.bf16.msra.mxu0 %v2116
        %2246 = vmatprep.subr.bf16.mxu0 %v2119
        %2247 = vmatpush1.bf16.msra.mxu0 %v2118
        %2248 = vmatprep.subr.bf16.mxu0 %v2121
        %2249 = vmatpush1.bf16.msra.mxu0 %v2120
        %2250 = vmatprep.subr.bf16.mxu0 %v2123
        %2251 = vmatpush1.bf16.msra.mxu0 %v2122
        %2252 = vmatprep.subr.bf16.mxu0 %v2125
        %2253 = vmatpush1.bf16.msra.mxu0 %v2124
        %2254 = vmatprep.subr.bf16.mxu0 %v2127
        %2255 = vmatpush1.bf16.msra.mxu0 %v2126
        %2256 = vmatprep.subr.bf16.mxu0 %v2129
        %2257 = vmatpush1.bf16.msra.mxu0 %v2128
        %2258 = vmatprep.subr.bf16.mxu0 %v2131
        %2259 = vmatpush1.bf16.msra.mxu0 %v2130
        %2260 = vmatprep.subr.bf16.mxu0 %v2133
        %2261 = vmatpush1.bf16.msra.mxu0 %v2132
        %2262 = vmatprep.mubr.bf16.mxu0 %v1830
        %2263 = vmatmul.mubr.bf16.gmra.mrb[0].mxu0 %v1829
        %v2264 = vpop.f32.mrb[0].mxu0
        %v2265 = vadd.f32 %v1903, %v2264
        %v2266 = vpop.f32.mrb[0].mxu0
        %v2267 = vadd.f32 %v1907, %v2266
        %v2268 = vpop.f32.mrb[0].mxu0
        %v2269 = vpop.f32.mrb[0].mxu0
        %2270 = vdwg.mxu0
        %2271 = vmatprep.subr.bf16.mxu0 %v2135
        %2272 = vmatpush1.bf16.msra.mxu0 %v2134
        %2273 = vmatprep.subr.bf16.mxu0 %v2137
        %2274 = vmatpush1.bf16.msra.mxu0 %v2136
        %2275 = vmatprep.subr.bf16.mxu0 %v2139
        %2276 = vmatpush1.bf16.msra.mxu0 %v2138
        %2277 = vmatprep.subr.bf16.mxu0 %v2141
        %2278 = vmatpush1.bf16.msra.mxu0 %v2140
        %2279 = vmatprep.subr.bf16.mxu0 %v2143
        %2280 = vmatpush1.bf16.msra.mxu0 %v2142
        %2281 = vmatprep.subr.bf16.mxu0 %v2145
        %2282 = vmatpush1.bf16.msra.mxu0 %v2144
        %2283 = vmatprep.subr.bf16.mxu0 %v2147
        %2284 = vmatpush1.bf16.msra.mxu0 %v2146
        %2285 = vmatprep.subr.bf16.mxu0 %v2149
        %2286 = vmatpush1.bf16.msra.mxu0 %v2148
        %2287 = vmatprep.subr.bf16.mxu0 %v2151
        %2288 = vmatpush1.bf16.msra.mxu0 %v2150
        %2289 = vmatprep.subr.bf16.mxu0 %v2153
        %2290 = vmatpush1.bf16.msra.mxu0 %v2152
        %2291 = vmatprep.subr.bf16.mxu0 %v2155
        %2292 = vmatpush1.bf16.msra.mxu0 %v2154
        %2293 = vmatprep.subr.bf16.mxu0 %v2157
        %2294 = vmatpush1.bf16.msra.mxu0 %v2156
        %2295 = vmatprep.subr.bf16.mxu0 %v2159
        %2296 = vmatpush1.bf16.msra.mxu0 %v2158
        %2297 = vmatprep.subr.bf16.mxu0 %v2161
        %2298 = vmatpush1.bf16.msra.mxu0 %v2160
        %2299 = vmatprep.subr.bf16.mxu0 %v2163
        %2300 = vmatpush1.bf16.msra.mxu0 %v2162
        %2301 = vmatprep.subr.bf16.mxu0 %v2165
        %2302 = vmatpush1.bf16.msra.mxu0 %v2164
        %2303 = vmatprep.mubr.bf16.mxu0 %v1832
        %2304 = vmatmul.mubr.bf16.gmra.mrb[0].mxu0 %v1831
        %v2305 = vpop.f32.mrb[0].mxu0
        %v2306 = vadd.f32 %v2265, %v2305
        %v2307 = vpop.f32.mrb[0].mxu0
        %v2308 = vadd.f32 %v2267, %v2307
        %v2309 = vpop.f32.mrb[0].mxu0
        %v2310 = vpop.f32.mrb[0].mxu0
        %2311 = vdwg.mxu0
        %v2312 = vmax.f32 %v2306, 0.0
        %v2313 = vmax.f32 %v2308, 0.0
        %v2314 = vpack.c.bf16 %v2312, %v2312
        %v2315 = vpack.c.bf16 %v2313, %v2313
        %v2316 = vld [vmem:[%s4] sm:$0xf]
        %v2317 = vld [vmem:[%s4 + $0x4] sm:$0xf]
        %v2318 = vld [vmem:[%s4 + $0x8] sm:$0xf]
        %v2319 = vld [vmem:[%s4 + $0xc] sm:$0xf]
        %v2320 = vld [vmem:[%s4 + $0x10] sm:$0xf]
        %v2321 = vld [vmem:[%s4 + $0x14] sm:$0xf]
        %v2322 = vld [vmem:[%s4 + $0x18] sm:$0xf]
        %v2323 = vld [vmem:[%s4 + $0x1c] sm:$0xf]
        %v2324 = vld [vmem:[%s4 + $0x20] sm:$0xf]
        %v2325 = vld [vmem:[%s4 + $0x24] sm:$0xf]
        %v2326 = vld [vmem:[%s4 + $0x28] sm:$0xf]
        %v2327 = vld [vmem:[%s4 + $0x2c] sm:$0xf]
        %v2328 = vld [vmem:[%s4 + $0x30] sm:$0xf]
        %v2329 = vld [vmem:[%s4 + $0x34] sm:$0xf]
        %v2330 = vld [vmem:[%s4 + $0x38] sm:$0xf]
        %v2331 = vld [vmem:[%s4 + $0x3c] sm:$0xf]
        %v2332 = vld [vmem:[%s4 + $0x40] sm:$0xf]
        %v2333 = vld [vmem:[%s4 + $0x44] sm:$0xf]
        %v2334 = vld [vmem:[%s4 + $0x48] sm:$0xf]
        %v2335 = vld [vmem:[%s4 + $0x4c] sm:$0xf]
        %v2336 = vld [vmem:[%s4 + $0x50] sm:$0xf]
        %v2337 = vld [vmem:[%s4 + $0x54] sm:$0xf]
        %v2338 = vld [vmem:[%s4 + $0x58] sm:$0xf]
        %v2339 = vld [vmem:[%s4 + $0x5c] sm:$0xf]
        %v2340 = vld [vmem:[%s4 + $0x60] sm:$0xf]
        %v2341 = vld [vmem:[%s4 + $0x64] sm:$0xf]
        %v2342 = vld [vmem:[%s4 + $0x68] sm:$0xf]
        %v2343 = vld [vmem:[%s4 + $0x6c] sm:$0xf]
        %v2344 = vld [vmem:[%s4 + $0x70] sm:$0xf]
        %v2345 = vld [vmem:[%s4 + $0x74] sm:$0xf]
        %v2346 = vld [vmem:[%s4 + $0x78] sm:$0xf]
        %v2347 = vld [vmem:[%s4 + $0x7c] sm:$0xf]
        %v2348 = vld [vmem:[#allocation6 + $0x2] ss:$0 sm:$0xff]
        %v2381 = vunpack.c.l.b16 %v2316
        %v2382 = vunpack.c.l.b16 %v2317
        %v2383 = vunpack.c.l.b16 %v2318
        %v2384 = vunpack.c.l.b16 %v2319
        %v2385 = vunpack.c.l.b16 %v2320
        %v2386 = vunpack.c.l.b16 %v2321
        %v2387 = vunpack.c.l.b16 %v2322
        %v2388 = vunpack.c.l.b16 %v2323
        %v2389 = vunpack.c.l.b16 %v2324
        %v2390 = vunpack.c.l.b16 %v2325
        %v2391 = vunpack.c.l.b16 %v2326
        %v2392 = vunpack.c.l.b16 %v2327
        %v2393 = vunpack.c.l.b16 %v2328
        %v2394 = vunpack.c.l.b16 %v2329
        %v2395 = vunpack.c.l.b16 %v2330
        %v2396 = vunpack.c.l.b16 %v2331
        %v2397 = vunpack.c.l.b16 %v2332
        %v2398 = vunpack.c.l.b16 %v2333
        %v2399 = vunpack.c.l.b16 %v2334
        %v2400 = vunpack.c.l.b16 %v2335
        %v2401 = vunpack.c.l.b16 %v2336
        %v2402 = vunpack.c.l.b16 %v2337
        %v2403 = vunpack.c.l.b16 %v2338
        %v2404 = vunpack.c.l.b16 %v2339
        %v2405 = vunpack.c.l.b16 %v2340
        %v2406 = vunpack.c.l.b16 %v2341
        %v2407 = vunpack.c.l.b16 %v2342
        %v2408 = vunpack.c.l.b16 %v2343
        %v2409 = vunpack.c.l.b16 %v2344
        %v2410 = vunpack.c.l.b16 %v2345
        %v2411 = vunpack.c.l.b16 %v2346
        %v2412 = vunpack.c.l.b16 %v2347
        %v2413 = vpack.c.b16 %v2382, %v2381
        %v2414 = vpack.c.b16 %v2384, %v2383
        %v2415 = vpack.c.b16 %v2386, %v2385
        %v2416 = vpack.c.b16 %v2388, %v2387
        %v2417 = vpack.c.b16 %v2390, %v2389
        %v2418 = vpack.c.b16 %v2392, %v2391
        %v2419 = vpack.c.b16 %v2394, %v2393
        %v2420 = vpack.c.b16 %v2396, %v2395
        %v2421 = vpack.c.b16 %v2398, %v2397
        %v2422 = vpack.c.b16 %v2400, %v2399
        %v2423 = vpack.c.b16 %v2402, %v2401
        %v2424 = vpack.c.b16 %v2404, %v2403
        %v2425 = vpack.c.b16 %v2406, %v2405
        %v2426 = vpack.c.b16 %v2408, %v2407
        %v2427 = vpack.c.b16 %v2410, %v2409
        %v2428 = vpack.c.b16 %v2412, %v2411
        %2445 = vmatprep.subr.bf16.mxu0 0
        %2446 = vmatpush1.bf16.msra.mxu0 %v2413
        %2447 = vmatprep.subr.bf16.mxu0 0
        %2448 = vmatpush1.bf16.msra.mxu0 %v2414
        %2449 = vmatprep.subr.bf16.mxu0 0
        %2450 = vmatpush1.bf16.msra.mxu0 %v2415
        %2451 = vmatprep.subr.bf16.mxu0 0
        %2452 = vmatpush1.bf16.msra.mxu0 %v2416
        %2453 = vmatprep.subr.bf16.mxu0 0
        %2454 = vmatpush1.bf16.msra.mxu0 %v2417
        %2455 = vmatprep.subr.bf16.mxu0 0
        %2456 = vmatpush1.bf16.msra.mxu0 %v2418
        %2457 = vmatprep.subr.bf16.mxu0 0
        %2458 = vmatpush1.bf16.msra.mxu0 %v2419
        %2459 = vmatprep.subr.bf16.mxu0 0
        %2460 = vmatpush1.bf16.msra.mxu0 %v2420
        %2461 = vmatprep.subr.bf16.mxu0 0
        %2462 = vmatpush1.bf16.msra.mxu0 %v2421
        %2463 = vmatprep.subr.bf16.mxu0 0
        %2464 = vmatpush1.bf16.msra.mxu0 %v2422
        %2465 = vmatprep.subr.bf16.mxu0 0
        %2466 = vmatpush1.bf16.msra.mxu0 %v2423
        %2467 = vmatprep.subr.bf16.mxu0 0
        %2468 = vmatpush1.bf16.msra.mxu0 %v2424
        %2469 = vmatprep.subr.bf16.mxu0 0
        %2470 = vmatpush1.bf16.msra.mxu0 %v2425
        %2471 = vmatprep.subr.bf16.mxu0 0
        %2472 = vmatpush1.bf16.msra.mxu0 %v2426
        %2473 = vmatprep.subr.bf16.mxu0 0
        %2474 = vmatpush1.bf16.msra.mxu0 %v2427
        %2475 = vmatprep.subr.bf16.mxu0 0
        %2476 = vmatpush1.bf16.msra.mxu0 %v2428
        %2477 = vmatprep.mubr.bf16.mxu0 %v2315
        %2478 = vmatmul.mubr.bf16.gmra.mrb[0].mxu0 %v2314
        %v2479 = vpop.f32.mrb[0].mxu0
        %v2480 = vadd.f32 %v2348, %v2479
        %v2481 = vpop.f32.mrb[0].mxu0
        %v2482 = vpop.f32.mrb[0].mxu0
        %v2483 = vpop.f32.mrb[0].mxu0
        %2484 = vdwg.mxu0
        %v2485 = vmul.f32 %v2480, 0.5
        %v2486 = vmul.f32 %v2485, 1.442695
        %v2487 = vpow.pop %v2486
        %v2488 = vld [vmem:[%s386] sm:$0xff]
        %2490 = vrot.lane.b32.xlu0 %v2488, 8
        %v2491 = vpop.permute.xlu0 %2490
        %v2493 = vmul.f32 %v2487, %v2491
        %2495 = vrot.lane.b32.xlu0 %v2493, 120
        %v2496 = vpop.permute.xlu0 %2495
        %v2498 = vadd.f32 %v2480, %v2496
        %v2499 = vpack.c.bf16 %v2498, %v2498
        %v2500 = vld [vmem:[%s5] sm:$0xff]
        %s2501 = scalar_lea.vmem [#allocation6], 3
        %v2502 = vld [vmem:[%s2501] ss:$8 sm:$0x3]
        %v2504 = vlaneseq
        %v2505 = vshrl.u32 %v2504, 7
        %v2506 = vsub.s32 0, %v2505
        %v2507 = vrot.slane %v2502, %v2506
        %v2508 = vlaneseq
        %v2509 = vshrl.u32 %v2508, 7
        %v2510 = vsub.s32 1, %v2509
        %v2511 = vrot.slane %v2502, %v2510
        %v2515 = vunpack.c.l.b16 %v2500
        %v2516 = vunpack.c.h.b16 %v2500
        %v2517 = vpack.c.b16 %v2515, %v2515
        %v2518 = vpack.c.b16 %v2516, %v2516
        %vm2519 = vcmask 64512
        %v2521 = vsel %vm2519, %v2499, 0
        %vm2523 = vcmask 1043456
        %v2525 = vsel %vm2523, %v2517, 0
        %v2528 = vsel %vm2523, %v2518, 0
        %2530 = vmatprep.subr.bf16.mxu0 %v2528
        %2531 = vmatpush1.bf16.msra.mxu0 %v2525
        %2532 = vmatprep.subr.bf16.mxu0 0
        %2533 = vmatpush1.bf16.msra.mxu0 0
        %2534 = vmatprep.subr.bf16.mxu0 0
        %2535 = vmatpush1.bf16.msra.mxu0 0
        %2536 = vmatprep.subr.bf16.mxu0 0
        %2537 = vmatpush1.bf16.msra.mxu0 0
        %2538 = vmatprep.subr.bf16.mxu0 0
        %2539 = vmatpush1.bf16.msra.mxu0 0
        %2540 = vmatprep.subr.bf16.mxu0 0
        %2541 = vmatpush1.bf16.msra.mxu0 0
        %2542 = vmatprep.subr.bf16.mxu0 0
        %2543 = vmatpush1.bf16.msra.mxu0 0
        %2544 = vmatprep.subr.bf16.mxu0 0
        %2545 = vmatpush1.bf16.msra.mxu0 0
        %2546 = vmatprep.subr.bf16.mxu0 0
        %2547 = vmatpush1.bf16.msra.mxu0 0
        %2548 = vmatprep.subr.bf16.mxu0 0
        %2549 = vmatpush1.bf16.msra.mxu0 0
        %2550 = vmatprep.subr.bf16.mxu0 0
        %2551 = vmatpush1.bf16.msra.mxu0 0
        %2552 = vmatprep.subr.bf16.mxu0 0
        %2553 = vmatpush1.bf16.msra.mxu0 0
        %2554 = vmatprep.subr.bf16.mxu0 0
        %2555 = vmatpush1.bf16.msra.mxu0 0
        %2556 = vmatprep.subr.bf16.mxu0 0
        %2557 = vmatpush1.bf16.msra.mxu0 0
        %2558 = vmatprep.subr.bf16.mxu0 0
        %2559 = vmatpush1.bf16.msra.mxu0 0
        %2560 = vmatprep.subr.bf16.mxu0 0
        %2561 = vmatpush1.bf16.msra.mxu0 0
        %2562 = vmatprep.mubr.bf16.mxu0 0
        %2563 = vmatmul.mubr.bf16.gmra.mrb[0].mxu0 %v2521
        %v2564 = vpop.f32.mrb[0].mxu0
        %v2565 = vadd.f32 %v2507, %v2564
        %v2566 = vpop.f32.mrb[0].mxu0
        %v2567 = vadd.f32 %v2511, %v2566
        %v2568 = vpop.f32.mrb[0].mxu0
        %v2569 = vpop.f32.mrb[0].mxu0
        %2570 = vdwg.mxu0
        %v2571 = vpack.c.bf16 %v2565, %v2565
        %v2572 = vpack.c.bf16 %v2567, %v2567
        %v2573 = vld [vmem:[%s6] sm:$0xff]
        %v2574 = vld [vmem:[%s6 + $0x8] sm:$0xff]
        %v2575 = vld [vmem:[%s6 + $0x10] sm:$0xff]
        %v2576 = vld [vmem:[%s6 + $0x18] sm:$0xff]
        %v2577 = vld [vmem:[%s6 + $0x20] sm:$0xff]
        %v2578 = vld [vmem:[%s6 + $0x28] sm:$0xff]
        %v2579 = vld [vmem:[%s6 + $0x30] sm:$0xff]
        %v2580 = vld [vmem:[%s6 + $0x38] sm:$0xff]
        %v2581 = vld [vmem:[%s6 + $0x40] sm:$0xff]
        %v2582 = vld [vmem:[%s6 + $0x48] sm:$0xff]
        %v2583 = vld [vmem:[%s6 + $0x50] sm:$0xff]
        %v2584 = vld [vmem:[%s6 + $0x58] sm:$0xff]
        %v2585 = vld [vmem:[%s6 + $0x60] sm:$0xff]
        %v2586 = vld [vmem:[%s6 + $0x68] sm:$0xff]
        %v2587 = vld [vmem:[%s6 + $0x70] sm:$0xff]
        %v2588 = vld [vmem:[%s6 + $0x78] sm:$0xff]
        %v2589 = vld [vmem:[%s6 + $0x80] sm:$0xff]
        %v2590 = vld [vmem:[%s6 + $0x88] sm:$0xff]
        %v2591 = vld [vmem:[%s6 + $0x90] sm:$0xff]
        %v2592 = vld [vmem:[%s6 + $0x98] sm:$0xff]
        %v2593 = vld [vmem:[%s6 + $0xa0] sm:$0xff]
        %v2594 = vld [vmem:[%s6 + $0xa8] sm:$0xff]
        %v2595 = vld [vmem:[%s6 + $0xb0] sm:$0xff]
        %v2596 = vld [vmem:[%s6 + $0xb8] sm:$0xff]
        %v2597 = vld [vmem:[%s6 + $0xc0] sm:$0xff]
        %v2598 = vld [vmem:[%s6 + $0xc8] sm:$0xff]
        %v2599 = vld [vmem:[%s6 + $0xd0] sm:$0xff]
        %v2600 = vld [vmem:[%s6 + $0xd8] sm:$0xff]
        %v2601 = vld [vmem:[%s6 + $0xe0] sm:$0xff]
        %v2602 = vld [vmem:[%s6 + $0xe8] sm:$0xff]
        %v2603 = vld [vmem:[%s6 + $0xf0] sm:$0xff]
        %v2604 = vld [vmem:[%s6 + $0xf8] sm:$0xff]
        %v2605 = vld [vmem:[%s6 + $0x100] sm:$0xff]
        %v2606 = vld [vmem:[%s6 + $0x108] sm:$0xff]
        %v2607 = vld [vmem:[%s6 + $0x110] sm:$0xff]
        %v2608 = vld [vmem:[%s6 + $0x118] sm:$0xff]
        %v2609 = vld [vmem:[%s6 + $0x120] sm:$0xff]
        %v2610 = vld [vmem:[%s6 + $0x128] sm:$0xff]
        %v2611 = vld [vmem:[%s6 + $0x130] sm:$0xff]
        %v2612 = vld [vmem:[%s6 + $0x138] sm:$0xff]
        %v2613 = vld [vmem:[%s6 + $0x140] sm:$0xff]
        %v2614 = vld [vmem:[%s6 + $0x148] sm:$0xff]
        %v2615 = vld [vmem:[%s6 + $0x150] sm:$0xff]
        %v2616 = vld [vmem:[%s6 + $0x158] sm:$0xff]
        %v2617 = vld [vmem:[%s6 + $0x160] sm:$0xff]
        %v2618 = vld [vmem:[%s6 + $0x168] sm:$0xff]
        %v2619 = vld [vmem:[%s6 + $0x170] sm:$0xff]
        %v2620 = vld [vmem:[%s6 + $0x178] sm:$0xff]
        %v2621 = vld [vmem:[%s6 + $0x180] sm:$0xff]
        %v2622 = vld [vmem:[%s6 + $0x188] sm:$0xff]
        %v2623 = vld [vmem:[%s6 + $0x190] sm:$0xff]
        %v2624 = vld [vmem:[%s6 + $0x198] sm:$0xff]
        %v2625 = vld [vmem:[%s6 + $0x1a0] sm:$0xff]
        %v2626 = vld [vmem:[%s6 + $0x1a8] sm:$0xff]
        %v2627 = vld [vmem:[%s6 + $0x1b0] sm:$0xff]
        %v2628 = vld [vmem:[%s6 + $0x1b8] sm:$0xff]
        %v2629 = vld [vmem:[%s6 + $0x1c0] sm:$0xff]
        %v2630 = vld [vmem:[%s6 + $0x1c8] sm:$0xff]
        %v2631 = vld [vmem:[%s6 + $0x1d0] sm:$0xff]
        %v2632 = vld [vmem:[%s6 + $0x1d8] sm:$0xff]
        %v2633 = vld [vmem:[%s6 + $0x1e0] sm:$0xff]
        %v2634 = vld [vmem:[%s6 + $0x1e8] sm:$0xff]
        %v2635 = vld [vmem:[%s6 + $0x1f0] sm:$0xff]
        %v2636 = vld [vmem:[%s6 + $0x1f8] sm:$0xff]
        %s2637 = scalar_lea.vmem [#allocation6], 4
        %v2638 = vld [vmem:[%s2637] ss:$8 sm:$0xf]
        %v2640 = vlaneseq
        %v2641 = vshrl.u32 %v2640, 7
        %v2642 = vsub.s32 0, %v2641
        %v2643 = vrot.slane %v2638, %v2642
        %v2644 = vlaneseq
        %v2645 = vshrl.u32 %v2644, 7
        %v2646 = vsub.s32 1, %v2645
        %v2647 = vrot.slane %v2638, %v2646
        %v2648 = vlaneseq
        %v2649 = vshrl.u32 %v2648, 7
        %v2650 = vsub.s32 2, %v2649
        %v2651 = vrot.slane %v2638, %v2650
        %v2652 = vlaneseq
        %v2653 = vshrl.u32 %v2652, 7
        %v2654 = vsub.s32 3, %v2653
        %v2655 = vrot.slane %v2638, %v2654
        %v2724 = vunpack.c.l.b16 %v2573
        %v2725 = vunpack.c.h.b16 %v2573
        %v2726 = vunpack.c.l.b16 %v2574
        %v2727 = vunpack.c.h.b16 %v2574
        %v2728 = vunpack.c.l.b16 %v2575
        %v2729 = vunpack.c.h.b16 %v2575
        %v2730 = vunpack.c.l.b16 %v2576
        %v2731 = vunpack.c.h.b16 %v2576
        %v2732 = vunpack.c.l.b16 %v2577
        %v2733 = vunpack.c.h.b16 %v2577
        %v2734 = vunpack.c.l.b16 %v2578
        %v2735 = vunpack.c.h.b16 %v2578
        %v2736 = vunpack.c.l.b16 %v2579
        %v2737 = vunpack.c.h.b16 %v2579
        %v2738 = vunpack.c.l.b16 %v2580
        %v2739 = vunpack.c.h.b16 %v2580
        %v2740 = vunpack.c.l.b16 %v2581
        %v2741 = vunpack.c.h.b16 %v2581
        %v2742 = vunpack.c.l.b16 %v2582
        %v2743 = vunpack.c.h.b16 %v2582
        %v2744 = vunpack.c.l.b16 %v2583
        %v2745 = vunpack.c.h.b16 %v2583
        %v2746 = vunpack.c.l.b16 %v2584
        %v2747 = vunpack.c.h.b16 %v2584
        %v2748 = vunpack.c.l.b16 %v2585
        %v2749 = vunpack.c.h.b16 %v2585
        %v2750 = vunpack.c.l.b16 %v2586
        %v2751 = vunpack.c.h.b16 %v2586
        %v2752 = vunpack.c.l.b16 %v2587
        %v2753 = vunpack.c.h.b16 %v2587
        %v2754 = vunpack.c.l.b16 %v2588
        %v2755 = vunpack.c.h.b16 %v2588
        %v2756 = vunpack.c.l.b16 %v2589
        %v2757 = vunpack.c.h.b16 %v2589
        %v2758 = vunpack.c.l.b16 %v2590
        %v2759 = vunpack.c.h.b16 %v2590
        %v2760 = vunpack.c.l.b16 %v2591
        %v2761 = vunpack.c.h.b16 %v2591
        %v2762 = vunpack.c.l.b16 %v2592
        %v2763 = vunpack.c.h.b16 %v2592
        %v2764 = vunpack.c.l.b16 %v2593
        %v2765 = vunpack.c.h.b16 %v2593
        %v2766 = vunpack.c.l.b16 %v2594
        %v2767 = vunpack.c.h.b16 %v2594
        %v2768 = vunpack.c.l.b16 %v2595
        %v2769 = vunpack.c.h.b16 %v2595
        %v2770 = vunpack.c.l.b16 %v2596
        %v2771 = vunpack.c.h.b16 %v2596
        %v2772 = vunpack.c.l.b16 %v2597
        %v2773 = vunpack.c.h.b16 %v2597
        %v2774 = vunpack.c.l.b16 %v2598
        %v2775 = vunpack.c.h.b16 %v2598
        %v2776 = vunpack.c.l.b16 %v2599
        %v2777 = vunpack.c.h.b16 %v2599
        %v2778 = vunpack.c.l.b16 %v2600
        %v2779 = vunpack.c.h.b16 %v2600
        %v2780 = vunpack.c.l.b16 %v2601
        %v2781 = vunpack.c.h.b16 %v2601
        %v2782 = vunpack.c.l.b16 %v2602
        %v2783 = vunpack.c.h.b16 %v2602
        %v2784 = vunpack.c.l.b16 %v2603
        %v2785 = vunpack.c.h.b16 %v2603
        %v2786 = vunpack.c.l.b16 %v2604
        %v2787 = vunpack.c.h.b16 %v2604
        %v2788 = vunpack.c.l.b16 %v2605
        %v2789 = vunpack.c.h.b16 %v2605
        %v2790 = vunpack.c.l.b16 %v2606
        %v2791 = vunpack.c.h.b16 %v2606
        %v2792 = vunpack.c.l.b16 %v2607
        %v2793 = vunpack.c.h.b16 %v2607
        %v2794 = vunpack.c.l.b16 %v2608
        %v2795 = vunpack.c.h.b16 %v2608
        %v2796 = vunpack.c.l.b16 %v2609
        %v2797 = vunpack.c.h.b16 %v2609
        %v2798 = vunpack.c.l.b16 %v2610
        %v2799 = vunpack.c.h.b16 %v2610
        %v2800 = vunpack.c.l.b16 %v2611
        %v2801 = vunpack.c.h.b16 %v2611
        %v2802 = vunpack.c.l.b16 %v2612
        %v2803 = vunpack.c.h.b16 %v2612
        %v2804 = vunpack.c.l.b16 %v2613
        %v2805 = vunpack.c.h.b16 %v2613
        %v2806 = vunpack.c.l.b16 %v2614
        %v2807 = vunpack.c.h.b16 %v2614
        %v2808 = vunpack.c.l.b16 %v2615
        %v2809 = vunpack.c.h.b16 %v2615
        %v2810 = vunpack.c.l.b16 %v2616
        %v2811 = vunpack.c.h.b16 %v2616
        %v2812 = vunpack.c.l.b16 %v2617
        %v2813 = vunpack.c.h.b16 %v2617
        %v2814 = vunpack.c.l.b16 %v2618
        %v2815 = vunpack.c.h.b16 %v2618
        %v2816 = vunpack.c.l.b16 %v2619
        %v2817 = vunpack.c.h.b16 %v2619
        %v2818 = vunpack.c.l.b16 %v2620
        %v2819 = vunpack.c.h.b16 %v2620
        %v2820 = vunpack.c.l.b16 %v2621
        %v2821 = vunpack.c.h.b16 %v2621
        %v2822 = vunpack.c.l.b16 %v2622
        %v2823 = vunpack.c.h.b16 %v2622
        %v2824 = vunpack.c.l.b16 %v2623
        %v2825 = vunpack.c.h.b16 %v2623
        %v2826 = vunpack.c.l.b16 %v2624
        %v2827 = vunpack.c.h.b16 %v2624
        %v2828 = vunpack.c.l.b16 %v2625
        %v2829 = vunpack.c.h.b16 %v2625
        %v2830 = vunpack.c.l.b16 %v2626
        %v2831 = vunpack.c.h.b16 %v2626
        %v2832 = vunpack.c.l.b16 %v2627
        %v2833 = vunpack.c.h.b16 %v2627
        %v2834 = vunpack.c.l.b16 %v2628
        %v2835 = vunpack.c.h.b16 %v2628
        %v2836 = vunpack.c.l.b16 %v2629
        %v2837 = vunpack.c.h.b16 %v2629
        %v2838 = vunpack.c.l.b16 %v2630
        %v2839 = vunpack.c.h.b16 %v2630
        %v2840 = vunpack.c.l.b16 %v2631
        %v2841 = vunpack.c.h.b16 %v2631
        %v2842 = vunpack.c.l.b16 %v2632
        %v2843 = vunpack.c.h.b16 %v2632
        %v2844 = vunpack.c.l.b16 %v2633
        %v2845 = vunpack.c.h.b16 %v2633
        %v2846 = vunpack.c.l.b16 %v2634
        %v2847 = vunpack.c.h.b16 %v2634
        %v2848 = vunpack.c.l.b16 %v2635
        %v2849 = vunpack.c.h.b16 %v2635
        %v2850 = vunpack.c.l.b16 %v2636
        %v2851 = vunpack.c.h.b16 %v2636
        %v2852 = vpack.c.b16 %v2728, %v2724
        %v2853 = vpack.c.b16 %v2729, %v2725
        %v2854 = vpack.c.b16 %v2730, %v2726
        %v2855 = vpack.c.b16 %v2731, %v2727
        %v2856 = vpack.c.b16 %v2736, %v2732
        %v2857 = vpack.c.b16 %v2737, %v2733
        %v2858 = vpack.c.b16 %v2738, %v2734
        %v2859 = vpack.c.b16 %v2739, %v2735
        %v2860 = vpack.c.b16 %v2744, %v2740
        %v2861 = vpack.c.b16 %v2745, %v2741
        %v2862 = vpack.c.b16 %v2746, %v2742
        %v2863 = vpack.c.b16 %v2747, %v2743
        %v2864 = vpack.c.b16 %v2752, %v2748
        %v2865 = vpack.c.b16 %v2753, %v2749
        %v2866 = vpack.c.b16 %v2754, %v2750
        %v2867 = vpack.c.b16 %v2755, %v2751
        %v2868 = vpack.c.b16 %v2760, %v2756
        %v2869 = vpack.c.b16 %v2761, %v2757
        %v2870 = vpack.c.b16 %v2762, %v2758
        %v2871 = vpack.c.b16 %v2763, %v2759
        %v2872 = vpack.c.b16 %v2768, %v2764
        %v2873 = vpack.c.b16 %v2769, %v2765
        %v2874 = vpack.c.b16 %v2770, %v2766
        %v2875 = vpack.c.b16 %v2771, %v2767
        %v2876 = vpack.c.b16 %v2776, %v2772
        %v2877 = vpack.c.b16 %v2777, %v2773
        %v2878 = vpack.c.b16 %v2778, %v2774
        %v2879 = vpack.c.b16 %v2779, %v2775
        %v2880 = vpack.c.b16 %v2784, %v2780
        %v2881 = vpack.c.b16 %v2785, %v2781
        %v2882 = vpack.c.b16 %v2786, %v2782
        %v2883 = vpack.c.b16 %v2787, %v2783
        %v2884 = vpack.c.b16 %v2792, %v2788
        %v2885 = vpack.c.b16 %v2793, %v2789
        %v2886 = vpack.c.b16 %v2794, %v2790
        %v2887 = vpack.c.b16 %v2795, %v2791
        %v2888 = vpack.c.b16 %v2800, %v2796
        %v2889 = vpack.c.b16 %v2801, %v2797
        %v2890 = vpack.c.b16 %v2802, %v2798
        %v2891 = vpack.c.b16 %v2803, %v2799
        %v2892 = vpack.c.b16 %v2808, %v2804
        %v2893 = vpack.c.b16 %v2809, %v2805
        %v2894 = vpack.c.b16 %v2810, %v2806
        %v2895 = vpack.c.b16 %v2811, %v2807
        %v2896 = vpack.c.b16 %v2816, %v2812
        %v2897 = vpack.c.b16 %v2817, %v2813
        %v2898 = vpack.c.b16 %v2818, %v2814
        %v2899 = vpack.c.b16 %v2819, %v2815
        %v2900 = vpack.c.b16 %v2824, %v2820
        %v2901 = vpack.c.b16 %v2825, %v2821
        %v2902 = vpack.c.b16 %v2826, %v2822
        %v2903 = vpack.c.b16 %v2827, %v2823
        %v2904 = vpack.c.b16 %v2832, %v2828
        %v2905 = vpack.c.b16 %v2833, %v2829
        %v2906 = vpack.c.b16 %v2834, %v2830
        %v2907 = vpack.c.b16 %v2835, %v2831
        %v2908 = vpack.c.b16 %v2840, %v2836
        %v2909 = vpack.c.b16 %v2841, %v2837
        %v2910 = vpack.c.b16 %v2842, %v2838
        %v2911 = vpack.c.b16 %v2843, %v2839
        %v2912 = vpack.c.b16 %v2848, %v2844
        %v2913 = vpack.c.b16 %v2849, %v2845
        %v2914 = vpack.c.b16 %v2850, %v2846
        %v2915 = vpack.c.b16 %v2851, %v2847
        %2980 = vmatprep.subr.bf16.mxu0 %v2853
        %2981 = vmatpush1.bf16.msra.mxu0 %v2852
        %2982 = vmatprep.subr.bf16.mxu0 %v2857
        %2983 = vmatpush1.bf16.msra.mxu0 %v2856
        %2984 = vmatprep.subr.bf16.mxu0 %v2861
        %2985 = vmatpush1.bf16.msra.mxu0 %v2860
        %2986 = vmatprep.subr.bf16.mxu0 %v2865
        %2987 = vmatpush1.bf16.msra.mxu0 %v2864
        %2988 = vmatprep.subr.bf16.mxu0 %v2869
        %2989 = vmatpush1.bf16.msra.mxu0 %v2868
        %2990 = vmatprep.subr.bf16.mxu0 %v2873
        %2991 = vmatpush1.bf16.msra.mxu0 %v2872
        %2992 = vmatprep.subr.bf16.mxu0 %v2877
        %2993 = vmatpush1.bf16.msra.mxu0 %v2876
        %2994 = vmatprep.subr.bf16.mxu0 %v2881
        %2995 = vmatpush1.bf16.msra.mxu0 %v2880
        %2996 = vmatprep.subr.bf16.mxu0 %v2885
        %2997 = vmatpush1.bf16.msra.mxu0 %v2884
        %2998 = vmatprep.subr.bf16.mxu0 %v2889
        %2999 = vmatpush1.bf16.msra.mxu0 %v2888
        %3000 = vmatprep.subr.bf16.mxu0 %v2893
        %3001 = vmatpush1.bf16.msra.mxu0 %v2892
        %3002 = vmatprep.subr.bf16.mxu0 %v2897
        %3003 = vmatpush1.bf16.msra.mxu0 %v2896
        %3004 = vmatprep.subr.bf16.mxu0 %v2901
        %3005 = vmatpush1.bf16.msra.mxu0 %v2900
        %3006 = vmatprep.subr.bf16.mxu0 %v2905
        %3007 = vmatpush1.bf16.msra.mxu0 %v2904
        %3008 = vmatprep.subr.bf16.mxu0 %v2909
        %3009 = vmatpush1.bf16.msra.mxu0 %v2908
        %3010 = vmatprep.subr.bf16.mxu0 %v2913
        %3011 = vmatpush1.bf16.msra.mxu0 %v2912
        %3012 = vmatprep.mubr.bf16.mxu0 %v2572
        %3013 = vmatmul.mubr.bf16.gmra.mrb[0].mxu0 %v2571
        %v3014 = vpop.f32.mrb[0].mxu0
        %v3015 = vadd.f32 %v2643, %v3014
        %v3016 = vpop.f32.mrb[0].mxu0
        %v3017 = vadd.f32 %v2647, %v3016
        %v3018 = vpop.f32.mrb[0].mxu0
        %v3019 = vpop.f32.mrb[0].mxu0
        %3020 = vdwg.mxu0
        %3021 = vmatprep.subr.bf16.mxu0 %v2855
        %3022 = vmatpush1.bf16.msra.mxu0 %v2854
        %3023 = vmatprep.subr.bf16.mxu0 %v2859
        %3024 = vmatpush1.bf16.msra.mxu0 %v2858
        %3025 = vmatprep.subr.bf16.mxu0 %v2863
        %3026 = vmatpush1.bf16.msra.mxu0 %v2862
        %3027 = vmatprep.subr.bf16.mxu0 %v2867
        %3028 = vmatpush1.bf16.msra.mxu0 %v2866
        %3029 = vmatprep.subr.bf16.mxu0 %v2871
        %3030 = vmatpush1.bf16.msra.mxu0 %v2870
        %3031 = vmatprep.subr.bf16.mxu0 %v2875
        %3032 = vmatpush1.bf16.msra.mxu0 %v2874
        %3033 = vmatprep.subr.bf16.mxu0 %v2879
        %3034 = vmatpush1.bf16.msra.mxu0 %v2878
        %3035 = vmatprep.subr.bf16.mxu0 %v2883
        %3036 = vmatpush1.bf16.msra.mxu0 %v2882
        %3037 = vmatprep.subr.bf16.mxu0 %v2887
        %3038 = vmatpush1.bf16.msra.mxu0 %v2886
        %3039 = vmatprep.subr.bf16.mxu0 %v2891
        %3040 = vmatpush1.bf16.msra.mxu0 %v2890
        %3041 = vmatprep.subr.bf16.mxu0 %v2895
        %3042 = vmatpush1.bf16.msra.mxu0 %v2894
        %3043 = vmatprep.subr.bf16.mxu0 %v2899
        %3044 = vmatpush1.bf16.msra.mxu0 %v2898
        %3045 = vmatprep.subr.bf16.mxu0 %v2903
        %3046 = vmatpush1.bf16.msra.mxu0 %v2902
        %3047 = vmatprep.subr.bf16.mxu0 %v2907
        %3048 = vmatpush1.bf16.msra.mxu0 %v2906
        %3049 = vmatprep.subr.bf16.mxu0 %v2911
        %3050 = vmatpush1.bf16.msra.mxu0 %v2910
        %3051 = vmatprep.subr.bf16.mxu0 %v2915
        %3052 = vmatpush1.bf16.msra.mxu0 %v2914
        %3053 = vmatprep.mubr.bf16.mxu0 %v2572
        %3054 = vmatmul.mubr.bf16.gmra.mrb[0].mxu0 %v2571
        %v3055 = vpop.f32.mrb[0].mxu0
        %v3056 = vadd.f32 %v2651, %v3055
        %v3057 = vpop.f32.mrb[0].mxu0
        %v3058 = vadd.f32 %v2655, %v3057
        %v3059 = vpop.f32.mrb[0].mxu0
        %v3060 = vpop.f32.mrb[0].mxu0
        %3061 = vdwg.mxu0
        %v3062 = vmax.f32 %v3015, 0.0
        %v3063 = vmax.f32 %v3017, 0.0
        %v3064 = vmax.f32 %v3056, 0.0
        %v3065 = vmax.f32 %v3058, 0.0
        %v3066 = vpack.c.bf16 %v3062, %v3062
        %v3067 = vpack.c.bf16 %v3063, %v3063
        %v3068 = vpack.c.bf16 %v3064, %v3064
        %v3069 = vpack.c.bf16 %v3065, %v3065
        %v3070 = vld [vmem:[#allocation4] sm:$0xff]
        %v3071 = vld [vmem:[#allocation4 + $0x8] sm:$0xff]
        %v3072 = vld [vmem:[#allocation4 + $0x10] sm:$0xff]
        %v3073 = vld [vmem:[#allocation4 + $0x18] sm:$0xff]
        %v3074 = vld [vmem:[#allocation4 + $0x20] sm:$0xff]
        %v3075 = vld [vmem:[#allocation4 + $0x28] sm:$0xff]
        %v3076 = vld [vmem:[#allocation4 + $0x30] sm:$0xff]
        %v3077 = vld [vmem:[#allocation4 + $0x38] sm:$0xff]
        %v3078 = vld [vmem:[#allocation4 + $0x40] sm:$0xff]
        %v3079 = vld [vmem:[#allocation4 + $0x48] sm:$0xff]
        %v3080 = vld [vmem:[#allocation4 + $0x50] sm:$0xff]
        %v3081 = vld [vmem:[#allocation4 + $0x58] sm:$0xff]
        %v3082 = vld [vmem:[#allocation4 + $0x60] sm:$0xff]
        %v3083 = vld [vmem:[#allocation4 + $0x68] sm:$0xff]
        %v3084 = vld [vmem:[#allocation4 + $0x70] sm:$0xff]
        %v3085 = vld [vmem:[#allocation4 + $0x78] sm:$0xff]
        %v3086 = vld [vmem:[#allocation4 + $0x80] sm:$0xff]
        %v3087 = vld [vmem:[#allocation4 + $0x88] sm:$0xff]
        %v3088 = vld [vmem:[#allocation4 + $0x90] sm:$0xff]
        %v3089 = vld [vmem:[#allocation4 + $0x98] sm:$0xff]
        %v3090 = vld [vmem:[#allocation4 + $0xa0] sm:$0xff]
        %v3091 = vld [vmem:[#allocation4 + $0xa8] sm:$0xff]
        %v3092 = vld [vmem:[#allocation4 + $0xb0] sm:$0xff]
        %v3093 = vld [vmem:[#allocation4 + $0xb8] sm:$0xff]
        %v3094 = vld [vmem:[#allocation4 + $0xc0] sm:$0xff]
        %v3095 = vld [vmem:[#allocation4 + $0xc8] sm:$0xff]
        %v3096 = vld [vmem:[#allocation4 + $0xd0] sm:$0xff]
        %v3097 = vld [vmem:[#allocation4 + $0xd8] sm:$0xff]
        %v3098 = vld [vmem:[#allocation4 + $0xe0] sm:$0xff]
        %v3099 = vld [vmem:[#allocation4 + $0xe8] sm:$0xff]
        %v3100 = vld [vmem:[#allocation4 + $0xf0] sm:$0xff]
        %v3101 = vld [vmem:[#allocation4 + $0xf8] sm:$0xff]
        %v3102 = vld [vmem:[#allocation4 + $0x100] sm:$0xff]
        %v3103 = vld [vmem:[#allocation4 + $0x108] sm:$0xff]
        %v3104 = vld [vmem:[#allocation4 + $0x110] sm:$0xff]
        %v3105 = vld [vmem:[#allocation4 + $0x118] sm:$0xff]
        %v3106 = vld [vmem:[#allocation4 + $0x120] sm:$0xff]
        %v3107 = vld [vmem:[#allocation4 + $0x128] sm:$0xff]
        %v3108 = vld [vmem:[#allocation4 + $0x130] sm:$0xff]
        %v3109 = vld [vmem:[#allocation4 + $0x138] sm:$0xff]
        %v3110 = vld [vmem:[#allocation4 + $0x140] sm:$0xff]
        %v3111 = vld [vmem:[#allocation4 + $0x148] sm:$0xff]
        %v3112 = vld [vmem:[#allocation4 + $0x150] sm:$0xff]
        %v3113 = vld [vmem:[#allocation4 + $0x158] sm:$0xff]
        %v3114 = vld [vmem:[#allocation4 + $0x160] sm:$0xff]
        %v3115 = vld [vmem:[#allocation4 + $0x168] sm:$0xff]
        %v3116 = vld [vmem:[#allocation4 + $0x170] sm:$0xff]
        %v3117 = vld [vmem:[#allocation4 + $0x178] sm:$0xff]
        %v3118 = vld [vmem:[#allocation4 + $0x180] sm:$0xff]
        %v3119 = vld [vmem:[#allocation4 + $0x188] sm:$0xff]
        %v3120 = vld [vmem:[#allocation4 + $0x190] sm:$0xff]
        %v3121 = vld [vmem:[#allocation4 + $0x198] sm:$0xff]
        %v3122 = vld [vmem:[#allocation4 + $0x1a0] sm:$0xff]
        %v3123 = vld [vmem:[#allocation4 + $0x1a8] sm:$0xff]
        %v3124 = vld [vmem:[#allocation4 + $0x1b0] sm:$0xff]
        %v3125 = vld [vmem:[#allocation4 + $0x1b8] sm:$0xff]
        %v3126 = vld [vmem:[#allocation4 + $0x1c0] sm:$0xff]
        %v3127 = vld [vmem:[#allocation4 + $0x1c8] sm:$0xff]
        %v3128 = vld [vmem:[#allocation4 + $0x1d0] sm:$0xff]
        %v3129 = vld [vmem:[#allocation4 + $0x1d8] sm:$0xff]
        %v3130 = vld [vmem:[#allocation4 + $0x1e0] sm:$0xff]
        %v3131 = vld [vmem:[#allocation4 + $0x1e8] sm:$0xff]
        %v3132 = vld [vmem:[#allocation4 + $0x1f0] sm:$0xff]
        %v3133 = vld [vmem:[#allocation4 + $0x1f8] sm:$0xff]
        %v3134 = vld [vmem:[#allocation4 + $0x200] sm:$0xff]
        %v3135 = vld [vmem:[#allocation4 + $0x208] sm:$0xff]
        %v3136 = vld [vmem:[#allocation4 + $0x210] sm:$0xff]
        %v3137 = vld [vmem:[#allocation4 + $0x218] sm:$0xff]
        %v3138 = vld [vmem:[#allocation4 + $0x220] sm:$0xff]
        %v3139 = vld [vmem:[#allocation4 + $0x228] sm:$0xff]
        %v3140 = vld [vmem:[#allocation4 + $0x230] sm:$0xff]
        %v3141 = vld [vmem:[#allocation4 + $0x238] sm:$0xff]
        %v3142 = vld [vmem:[#allocation4 + $0x240] sm:$0xff]
        %v3143 = vld [vmem:[#allocation4 + $0x248] sm:$0xff]
        %v3144 = vld [vmem:[#allocation4 + $0x250] sm:$0xff]
        %v3145 = vld [vmem:[#allocation4 + $0x258] sm:$0xff]
        %v3146 = vld [vmem:[#allocation4 + $0x260] sm:$0xff]
        %v3147 = vld [vmem:[#allocation4 + $0x268] sm:$0xff]
        %v3148 = vld [vmem:[#allocation4 + $0x270] sm:$0xff]
        %v3149 = vld [vmem:[#allocation4 + $0x278] sm:$0xff]
        %v3150 = vld [vmem:[#allocation4 + $0x280] sm:$0xff]
        %v3151 = vld [vmem:[#allocation4 + $0x288] sm:$0xff]
        %v3152 = vld [vmem:[#allocation4 + $0x290] sm:$0xff]
        %v3153 = vld [vmem:[#allocation4 + $0x298] sm:$0xff]
        %v3154 = vld [vmem:[#allocation4 + $0x2a0] sm:$0xff]
        %v3155 = vld [vmem:[#allocation4 + $0x2a8] sm:$0xff]
        %v3156 = vld [vmem:[#allocation4 + $0x2b0] sm:$0xff]
        %v3157 = vld [vmem:[#allocation4 + $0x2b8] sm:$0xff]
        %v3158 = vld [vmem:[#allocation4 + $0x2c0] sm:$0xff]
        %v3159 = vld [vmem:[#allocation4 + $0x2c8] sm:$0xff]
        %v3160 = vld [vmem:[#allocation4 + $0x2d0] sm:$0xff]
        %v3161 = vld [vmem:[#allocation4 + $0x2d8] sm:$0xff]
        %v3162 = vld [vmem:[#allocation4 + $0x2e0] sm:$0xff]
        %v3163 = vld [vmem:[#allocation4 + $0x2e8] sm:$0xff]
        %v3164 = vld [vmem:[#allocation4 + $0x2f0] sm:$0xff]
        %v3165 = vld [vmem:[#allocation4 + $0x2f8] sm:$0xff]
        %v3166 = vld [vmem:[#allocation4 + $0x300] sm:$0xff]
        %v3167 = vld [vmem:[#allocation4 + $0x308] sm:$0xff]
        %v3168 = vld [vmem:[#allocation4 + $0x310] sm:$0xff]
        %v3169 = vld [vmem:[#allocation4 + $0x318] sm:$0xff]
        %v3170 = vld [vmem:[#allocation4 + $0x320] sm:$0xff]
        %v3171 = vld [vmem:[#allocation4 + $0x328] sm:$0xff]
        %v3172 = vld [vmem:[#allocation4 + $0x330] sm:$0xff]
        %v3173 = vld [vmem:[#allocation4 + $0x338] sm:$0xff]
        %v3174 = vld [vmem:[#allocation4 + $0x340] sm:$0xff]
        %v3175 = vld [vmem:[#allocation4 + $0x348] sm:$0xff]
        %v3176 = vld [vmem:[#allocation4 + $0x350] sm:$0xff]
        %v3177 = vld [vmem:[#allocation4 + $0x358] sm:$0xff]
        %v3178 = vld [vmem:[#allocation4 + $0x360] sm:$0xff]
        %v3179 = vld [vmem:[#allocation4 + $0x368] sm:$0xff]
        %v3180 = vld [vmem:[#allocation4 + $0x370] sm:$0xff]
        %v3181 = vld [vmem:[#allocation4 + $0x378] sm:$0xff]
        %v3182 = vld [vmem:[#allocation4 + $0x380] sm:$0xff]
        %v3183 = vld [vmem:[#allocation4 + $0x388] sm:$0xff]
        %v3184 = vld [vmem:[#allocation4 + $0x390] sm:$0xff]
        %v3185 = vld [vmem:[#allocation4 + $0x398] sm:$0xff]
        %v3186 = vld [vmem:[#allocation4 + $0x3a0] sm:$0xff]
        %v3187 = vld [vmem:[#allocation4 + $0x3a8] sm:$0xff]
        %v3188 = vld [vmem:[#allocation4 + $0x3b0] sm:$0xff]
        %v3189 = vld [vmem:[#allocation4 + $0x3b8] sm:$0xff]
        %v3190 = vld [vmem:[#allocation4 + $0x3c0] sm:$0xff]
        %v3191 = vld [vmem:[#allocation4 + $0x3c8] sm:$0xff]
        %v3192 = vld [vmem:[#allocation4 + $0x3d0] sm:$0xff]
        %v3193 = vld [vmem:[#allocation4 + $0x3d8] sm:$0xff]
        %v3194 = vld [vmem:[#allocation4 + $0x3e0] sm:$0xff]
        %v3195 = vld [vmem:[#allocation4 + $0x3e8] sm:$0xff]
        %v3196 = vld [vmem:[#allocation4 + $0x3f0] sm:$0xff]
        %v3197 = vld [vmem:[#allocation4 + $0x3f8] sm:$0xff]
        %v3198 = vld [vmem:[#allocation4 + $0x400] sm:$0xff]
        %v3199 = vld [vmem:[#allocation4 + $0x408] sm:$0xff]
        %v3200 = vld [vmem:[#allocation4 + $0x410] sm:$0xff]
        %v3201 = vld [vmem:[#allocation4 + $0x418] sm:$0xff]
        %v3202 = vld [vmem:[#allocation4 + $0x420] sm:$0xff]
        %v3203 = vld [vmem:[#allocation4 + $0x428] sm:$0xff]
        %v3204 = vld [vmem:[#allocation4 + $0x430] sm:$0xff]
        %v3205 = vld [vmem:[#allocation4 + $0x438] sm:$0xff]
        %v3206 = vld [vmem:[#allocation4 + $0x440] sm:$0xff]
        %v3207 = vld [vmem:[#allocation4 + $0x448] sm:$0xff]
        %v3208 = vld [vmem:[#allocation4 + $0x450] sm:$0xff]
        %v3209 = vld [vmem:[#allocation4 + $0x458] sm:$0xff]
        %v3210 = vld [vmem:[#allocation4 + $0x460] sm:$0xff]
        %v3211 = vld [vmem:[#allocation4 + $0x468] sm:$0xff]
        %v3212 = vld [vmem:[#allocation4 + $0x470] sm:$0xff]
        %v3213 = vld [vmem:[#allocation4 + $0x478] sm:$0xff]
        %v3214 = vld [vmem:[#allocation4 + $0x480] sm:$0xff]
        %v3215 = vld [vmem:[#allocation4 + $0x488] sm:$0xff]
        %v3216 = vld [vmem:[#allocation4 + $0x490] sm:$0xff]
        %v3217 = vld [vmem:[#allocation4 + $0x498] sm:$0xff]
        %v3218 = vld [vmem:[#allocation4 + $0x4a0] sm:$0xff]
        %v3219 = vld [vmem:[#allocation4 + $0x4a8] sm:$0xff]
        %v3220 = vld [vmem:[#allocation4 + $0x4b0] sm:$0xff]
        %v3221 = vld [vmem:[#allocation4 + $0x4b8] sm:$0xff]
        %v3222 = vld [vmem:[#allocation4 + $0x4c0] sm:$0xff]
        %v3223 = vld [vmem:[#allocation4 + $0x4c8] sm:$0xff]
        %v3224 = vld [vmem:[#allocation4 + $0x4d0] sm:$0xff]
        %v3225 = vld [vmem:[#allocation4 + $0x4d8] sm:$0xff]
        %v3226 = vld [vmem:[#allocation4 + $0x4e0] sm:$0xff]
        %v3227 = vld [vmem:[#allocation4 + $0x4e8] sm:$0xff]
        %v3228 = vld [vmem:[#allocation4 + $0x4f0] sm:$0xff]
        %v3229 = vld [vmem:[#allocation4 + $0x4f8] sm:$0xff]
        %v3230 = vld [vmem:[#allocation4 + $0x500] sm:$0xff]
        %v3231 = vld [vmem:[#allocation4 + $0x508] sm:$0xff]
        %v3232 = vld [vmem:[#allocation4 + $0x510] sm:$0xff]
        %v3233 = vld [vmem:[#allocation4 + $0x518] sm:$0xff]
        %v3234 = vld [vmem:[#allocation4 + $0x520] sm:$0xff]
        %v3235 = vld [vmem:[#allocation4 + $0x528] sm:$0xff]
        %v3236 = vld [vmem:[#allocation4 + $0x530] sm:$0xff]
        %v3237 = vld [vmem:[#allocation4 + $0x538] sm:$0xff]
        %v3238 = vld [vmem:[#allocation4 + $0x540] sm:$0xff]
        %v3239 = vld [vmem:[#allocation4 + $0x548] sm:$0xff]
        %v3240 = vld [vmem:[#allocation4 + $0x550] sm:$0xff]
        %v3241 = vld [vmem:[#allocation4 + $0x558] sm:$0xff]
        %v3242 = vld [vmem:[#allocation4 + $0x560] sm:$0xff]
        %v3243 = vld [vmem:[#allocation4 + $0x568] sm:$0xff]
        %v3244 = vld [vmem:[#allocation4 + $0x570] sm:$0xff]
        %v3245 = vld [vmem:[#allocation4 + $0x578] sm:$0xff]
        %v3246 = vld [vmem:[#allocation4 + $0x580] sm:$0xff]
        %v3247 = vld [vmem:[#allocation4 + $0x588] sm:$0xff]
        %v3248 = vld [vmem:[#allocation4 + $0x590] sm:$0xff]
        %v3249 = vld [vmem:[#allocation4 + $0x598] sm:$0xff]
        %v3250 = vld [vmem:[#allocation4 + $0x5a0] sm:$0xff]
        %v3251 = vld [vmem:[#allocation4 + $0x5a8] sm:$0xff]
        %v3252 = vld [vmem:[#allocation4 + $0x5b0] sm:$0xff]
        %v3253 = vld [vmem:[#allocation4 + $0x5b8] sm:$0xff]
        %v3254 = vld [vmem:[#allocation4 + $0x5c0] sm:$0xff]
        %v3255 = vld [vmem:[#allocation4 + $0x5c8] sm:$0xff]
        %v3256 = vld [vmem:[#allocation4 + $0x5d0] sm:$0xff]
        %v3257 = vld [vmem:[#allocation4 + $0x5d8] sm:$0xff]
        %v3258 = vld [vmem:[#allocation4 + $0x5e0] sm:$0xff]
        %v3259 = vld [vmem:[#allocation4 + $0x5e8] sm:$0xff]
        %v3260 = vld [vmem:[#allocation4 + $0x5f0] sm:$0xff]
        %v3261 = vld [vmem:[#allocation4 + $0x5f8] sm:$0xff]
        %s3262 = scalar_lea.vmem [#allocation6], 5
        %v3263 = vld [vmem:[%s3262] ss:$8 sm:$0xf]
        %v3264 = vld [vmem:[%s3262] ss:$8 sm:$0x30]
        %v3265 = vor.u32 %v3263, %v3264
        %v3267 = vlaneseq
        %v3268 = vshrl.u32 %v3267, 7
        %v3269 = vsub.s32 0, %v3268
        %v3270 = vrot.slane %v3265, %v3269
        %v3271 = vlaneseq
        %v3272 = vshrl.u32 %v3271, 7
        %v3273 = vsub.s32 1, %v3272
        %v3274 = vrot.slane %v3265, %v3273
        %v3275 = vlaneseq
        %v3276 = vshrl.u32 %v3275, 7
        %v3277 = vsub.s32 2, %v3276
        %v3278 = vrot.slane %v3265, %v3277
        %v3279 = vlaneseq
        %v3280 = vshrl.u32 %v3279, 7
        %v3281 = vsub.s32 3, %v3280
        %v3282 = vrot.slane %v3265, %v3281
        %v3283 = vlaneseq
        %v3284 = vshrl.u32 %v3283, 7
        %v3285 = vsub.s32 4, %v3284
        %v3286 = vrot.slane %v3265, %v3285
        %v3287 = vlaneseq
        %v3288 = vshrl.u32 %v3287, 7
        %v3289 = vsub.s32 5, %v3288
        %v3290 = vrot.slane %v3265, %v3289
        %v3489 = vunpack.c.l.b16 %v3070
        %v3490 = vunpack.c.h.b16 %v3070
        %v3491 = vunpack.c.l.b16 %v3071
        %v3492 = vunpack.c.h.b16 %v3071
        %v3493 = vunpack.c.l.b16 %v3072
        %v3494 = vunpack.c.h.b16 %v3072
        %v3495 = vunpack.c.l.b16 %v3073
        %v3496 = vunpack.c.h.b16 %v3073
        %v3497 = vunpack.c.l.b16 %v3074
        %v3498 = vunpack.c.h.b16 %v3074
        %v3499 = vunpack.c.l.b16 %v3075
        %v3500 = vunpack.c.h.b16 %v3075
        %v3501 = vunpack.c.l.b16 %v3076
        %v3502 = vunpack.c.h.b16 %v3076
        %v3503 = vunpack.c.l.b16 %v3077
        %v3504 = vunpack.c.h.b16 %v3077
        %v3505 = vunpack.c.l.b16 %v3078
        %v3506 = vunpack.c.h.b16 %v3078
        %v3507 = vunpack.c.l.b16 %v3079
        %v3508 = vunpack.c.h.b16 %v3079
        %v3509 = vunpack.c.l.b16 %v3080
        %v3510 = vunpack.c.h.b16 %v3080
        %v3511 = vunpack.c.l.b16 %v3081
        %v3512 = vunpack.c.h.b16 %v3081
        %v3513 = vunpack.c.l.b16 %v3082
        %v3514 = vunpack.c.h.b16 %v3082
        %v3515 = vunpack.c.l.b16 %v3083
        %v3516 = vunpack.c.h.b16 %v3083
        %v3517 = vunpack.c.l.b16 %v3084
        %v3518 = vunpack.c.h.b16 %v3084
        %v3519 = vunpack.c.l.b16 %v3085
        %v3520 = vunpack.c.h.b16 %v3085
        %v3521 = vunpack.c.l.b16 %v3086
        %v3522 = vunpack.c.h.b16 %v3086
        %v3523 = vunpack.c.l.b16 %v3087
        %v3524 = vunpack.c.h.b16 %v3087
        %v3525 = vunpack.c.l.b16 %v3088
        %v3526 = vunpack.c.h.b16 %v3088
        %v3527 = vunpack.c.l.b16 %v3089
        %v3528 = vunpack.c.h.b16 %v3089
        %v3529 = vunpack.c.l.b16 %v3090
        %v3530 = vunpack.c.h.b16 %v3090
        %v3531 = vunpack.c.l.b16 %v3091
        %v3532 = vunpack.c.h.b16 %v3091
        %v3533 = vunpack.c.l.b16 %v3092
        %v3534 = vunpack.c.h.b16 %v3092
        %v3535 = vunpack.c.l.b16 %v3093
        %v3536 = vunpack.c.h.b16 %v3093
        %v3537 = vunpack.c.l.b16 %v3094
        %v3538 = vunpack.c.h.b16 %v3094
        %v3539 = vunpack.c.l.b16 %v3095
        %v3540 = vunpack.c.h.b16 %v3095
        %v3541 = vunpack.c.l.b16 %v3096
        %v3542 = vunpack.c.h.b16 %v3096
        %v3543 = vunpack.c.l.b16 %v3097
        %v3544 = vunpack.c.h.b16 %v3097
        %v3545 = vunpack.c.l.b16 %v3098
        %v3546 = vunpack.c.h.b16 %v3098
        %v3547 = vunpack.c.l.b16 %v3099
        %v3548 = vunpack.c.h.b16 %v3099
        %v3549 = vunpack.c.l.b16 %v3100
        %v3550 = vunpack.c.h.b16 %v3100
        %v3551 = vunpack.c.l.b16 %v3101
        %v3552 = vunpack.c.h.b16 %v3101
        %v3553 = vunpack.c.l.b16 %v3102
        %v3554 = vunpack.c.h.b16 %v3102
        %v3555 = vunpack.c.l.b16 %v3103
        %v3556 = vunpack.c.h.b16 %v3103
        %v3557 = vunpack.c.l.b16 %v3104
        %v3558 = vunpack.c.h.b16 %v3104
        %v3559 = vunpack.c.l.b16 %v3105
        %v3560 = vunpack.c.h.b16 %v3105
        %v3561 = vunpack.c.l.b16 %v3106
        %v3562 = vunpack.c.h.b16 %v3106
        %v3563 = vunpack.c.l.b16 %v3107
        %v3564 = vunpack.c.h.b16 %v3107
        %v3565 = vunpack.c.l.b16 %v3108
        %v3566 = vunpack.c.h.b16 %v3108
        %v3567 = vunpack.c.l.b16 %v3109
        %v3568 = vunpack.c.h.b16 %v3109
        %v3569 = vunpack.c.l.b16 %v3110
        %v3570 = vunpack.c.h.b16 %v3110
        %v3571 = vunpack.c.l.b16 %v3111
        %v3572 = vunpack.c.h.b16 %v3111
        %v3573 = vunpack.c.l.b16 %v3112
        %v3574 = vunpack.c.h.b16 %v3112
        %v3575 = vunpack.c.l.b16 %v3113
        %v3576 = vunpack.c.h.b16 %v3113
        %v3577 = vunpack.c.l.b16 %v3114
        %v3578 = vunpack.c.h.b16 %v3114
        %v3579 = vunpack.c.l.b16 %v3115
        %v3580 = vunpack.c.h.b16 %v3115
        %v3581 = vunpack.c.l.b16 %v3116
        %v3582 = vunpack.c.h.b16 %v3116
        %v3583 = vunpack.c.l.b16 %v3117
        %v3584 = vunpack.c.h.b16 %v3117
        %v3585 = vunpack.c.l.b16 %v3118
        %v3586 = vunpack.c.h.b16 %v3118
        %v3587 = vunpack.c.l.b16 %v3119
        %v3588 = vunpack.c.h.b16 %v3119
        %v3589 = vunpack.c.l.b16 %v3120
        %v3590 = vunpack.c.h.b16 %v3120
        %v3591 = vunpack.c.l.b16 %v3121
        %v3592 = vunpack.c.h.b16 %v3121
        %v3593 = vunpack.c.l.b16 %v3122
        %v3594 = vunpack.c.h.b16 %v3122
        %v3595 = vunpack.c.l.b16 %v3123
        %v3596 = vunpack.c.h.b16 %v3123
        %v3597 = vunpack.c.l.b16 %v3124
        %v3598 = vunpack.c.h.b16 %v3124
        %v3599 = vunpack.c.l.b16 %v3125
        %v3600 = vunpack.c.h.b16 %v3125
        %v3601 = vunpack.c.l.b16 %v3126
        %v3602 = vunpack.c.h.b16 %v3126
        %v3603 = vunpack.c.l.b16 %v3127
        %v3604 = vunpack.c.h.b16 %v3127
        %v3605 = vunpack.c.l.b16 %v3128
        %v3606 = vunpack.c.h.b16 %v3128
        %v3607 = vunpack.c.l.b16 %v3129
        %v3608 = vunpack.c.h.b16 %v3129
        %v3609 = vunpack.c.l.b16 %v3130
        %v3610 = vunpack.c.h.b16 %v3130
        %v3611 = vunpack.c.l.b16 %v3131
        %v3612 = vunpack.c.h.b16 %v3131
        %v3613 = vunpack.c.l.b16 %v3132
        %v3614 = vunpack.c.h.b16 %v3132
        %v3615 = vunpack.c.l.b16 %v3133
        %v3616 = vunpack.c.h.b16 %v3133
        %v3617 = vunpack.c.l.b16 %v3134
        %v3618 = vunpack.c.h.b16 %v3134
        %v3619 = vunpack.c.l.b16 %v3135
        %v3620 = vunpack.c.h.b16 %v3135
        %v3621 = vunpack.c.l.b16 %v3136
        %v3622 = vunpack.c.h.b16 %v3136
        %v3623 = vunpack.c.l.b16 %v3137
        %v3624 = vunpack.c.h.b16 %v3137
        %v3625 = vunpack.c.l.b16 %v3138
        %v3626 = vunpack.c.h.b16 %v3138
        %v3627 = vunpack.c.l.b16 %v3139
        %v3628 = vunpack.c.h.b16 %v3139
        %v3629 = vunpack.c.l.b16 %v3140
        %v3630 = vunpack.c.h.b16 %v3140
        %v3631 = vunpack.c.l.b16 %v3141
        %v3632 = vunpack.c.h.b16 %v3141
        %v3633 = vunpack.c.l.b16 %v3142
        %v3634 = vunpack.c.h.b16 %v3142
        %v3635 = vunpack.c.l.b16 %v3143
        %v3636 = vunpack.c.h.b16 %v3143
        %v3637 = vunpack.c.l.b16 %v3144
        %v3638 = vunpack.c.h.b16 %v3144
        %v3639 = vunpack.c.l.b16 %v3145
        %v3640 = vunpack.c.h.b16 %v3145
        %v3641 = vunpack.c.l.b16 %v3146
        %v3642 = vunpack.c.h.b16 %v3146
        %v3643 = vunpack.c.l.b16 %v3147
        %v3644 = vunpack.c.h.b16 %v3147
        %v3645 = vunpack.c.l.b16 %v3148
        %v3646 = vunpack.c.h.b16 %v3148
        %v3647 = vunpack.c.l.b16 %v3149
        %v3648 = vunpack.c.h.b16 %v3149
        %v3649 = vunpack.c.l.b16 %v3150
        %v3650 = vunpack.c.h.b16 %v3150
        %v3651 = vunpack.c.l.b16 %v3151
        %v3652 = vunpack.c.h.b16 %v3151
        %v3653 = vunpack.c.l.b16 %v3152
        %v3654 = vunpack.c.h.b16 %v3152
        %v3655 = vunpack.c.l.b16 %v3153
        %v3656 = vunpack.c.h.b16 %v3153
        %v3657 = vunpack.c.l.b16 %v3154
        %v3658 = vunpack.c.h.b16 %v3154
        %v3659 = vunpack.c.l.b16 %v3155
        %v3660 = vunpack.c.h.b16 %v3155
        %v3661 = vunpack.c.l.b16 %v3156
        %v3662 = vunpack.c.h.b16 %v3156
        %v3663 = vunpack.c.l.b16 %v3157
        %v3664 = vunpack.c.h.b16 %v3157
        %v3665 = vunpack.c.l.b16 %v3158
        %v3666 = vunpack.c.h.b16 %v3158
        %v3667 = vunpack.c.l.b16 %v3159
        %v3668 = vunpack.c.h.b16 %v3159
        %v3669 = vunpack.c.l.b16 %v3160
        %v3670 = vunpack.c.h.b16 %v3160
        %v3671 = vunpack.c.l.b16 %v3161
        %v3672 = vunpack.c.h.b16 %v3161
        %v3673 = vunpack.c.l.b16 %v3162
        %v3674 = vunpack.c.h.b16 %v3162
        %v3675 = vunpack.c.l.b16 %v3163
        %v3676 = vunpack.c.h.b16 %v3163
        %v3677 = vunpack.c.l.b16 %v3164
        %v3678 = vunpack.c.h.b16 %v3164
        %v3679 = vunpack.c.l.b16 %v3165
        %v3680 = vunpack.c.h.b16 %v3165
        %v3681 = vunpack.c.l.b16 %v3166
        %v3682 = vunpack.c.h.b16 %v3166
        %v3683 = vunpack.c.l.b16 %v3167
        %v3684 = vunpack.c.h.b16 %v3167
        %v3685 = vunpack.c.l.b16 %v3168
        %v3686 = vunpack.c.h.b16 %v3168
        %v3687 = vunpack.c.l.b16 %v3169
        %v3688 = vunpack.c.h.b16 %v3169
        %v3689 = vunpack.c.l.b16 %v3170
        %v3690 = vunpack.c.h.b16 %v3170
        %v3691 = vunpack.c.l.b16 %v3171
        %v3692 = vunpack.c.h.b16 %v3171
        %v3693 = vunpack.c.l.b16 %v3172
        %v3694 = vunpack.c.h.b16 %v3172
        %v3695 = vunpack.c.l.b16 %v3173
        %v3696 = vunpack.c.h.b16 %v3173
        %v3697 = vunpack.c.l.b16 %v3174
        %v3698 = vunpack.c.h.b16 %v3174
        %v3699 = vunpack.c.l.b16 %v3175
        %v3700 = vunpack.c.h.b16 %v3175
        %v3701 = vunpack.c.l.b16 %v3176
        %v3702 = vunpack.c.h.b16 %v3176
        %v3703 = vunpack.c.l.b16 %v3177
        %v3704 = vunpack.c.h.b16 %v3177
        %v3705 = vunpack.c.l.b16 %v3178
        %v3706 = vunpack.c.h.b16 %v3178
        %v3707 = vunpack.c.l.b16 %v3179
        %v3708 = vunpack.c.h.b16 %v3179
        %v3709 = vunpack.c.l.b16 %v3180
        %v3710 = vunpack.c.h.b16 %v3180
        %v3711 = vunpack.c.l.b16 %v3181
        %v3712 = vunpack.c.h.b16 %v3181
        %v3713 = vunpack.c.l.b16 %v3182
        %v3714 = vunpack.c.h.b16 %v3182
        %v3715 = vunpack.c.l.b16 %v3183
        %v3716 = vunpack.c.h.b16 %v3183
        %v3717 = vunpack.c.l.b16 %v3184
        %v3718 = vunpack.c.h.b16 %v3184
        %v3719 = vunpack.c.l.b16 %v3185
        %v3720 = vunpack.c.h.b16 %v3185
        %v3721 = vunpack.c.l.b16 %v3186
        %v3722 = vunpack.c.h.b16 %v3186
        %v3723 = vunpack.c.l.b16 %v3187
        %v3724 = vunpack.c.h.b16 %v3187
        %v3725 = vunpack.c.l.b16 %v3188
        %v3726 = vunpack.c.h.b16 %v3188
        %v3727 = vunpack.c.l.b16 %v3189
        %v3728 = vunpack.c.h.b16 %v3189
        %v3729 = vunpack.c.l.b16 %v3190
        %v3730 = vunpack.c.h.b16 %v3190
        %v3731 = vunpack.c.l.b16 %v3191
        %v3732 = vunpack.c.h.b16 %v3191
        %v3733 = vunpack.c.l.b16 %v3192
        %v3734 = vunpack.c.h.b16 %v3192
        %v3735 = vunpack.c.l.b16 %v3193
        %v3736 = vunpack.c.h.b16 %v3193
        %v3737 = vunpack.c.l.b16 %v3194
        %v3738 = vunpack.c.h.b16 %v3194
        %v3739 = vunpack.c.l.b16 %v3195
        %v3740 = vunpack.c.h.b16 %v3195
        %v3741 = vunpack.c.l.b16 %v3196
        %v3742 = vunpack.c.h.b16 %v3196
        %v3743 = vunpack.c.l.b16 %v3197
        %v3744 = vunpack.c.h.b16 %v3197
        %v3745 = vunpack.c.l.b16 %v3198
        %v3746 = vunpack.c.h.b16 %v3198
        %v3747 = vunpack.c.l.b16 %v3199
        %v3748 = vunpack.c.h.b16 %v3199
        %v3749 = vunpack.c.l.b16 %v3200
        %v3750 = vunpack.c.h.b16 %v3200
        %v3751 = vunpack.c.l.b16 %v3201
        %v3752 = vunpack.c.h.b16 %v3201
        %v3753 = vunpack.c.l.b16 %v3202
        %v3754 = vunpack.c.h.b16 %v3202
        %v3755 = vunpack.c.l.b16 %v3203
        %v3756 = vunpack.c.h.b16 %v3203
        %v3757 = vunpack.c.l.b16 %v3204
        %v3758 = vunpack.c.h.b16 %v3204
        %v3759 = vunpack.c.l.b16 %v3205
        %v3760 = vunpack.c.h.b16 %v3205
        %v3761 = vunpack.c.l.b16 %v3206
        %v3762 = vunpack.c.h.b16 %v3206
        %v3763 = vunpack.c.l.b16 %v3207
        %v3764 = vunpack.c.h.b16 %v3207
        %v3765 = vunpack.c.l.b16 %v3208
        %v3766 = vunpack.c.h.b16 %v3208
        %v3767 = vunpack.c.l.b16 %v3209
        %v3768 = vunpack.c.h.b16 %v3209
        %v3769 = vunpack.c.l.b16 %v3210
        %v3770 = vunpack.c.h.b16 %v3210
        %v3771 = vunpack.c.l.b16 %v3211
        %v3772 = vunpack.c.h.b16 %v3211
        %v3773 = vunpack.c.l.b16 %v3212
        %v3774 = vunpack.c.h.b16 %v3212
        %v3775 = vunpack.c.l.b16 %v3213
        %v3776 = vunpack.c.h.b16 %v3213
        %v3777 = vunpack.c.l.b16 %v3214
        %v3778 = vunpack.c.h.b16 %v3214
        %v3779 = vunpack.c.l.b16 %v3215
        %v3780 = vunpack.c.h.b16 %v3215
        %v3781 = vunpack.c.l.b16 %v3216
        %v3782 = vunpack.c.h.b16 %v3216
        %v3783 = vunpack.c.l.b16 %v3217
        %v3784 = vunpack.c.h.b16 %v3217
        %v3785 = vunpack.c.l.b16 %v3218
        %v3786 = vunpack.c.h.b16 %v3218
        %v3787 = vunpack.c.l.b16 %v3219
        %v3788 = vunpack.c.h.b16 %v3219
        %v3789 = vunpack.c.l.b16 %v3220
        %v3790 = vunpack.c.h.b16 %v3220
        %v3791 = vunpack.c.l.b16 %v3221
        %v3792 = vunpack.c.h.b16 %v3221
        %v3793 = vunpack.c.l.b16 %v3222
        %v3794 = vunpack.c.h.b16 %v3222
        %v3795 = vunpack.c.l.b16 %v3223
        %v3796 = vunpack.c.h.b16 %v3223
        %v3797 = vunpack.c.l.b16 %v3224
        %v3798 = vunpack.c.h.b16 %v3224
        %v3799 = vunpack.c.l.b16 %v3225
        %v3800 = vunpack.c.h.b16 %v3225
        %v3801 = vunpack.c.l.b16 %v3226
        %v3802 = vunpack.c.h.b16 %v3226
        %v3803 = vunpack.c.l.b16 %v3227
        %v3804 = vunpack.c.h.b16 %v3227
        %v3805 = vunpack.c.l.b16 %v3228
        %v3806 = vunpack.c.h.b16 %v3228
        %v3807 = vunpack.c.l.b16 %v3229
        %v3808 = vunpack.c.h.b16 %v3229
        %v3809 = vunpack.c.l.b16 %v3230
        %v3810 = vunpack.c.h.b16 %v3230
        %v3811 = vunpack.c.l.b16 %v3231
        %v3812 = vunpack.c.h.b16 %v3231
        %v3813 = vunpack.c.l.b16 %v3232
        %v3814 = vunpack.c.h.b16 %v3232
        %v3815 = vunpack.c.l.b16 %v3233
        %v3816 = vunpack.c.h.b16 %v3233
        %v3817 = vunpack.c.l.b16 %v3234
        %v3818 = vunpack.c.h.b16 %v3234
        %v3819 = vunpack.c.l.b16 %v3235
        %v3820 = vunpack.c.h.b16 %v3235
        %v3821 = vunpack.c.l.b16 %v3236
        %v3822 = vunpack.c.h.b16 %v3236
        %v3823 = vunpack.c.l.b16 %v3237
        %v3824 = vunpack.c.h.b16 %v3237
        %v3825 = vunpack.c.l.b16 %v3238
        %v3826 = vunpack.c.h.b16 %v3238
        %v3827 = vunpack.c.l.b16 %v3239
        %v3828 = vunpack.c.h.b16 %v3239
        %v3829 = vunpack.c.l.b16 %v3240
        %v3830 = vunpack.c.h.b16 %v3240
        %v3831 = vunpack.c.l.b16 %v3241
        %v3832 = vunpack.c.h.b16 %v3241
        %v3833 = vunpack.c.l.b16 %v3242
        %v3834 = vunpack.c.h.b16 %v3242
        %v3835 = vunpack.c.l.b16 %v3243
        %v3836 = vunpack.c.h.b16 %v3243
        %v3837 = vunpack.c.l.b16 %v3244
        %v3838 = vunpack.c.h.b16 %v3244
        %v3839 = vunpack.c.l.b16 %v3245
        %v3840 = vunpack.c.h.b16 %v3245
        %v3841 = vunpack.c.l.b16 %v3246
        %v3842 = vunpack.c.h.b16 %v3246
        %v3843 = vunpack.c.l.b16 %v3247
        %v3844 = vunpack.c.h.b16 %v3247
        %v3845 = vunpack.c.l.b16 %v3248
        %v3846 = vunpack.c.h.b16 %v3248
        %v3847 = vunpack.c.l.b16 %v3249
        %v3848 = vunpack.c.h.b16 %v3249
        %v3849 = vunpack.c.l.b16 %v3250
        %v3850 = vunpack.c.h.b16 %v3250
        %v3851 = vunpack.c.l.b16 %v3251
        %v3852 = vunpack.c.h.b16 %v3251
        %v3853 = vunpack.c.l.b16 %v3252
        %v3854 = vunpack.c.h.b16 %v3252
        %v3855 = vunpack.c.l.b16 %v3253
        %v3856 = vunpack.c.h.b16 %v3253
        %v3857 = vunpack.c.l.b16 %v3254
        %v3858 = vunpack.c.h.b16 %v3254
        %v3859 = vunpack.c.l.b16 %v3255
        %v3860 = vunpack.c.h.b16 %v3255
        %v3861 = vunpack.c.l.b16 %v3256
        %v3862 = vunpack.c.h.b16 %v3256
        %v3863 = vunpack.c.l.b16 %v3257
        %v3864 = vunpack.c.h.b16 %v3257
        %v3865 = vunpack.c.l.b16 %v3258
        %v3866 = vunpack.c.h.b16 %v3258
        %v3867 = vunpack.c.l.b16 %v3259
        %v3868 = vunpack.c.h.b16 %v3259
        %v3869 = vunpack.c.l.b16 %v3260
        %v3870 = vunpack.c.h.b16 %v3260
        %v3871 = vunpack.c.l.b16 %v3261
        %v3872 = vunpack.c.h.b16 %v3261
        %v3873 = vpack.c.b16 %v3495, %v3489
        %v3874 = vpack.c.b16 %v3496, %v3490
        %v3875 = vpack.c.b16 %v3497, %v3491
        %v3876 = vpack.c.b16 %v3498, %v3492
        %v3877 = vpack.c.b16 %v3499, %v3493
        %v3878 = vpack.c.b16 %v3500, %v3494
        %v3879 = vpack.c.b16 %v3507, %v3501
        %v3880 = vpack.c.b16 %v3508, %v3502
        %v3881 = vpack.c.b16 %v3509, %v3503
        %v3882 = vpack.c.b16 %v3510, %v3504
        %v3883 = vpack.c.b16 %v3511, %v3505
        %v3884 = vpack.c.b16 %v3512, %v3506
        %v3885 = vpack.c.b16 %v3519, %v3513
        %v3886 = vpack.c.b16 %v3520, %v3514
        %v3887 = vpack.c.b16 %v3521, %v3515
        %v3888 = vpack.c.b16 %v3522, %v3516
        %v3889 = vpack.c.b16 %v3523, %v3517
        %v3890 = vpack.c.b16 %v3524, %v3518
        %v3891 = vpack.c.b16 %v3531, %v3525
        %v3892 = vpack.c.b16 %v3532, %v3526
        %v3893 = vpack.c.b16 %v3533, %v3527
        %v3894 = vpack.c.b16 %v3534, %v3528
        %v3895 = vpack.c.b16 %v3535, %v3529
        %v3896 = vpack.c.b16 %v3536, %v3530
        %v3897 = vpack.c.b16 %v3543, %v3537
        %v3898 = vpack.c.b16 %v3544, %v3538
        %v3899 = vpack.c.b16 %v3545, %v3539
        %v3900 = vpack.c.b16 %v3546, %v3540
        %v3901 = vpack.c.b16 %v3547, %v3541
        %v3902 = vpack.c.b16 %v3548, %v3542
        %v3903 = vpack.c.b16 %v3555, %v3549
        %v3904 = vpack.c.b16 %v3556, %v3550
        %v3905 = vpack.c.b16 %v3557, %v3551
        %v3906 = vpack.c.b16 %v3558, %v3552
        %v3907 = vpack.c.b16 %v3559, %v3553
        %v3908 = vpack.c.b16 %v3560, %v3554
        %v3909 = vpack.c.b16 %v3567, %v3561
        %v3910 = vpack.c.b16 %v3568, %v3562
        %v3911 = vpack.c.b16 %v3569, %v3563
        %v3912 = vpack.c.b16 %v3570, %v3564
        %v3913 = vpack.c.b16 %v3571, %v3565
        %v3914 = vpack.c.b16 %v3572, %v3566
        %v3915 = vpack.c.b16 %v3579, %v3573
        %v3916 = vpack.c.b16 %v3580, %v3574
        %v3917 = vpack.c.b16 %v3581, %v3575
        %v3918 = vpack.c.b16 %v3582, %v3576
        %v3919 = vpack.c.b16 %v3583, %v3577
        %v3920 = vpack.c.b16 %v3584, %v3578
        %v3921 = vpack.c.b16 %v3591, %v3585
        %v3922 = vpack.c.b16 %v3592, %v3586
        %v3923 = vpack.c.b16 %v3593, %v3587
        %v3924 = vpack.c.b16 %v3594, %v3588
        %v3925 = vpack.c.b16 %v3595, %v3589
        %v3926 = vpack.c.b16 %v3596, %v3590
        %v3927 = vpack.c.b16 %v3603, %v3597
        %v3928 = vpack.c.b16 %v3604, %v3598
        %v3929 = vpack.c.b16 %v3605, %v3599
        %v3930 = vpack.c.b16 %v3606, %v3600
        %v3931 = vpack.c.b16 %v3607, %v3601
        %v3932 = vpack.c.b16 %v3608, %v3602
        %v3933 = vpack.c.b16 %v3615, %v3609
        %v3934 = vpack.c.b16 %v3616, %v3610
        %v3935 = vpack.c.b16 %v3617, %v3611
        %v3936 = vpack.c.b16 %v3618, %v3612
        %v3937 = vpack.c.b16 %v3619, %v3613
        %v3938 = vpack.c.b16 %v3620, %v3614
        %v3939 = vpack.c.b16 %v3627, %v3621
        %v3940 = vpack.c.b16 %v3628, %v3622
        %v3941 = vpack.c.b16 %v3629, %v3623
        %v3942 = vpack.c.b16 %v3630, %v3624
        %v3943 = vpack.c.b16 %v3631, %v3625
        %v3944 = vpack.c.b16 %v3632, %v3626
        %v3945 = vpack.c.b16 %v3639, %v3633
        %v3946 = vpack.c.b16 %v3640, %v3634
        %v3947 = vpack.c.b16 %v3641, %v3635
        %v3948 = vpack.c.b16 %v3642, %v3636
        %v3949 = vpack.c.b16 %v3643, %v3637
        %v3950 = vpack.c.b16 %v3644, %v3638
        %v3951 = vpack.c.b16 %v3651, %v3645
        %v3952 = vpack.c.b16 %v3652, %v3646
        %v3953 = vpack.c.b16 %v3653, %v3647
        %v3954 = vpack.c.b16 %v3654, %v3648
        %v3955 = vpack.c.b16 %v3655, %v3649
        %v3956 = vpack.c.b16 %v3656, %v3650
        %v3957 = vpack.c.b16 %v3663, %v3657
        %v3958 = vpack.c.b16 %v3664, %v3658
        %v3959 = vpack.c.b16 %v3665, %v3659
        %v3960 = vpack.c.b16 %v3666, %v3660
        %v3961 = vpack.c.b16 %v3667, %v3661
        %v3962 = vpack.c.b16 %v3668, %v3662
        %v3963 = vpack.c.b16 %v3675, %v3669
        %v3964 = vpack.c.b16 %v3676, %v3670
        %v3965 = vpack.c.b16 %v3677, %v3671
        %v3966 = vpack.c.b16 %v3678, %v3672
        %v3967 = vpack.c.b16 %v3679, %v3673
        %v3968 = vpack.c.b16 %v3680, %v3674
        %v3969 = vpack.c.b16 %v3687, %v3681
        %v3970 = vpack.c.b16 %v3688, %v3682
        %v3971 = vpack.c.b16 %v3689, %v3683
        %v3972 = vpack.c.b16 %v3690, %v3684
        %v3973 = vpack.c.b16 %v3691, %v3685
        %v3974 = vpack.c.b16 %v3692, %v3686
        %v3975 = vpack.c.b16 %v3699, %v3693
        %v3976 = vpack.c.b16 %v3700, %v3694
        %v3977 = vpack.c.b16 %v3701, %v3695
        %v3978 = vpack.c.b16 %v3702, %v3696
        %v3979 = vpack.c.b16 %v3703, %v3697
        %v3980 = vpack.c.b16 %v3704, %v3698
        %v3981 = vpack.c.b16 %v3711, %v3705
        %v3982 = vpack.c.b16 %v3712, %v3706
        %v3983 = vpack.c.b16 %v3713, %v3707
        %v3984 = vpack.c.b16 %v3714, %v3708
        %v3985 = vpack.c.b16 %v3715, %v3709
        %v3986 = vpack.c.b16 %v3716, %v3710
        %v3987 = vpack.c.b16 %v3723, %v3717
        %v3988 = vpack.c.b16 %v3724, %v3718
        %v3989 = vpack.c.b16 %v3725, %v3719
        %v3990 = vpack.c.b16 %v3726, %v3720
        %v3991 = vpack.c.b16 %v3727, %v3721
        %v3992 = vpack.c.b16 %v3728, %v3722
        %v3993 = vpack.c.b16 %v3735, %v3729
        %v3994 = vpack.c.b16 %v3736, %v3730
        %v3995 = vpack.c.b16 %v3737, %v3731
        %v3996 = vpack.c.b16 %v3738, %v3732
        %v3997 = vpack.c.b16 %v3739, %v3733
        %v3998 = vpack.c.b16 %v3740, %v3734
        %v3999 = vpack.c.b16 %v3747, %v3741
        %v4000 = vpack.c.b16 %v3748, %v3742
        %v4001 = vpack.c.b16 %v3749, %v3743
        %v4002 = vpack.c.b16 %v3750, %v3744
        %v4003 = vpack.c.b16 %v3751, %v3745
        %v4004 = vpack.c.b16 %v3752, %v3746
        %v4005 = vpack.c.b16 %v3759, %v3753
        %v4006 = vpack.c.b16 %v3760, %v3754
        %v4007 = vpack.c.b16 %v3761, %v3755
        %v4008 = vpack.c.b16 %v3762, %v3756
        %v4009 = vpack.c.b16 %v3763, %v3757
        %v4010 = vpack.c.b16 %v3764, %v3758
        %v4011 = vpack.c.b16 %v3771, %v3765
        %v4012 = vpack.c.b16 %v3772, %v3766
        %v4013 = vpack.c.b16 %v3773, %v3767
        %v4014 = vpack.c.b16 %v3774, %v3768
        %v4015 = vpack.c.b16 %v3775, %v3769
        %v4016 = vpack.c.b16 %v3776, %v3770
        %v4017 = vpack.c.b16 %v3783, %v3777
        %v4018 = vpack.c.b16 %v3784, %v3778
        %v4019 = vpack.c.b16 %v3785, %v3779
        %v4020 = vpack.c.b16 %v3786, %v3780
        %v4021 = vpack.c.b16 %v3787, %v3781
        %v4022 = vpack.c.b16 %v3788, %v3782
        %v4023 = vpack.c.b16 %v3795, %v3789
        %v4024 = vpack.c.b16 %v3796, %v3790
        %v4025 = vpack.c.b16 %v3797, %v3791
        %v4026 = vpack.c.b16 %v3798, %v3792
        %v4027 = vpack.c.b16 %v3799, %v3793
        %v4028 = vpack.c.b16 %v3800, %v3794
        %v4029 = vpack.c.b16 %v3807, %v3801
        %v4030 = vpack.c.b16 %v3808, %v3802
        %v4031 = vpack.c.b16 %v3809, %v3803
        %v4032 = vpack.c.b16 %v3810, %v3804
        %v4033 = vpack.c.b16 %v3811, %v3805
        %v4034 = vpack.c.b16 %v3812, %v3806
        %v4035 = vpack.c.b16 %v3819, %v3813
        %v4036 = vpack.c.b16 %v3820, %v3814
        %v4037 = vpack.c.b16 %v3821, %v3815
        %v4038 = vpack.c.b16 %v3822, %v3816
        %v4039 = vpack.c.b16 %v3823, %v3817
        %v4040 = vpack.c.b16 %v3824, %v3818
        %v4041 = vpack.c.b16 %v3831, %v3825
        %v4042 = vpack.c.b16 %v3832, %v3826
        %v4043 = vpack.c.b16 %v3833, %v3827
        %v4044 = vpack.c.b16 %v3834, %v3828
        %v4045 = vpack.c.b16 %v3835, %v3829
        %v4046 = vpack.c.b16 %v3836, %v3830
        %v4047 = vpack.c.b16 %v3843, %v3837
        %v4048 = vpack.c.b16 %v3844, %v3838
        %v4049 = vpack.c.b16 %v3845, %v3839
        %v4050 = vpack.c.b16 %v3846, %v3840
        %v4051 = vpack.c.b16 %v3847, %v3841
        %v4052 = vpack.c.b16 %v3848, %v3842
        %v4053 = vpack.c.b16 %v3855, %v3849
        %v4054 = vpack.c.b16 %v3856, %v3850
        %v4055 = vpack.c.b16 %v3857, %v3851
        %v4056 = vpack.c.b16 %v3858, %v3852
        %v4057 = vpack.c.b16 %v3859, %v3853
        %v4058 = vpack.c.b16 %v3860, %v3854
        %v4059 = vpack.c.b16 %v3867, %v3861
        %v4060 = vpack.c.b16 %v3868, %v3862
        %v4061 = vpack.c.b16 %v3869, %v3863
        %v4062 = vpack.c.b16 %v3870, %v3864
        %v4063 = vpack.c.b16 %v3871, %v3865
        %v4064 = vpack.c.b16 %v3872, %v3866
        %4257 = vmatprep.subr.bf16.mxu0 %v3874
        %4258 = vmatpush1.bf16.msra.mxu0 %v3873
        %4259 = vmatprep.subr.bf16.mxu0 %v3880
        %4260 = vmatpush1.bf16.msra.mxu0 %v3879
        %4261 = vmatprep.subr.bf16.mxu0 %v3886
        %4262 = vmatpush1.bf16.msra.mxu0 %v3885
        %4263 = vmatprep.subr.bf16.mxu0 %v3892
        %4264 = vmatpush1.bf16.msra.mxu0 %v3891
        %4265 = vmatprep.subr.bf16.mxu0 %v3898
        %4266 = vmatpush1.bf16.msra.mxu0 %v3897
        %4267 = vmatprep.subr.bf16.mxu0 %v3904
        %4268 = vmatpush1.bf16.msra.mxu0 %v3903
        %4269 = vmatprep.subr.bf16.mxu0 %v3910
        %4270 = vmatpush1.bf16.msra.mxu0 %v3909
        %4271 = vmatprep.subr.bf16.mxu0 %v3916
        %4272 = vmatpush1.bf16.msra.mxu0 %v3915
        %4273 = vmatprep.subr.bf16.mxu0 %v3922
        %4274 = vmatpush1.bf16.msra.mxu0 %v3921
        %4275 = vmatprep.subr.bf16.mxu0 %v3928
        %4276 = vmatpush1.bf16.msra.mxu0 %v3927
        %4277 = vmatprep.subr.bf16.mxu0 %v3934
        %4278 = vmatpush1.bf16.msra.mxu0 %v3933
        %4279 = vmatprep.subr.bf16.mxu0 %v3940
        %4280 = vmatpush1.bf16.msra.mxu0 %v3939
        %4281 = vmatprep.subr.bf16.mxu0 %v3946
        %4282 = vmatpush1.bf16.msra.mxu0 %v3945
        %4283 = vmatprep.subr.bf16.mxu0 %v3952
        %4284 = vmatpush1.bf16.msra.mxu0 %v3951
        %4285 = vmatprep.subr.bf16.mxu0 %v3958
        %4286 = vmatpush1.bf16.msra.mxu0 %v3957
        %4287 = vmatprep.subr.bf16.mxu0 %v3964
        %4288 = vmatpush1.bf16.msra.mxu0 %v3963
        %4289 = vmatprep.mubr.bf16.mxu0 %v3067
        %4290 = vmatmul.mubr.bf16.gmra.mrb[0].mxu0 %v3066
        %v4291 = vpop.f32.mrb[0].mxu0
        %v4292 = vadd.f32 %v3270, %v4291
        %v4293 = vpop.f32.mrb[0].mxu0
        %v4294 = vadd.f32 %v3274, %v4293
        %v4295 = vpop.f32.mrb[0].mxu0
        %v4296 = vpop.f32.mrb[0].mxu0
        %4297 = vdwg.mxu0
        %4298 = vmatprep.subr.bf16.mxu0 %v3970
        %4299 = vmatpush1.bf16.msra.mxu0 %v3969
        %4300 = vmatprep.subr.bf16.mxu0 %v3976
        %4301 = vmatpush1.bf16.msra.mxu0 %v3975
        %4302 = vmatprep.subr.bf16.mxu0 %v3982
        %4303 = vmatpush1.bf16.msra.mxu0 %v3981
        %4304 = vmatprep.subr.bf16.mxu0 %v3988
        %4305 = vmatpush1.bf16.msra.mxu0 %v3987
        %4306 = vmatprep.subr.bf16.mxu0 %v3994
        %4307 = vmatpush1.bf16.msra.mxu0 %v3993
        %4308 = vmatprep.subr.bf16.mxu0 %v4000
        %4309 = vmatpush1.bf16.msra.mxu0 %v3999
        %4310 = vmatprep.subr.bf16.mxu0 %v4006
        %4311 = vmatpush1.bf16.msra.mxu0 %v4005
        %4312 = vmatprep.subr.bf16.mxu0 %v4012
        %4313 = vmatpush1.bf16.msra.mxu0 %v4011
        %4314 = vmatprep.subr.bf16.mxu0 %v4018
        %4315 = vmatpush1.bf16.msra.mxu0 %v4017
        %4316 = vmatprep.subr.bf16.mxu0 %v4024
        %4317 = vmatpush1.bf16.msra.mxu0 %v4023
        %4318 = vmatprep.subr.bf16.mxu0 %v4030
        %4319 = vmatpush1.bf16.msra.mxu0 %v4029
        %4320 = vmatprep.subr.bf16.mxu0 %v4036
        %4321 = vmatpush1.bf16.msra.mxu0 %v4035
        %4322 = vmatprep.subr.bf16.mxu0 %v4042
        %4323 = vmatpush1.bf16.msra.mxu0 %v4041
        %4324 = vmatprep.subr.bf16.mxu0 %v4048
        %4325 = vmatpush1.bf16.msra.mxu0 %v4047
        %4326 = vmatprep.subr.bf16.mxu0 %v4054
        %4327 = vmatpush1.bf16.msra.mxu0 %v4053
        %4328 = vmatprep.subr.bf16.mxu0 %v4060
        %4329 = vmatpush1.bf16.msra.mxu0 %v4059
        %4330 = vmatprep.mubr.bf16.mxu0 %v3069
        %4331 = vmatmul.mubr.bf16.gmra.mrb[0].mxu0 %v3068
        %v4332 = vpop.f32.mrb[0].mxu0
        %v4333 = vadd.f32 %v4292, %v4332
        %v4334 = vpop.f32.mrb[0].mxu0
        %v4335 = vadd.f32 %v4294, %v4334
        %v4336 = vpop.f32.mrb[0].mxu0
        %v4337 = vpop.f32.mrb[0].mxu0
        %4338 = vdwg.mxu0
        %4339 = vmatprep.subr.bf16.mxu0 %v3876
        %4340 = vmatpush1.bf16.msra.mxu0 %v3875
        %4341 = vmatprep.subr.bf16.mxu0 %v3882
        %4342 = vmatpush1.bf16.msra.mxu0 %v3881
        %4343 = vmatprep.subr.bf16.mxu0 %v3888
        %4344 = vmatpush1.bf16.msra.mxu0 %v3887
        %4345 = vmatprep.subr.bf16.mxu0 %v3894
        %4346 = vmatpush1.bf16.msra.mxu0 %v3893
        %4347 = vmatprep.subr.bf16.mxu0 %v3900
        %4348 = vmatpush1.bf16.msra.mxu0 %v3899
        %4349 = vmatprep.subr.bf16.mxu0 %v3906
        %4350 = vmatpush1.bf16.msra.mxu0 %v3905
        %4351 = vmatprep.subr.bf16.mxu0 %v3912
        %4352 = vmatpush1.bf16.msra.mxu0 %v3911
        %4353 = vmatprep.subr.bf16.mxu0 %v3918
        %4354 = vmatpush1.bf16.msra.mxu0 %v3917
        %4355 = vmatprep.subr.bf16.mxu0 %v3924
        %4356 = vmatpush1.bf16.msra.mxu0 %v3923
        %4357 = vmatprep.subr.bf16.mxu0 %v3930
        %4358 = vmatpush1.bf16.msra.mxu0 %v3929
        %4359 = vmatprep.subr.bf16.mxu0 %v3936
        %4360 = vmatpush1.bf16.msra.mxu0 %v3935
        %4361 = vmatprep.subr.bf16.mxu0 %v3942
        %4362 = vmatpush1.bf16.msra.mxu0 %v3941
        %4363 = vmatprep.subr.bf16.mxu0 %v3948
        %4364 = vmatpush1.bf16.msra.mxu0 %v3947
        %4365 = vmatprep.subr.bf16.mxu0 %v3954
        %4366 = vmatpush1.bf16.msra.mxu0 %v3953
        %4367 = vmatprep.subr.bf16.mxu0 %v3960
        %4368 = vmatpush1.bf16.msra.mxu0 %v3959
        %4369 = vmatprep.subr.bf16.mxu0 %v3966
        %4370 = vmatpush1.bf16.msra.mxu0 %v3965
        %4371 = vmatprep.mubr.bf16.mxu0 %v3067
        %4372 = vmatmul.mubr.bf16.gmra.mrb[0].mxu0 %v3066
        %v4373 = vpop.f32.mrb[0].mxu0
        %v4374 = vadd.f32 %v3278, %v4373
        %v4375 = vpop.f32.mrb[0].mxu0
        %v4376 = vadd.f32 %v3282, %v4375
        %v4377 = vpop.f32.mrb[0].mxu0
        %v4378 = vpop.f32.mrb[0].mxu0
        %4379 = vdwg.mxu0
        %4380 = vmatprep.subr.bf16.mxu0 %v3972
        %4381 = vmatpush1.bf16.msra.mxu0 %v3971
        %4382 = vmatprep.subr.bf16.mxu0 %v3978
        %4383 = vmatpush1.bf16.msra.mxu0 %v3977
        %4384 = vmatprep.subr.bf16.mxu0 %v3984
        %4385 = vmatpush1.bf16.msra.mxu0 %v3983
        %4386 = vmatprep.subr.bf16.mxu0 %v3990
        %4387 = vmatpush1.bf16.msra.mxu0 %v3989
        %4388 = vmatprep.subr.bf16.mxu0 %v3996
        %4389 = vmatpush1.bf16.msra.mxu0 %v3995
        %4390 = vmatprep.subr.bf16.mxu0 %v4002
        %4391 = vmatpush1.bf16.msra.mxu0 %v4001
        %4392 = vmatprep.subr.bf16.mxu0 %v4008
        %4393 = vmatpush1.bf16.msra.mxu0 %v4007
        %4394 = vmatprep.subr.bf16.mxu0 %v4014
        %4395 = vmatpush1.bf16.msra.mxu0 %v4013
        %4396 = vmatprep.subr.bf16.mxu0 %v4020
        %4397 = vmatpush1.bf16.msra.mxu0 %v4019
        %4398 = vmatprep.subr.bf16.mxu0 %v4026
        %4399 = vmatpush1.bf16.msra.mxu0 %v4025
        %4400 = vmatprep.subr.bf16.mxu0 %v4032
        %4401 = vmatpush1.bf16.msra.mxu0 %v4031
        %4402 = vmatprep.subr.bf16.mxu0 %v4038
        %4403 = vmatpush1.bf16.msra.mxu0 %v4037
        %4404 = vmatprep.subr.bf16.mxu0 %v4044
        %4405 = vmatpush1.bf16.msra.mxu0 %v4043
        %4406 = vmatprep.subr.bf16.mxu0 %v4050
        %4407 = vmatpush1.bf16.msra.mxu0 %v4049
        %4408 = vmatprep.subr.bf16.mxu0 %v4056
        %4409 = vmatpush1.bf16.msra.mxu0 %v4055
        %4410 = vmatprep.subr.bf16.mxu0 %v4062
        %4411 = vmatpush1.bf16.msra.mxu0 %v4061
        %4412 = vmatprep.mubr.bf16.mxu0 %v3069
        %4413 = vmatmul.mubr.bf16.gmra.mrb[0].mxu0 %v3068
        %v4414 = vpop.f32.mrb[0].mxu0
        %v4415 = vadd.f32 %v4374, %v4414
        %v4416 = vpop.f32.mrb[0].mxu0
        %v4417 = vadd.f32 %v4376, %v4416
        %v4418 = vpop.f32.mrb[0].mxu0
        %v4419 = vpop.f32.mrb[0].mxu0
        %4420 = vdwg.mxu0
        %4421 = vmatprep.subr.bf16.mxu0 %v3878
        %4422 = vmatpush1.bf16.msra.mxu0 %v3877
        %4423 = vmatprep.subr.bf16.mxu0 %v3884
        %4424 = vmatpush1.bf16.msra.mxu0 %v3883
        %4425 = vmatprep.subr.bf16.mxu0 %v3890
        %4426 = vmatpush1.bf16.msra.mxu0 %v3889
        %4427 = vmatprep.subr.bf16.mxu0 %v3896
        %4428 = vmatpush1.bf16.msra.mxu0 %v3895
        %4429 = vmatprep.subr.bf16.mxu0 %v3902
        %4430 = vmatpush1.bf16.msra.mxu0 %v3901
        %4431 = vmatprep.subr.bf16.mxu0 %v3908
        %4432 = vmatpush1.bf16.msra.mxu0 %v3907
        %4433 = vmatprep.subr.bf16.mxu0 %v3914
        %4434 = vmatpush1.bf16.msra.mxu0 %v3913
        %4435 = vmatprep.subr.bf16.mxu0 %v3920
        %4436 = vmatpush1.bf16.msra.mxu0 %v3919
        %4437 = vmatprep.subr.bf16.mxu0 %v3926
        %4438 = vmatpush1.bf16.msra.mxu0 %v3925
        %4439 = vmatprep.subr.bf16.mxu0 %v3932
        %4440 = vmatpush1.bf16.msra.mxu0 %v3931
        %4441 = vmatprep.subr.bf16.mxu0 %v3938
        %4442 = vmatpush1.bf16.msra.mxu0 %v3937
        %4443 = vmatprep.subr.bf16.mxu0 %v3944
        %4444 = vmatpush1.bf16.msra.mxu0 %v3943
        %4445 = vmatprep.subr.bf16.mxu0 %v3950
        %4446 = vmatpush1.bf16.msra.mxu0 %v3949
        %4447 = vmatprep.subr.bf16.mxu0 %v3956
        %4448 = vmatpush1.bf16.msra.mxu0 %v3955
        %4449 = vmatprep.subr.bf16.mxu0 %v3962
        %4450 = vmatpush1.bf16.msra.mxu0 %v3961
        %4451 = vmatprep.subr.bf16.mxu0 %v3968
        %4452 = vmatpush1.bf16.msra.mxu0 %v3967
        %4453 = vmatprep.mubr.bf16.mxu0 %v3067
        %4454 = vmatmul.mubr.bf16.gmra.mrb[0].mxu0 %v3066
        %v4455 = vpop.f32.mrb[0].mxu0
        %v4456 = vadd.f32 %v3286, %v4455
        %v4457 = vpop.f32.mrb[0].mxu0
        %v4458 = vadd.f32 %v3290, %v4457
        %v4459 = vpop.f32.mrb[0].mxu0
        %v4460 = vpop.f32.mrb[0].mxu0
        %4461 = vdwg.mxu0
        %4462 = vmatprep.subr.bf16.mxu0 %v3974
        %4463 = vmatpush1.bf16.msra.mxu0 %v3973
        %4464 = vmatprep.subr.bf16.mxu0 %v3980
        %4465 = vmatpush1.bf16.msra.mxu0 %v3979
        %4466 = vmatprep.subr.bf16.mxu0 %v3986
        %4467 = vmatpush1.bf16.msra.mxu0 %v3985
        %4468 = vmatprep.subr.bf16.mxu0 %v3992
        %4469 = vmatpush1.bf16.msra.mxu0 %v3991
        %4470 = vmatprep.subr.bf16.mxu0 %v3998
        %4471 = vmatpush1.bf16.msra.mxu0 %v3997
        %4472 = vmatprep.subr.bf16.mxu0 %v4004
        %4473 = vmatpush1.bf16.msra.mxu0 %v4003
        %4474 = vmatprep.subr.bf16.mxu0 %v4010
        %4475 = vmatpush1.bf16.msra.mxu0 %v4009
        %4476 = vmatprep.subr.bf16.mxu0 %v4016
        %4477 = vmatpush1.bf16.msra.mxu0 %v4015
        %4478 = vmatprep.subr.bf16.mxu0 %v4022
        %4479 = vmatpush1.bf16.msra.mxu0 %v4021
        %4480 = vmatprep.subr.bf16.mxu0 %v4028
        %4481 = vmatpush1.bf16.msra.mxu0 %v4027
        %4482 = vmatprep.subr.bf16.mxu0 %v4034
        %4483 = vmatpush1.bf16.msra.mxu0 %v4033
        %4484 = vmatprep.subr.bf16.mxu0 %v4040
        %4485 = vmatpush1.bf16.msra.mxu0 %v4039
        %4486 = vmatprep.subr.bf16.mxu0 %v4046
        %4487 = vmatpush1.bf16.msra.mxu0 %v4045
        %4488 = vmatprep.subr.bf16.mxu0 %v4052
        %4489 = vmatpush1.bf16.msra.mxu0 %v4051
        %4490 = vmatprep.subr.bf16.mxu0 %v4058
        %4491 = vmatpush1.bf16.msra.mxu0 %v4057
        %4492 = vmatprep.subr.bf16.mxu0 %v4064
        %4493 = vmatpush1.bf16.msra.mxu0 %v4063
        %4494 = vmatprep.mubr.bf16.mxu0 %v3069
        %4495 = vmatmul.mubr.bf16.gmra.mrb[0].mxu0 %v3068
        %v4496 = vpop.f32.mrb[0].mxu0
        %v4497 = vadd.f32 %v4456, %v4496
        %v4498 = vpop.f32.mrb[0].mxu0
        %v4499 = vadd.f32 %v4458, %v4498
        %v4500 = vpop.f32.mrb[0].mxu0
        %v4501 = vpop.f32.mrb[0].mxu0
        %4502 = vdwg.mxu0
        %4503 = vst [vmem:[%s391] sm:$0xff] %v4333
        %4504 = vst [vmem:[%s391 + $0x8] sm:$0xff] %v4335
        %4505 = vst [vmem:[%s391 + $0x10] sm:$0xff] %v4415
        %4506 = vst [vmem:[%s391 + $0x18] sm:$0xff] %v4417
        %4507 = vst [vmem:[%s391 + $0x20] sm:$0xff] %v4497
        %4508 = vst [vmem:[%s391 + $0x28] sm:$0xff] %v4499
        %p4509 = scmp.lt.s32.totalorder %s22, 1
        %s4510 = scalar_select %p4509, %s22, 1
        %s4511 = smul.addr %s4510, 6
        %s4512 = smul.addr %s4511, 8
        %s4513 = scalar_lea.vmem %s9, %s4512
        // Predicated region
        $region69: #{vae_forward_fused.1} parent=55 // pred_check
          %p4514 = pneg %p239
        $region70: #{vae_forward_fused.1} parent=55 // pred_check_branch
          %4516 = sbr.rel (%p4514) target = $region72
        $region71: #{vae_forward_fused.1} parent=55 // pred_region
          _
        $region72: #{vae_forward_fused.1} parent=55 // pred_fallthru
          _
      $region56: #{vae_forward_fused.1} parent=5 // pred_fallthru
        _
      %p4517 = scmp.le.s32.totalorder 2, %s17
      // Predicated region
      $region73: #{vae_forward_fused.1} parent=5 // pred_check
        %p4518 = pneg %p4517
      $region74: #{vae_forward_fused.1} parent=5 // pred_check_branch
        %4520 = sbr.rel (%p4518) target = $region76
      $region75: #{vae_forward_fused.1} parent=5 // pred_region
        %s4521 = ssub.s32 %s17, 2
        // Predicated region
        $region77: #{vae_forward_fused.1} parent=75 // pred_check
          %p4522 = pneg %p245
        $region78: #{vae_forward_fused.1} parent=75 // pred_check_branch
          %4524 = sbr.rel (%p4522) target = $region80
        $region79: #{vae_forward_fused.1} parent=75 // pred_region
          %p4525 = scmp.lt.s32.totalorder %s23, 1
          %s4526 = scalar_select %p4525, %s23, 1
          %s4527 = smul.addr %s4526, 6
          %s4528 = smul.addr %s4527, 8
          %s4529 = scalar_lea.vmem %s9, %s4528
        $region80: #{vae_forward_fused.1} parent=75 // pred_fallthru
          _
      $region76: #{vae_forward_fused.1} parent=5 // pred_fallthru
        _
    $region6: #{vae_forward_fused.1} parent=1 // loop_footer
      %s21 = sadd.s32 1, %s17
    $region7: #{vae_forward_fused.1} parent=1 // loop_footer_branch
      %16 = sbr.rel target = $region3
    $region8: #{vae_forward_fused.1} parent=1 // loop_exit
      _
    %4530 = vsyncpa [#allocation3], 1
    %s4531 = scalar_lea.sflag [#allocation3], 1
    %4532 = vsyncpa %s4531, 1
    %4533 = vsyncpa [#allocation5], 1

</llo_original>
